<compile_context>
chip_gen: v7x
topology: tpu7x:2x2x1
jax: 0.10.0
libtpu: 0.0.40
codegen_flags: <defaults>
</compile_context>

<pallas_src>
import functools

import jax
import jax.numpy as jnp
from jax.experimental import pallas as pl
from jax.experimental.pallas import tpu as pltpu

EPS = 1e-5
_VMEM = pl.BlockSpec(memory_space=pltpu.MemorySpace.VMEM)


# --------------------------------------------------------------------------
# Helpers
# --------------------------------------------------------------------------
def _round_up(x, n):
    return -(-x // n) * n


def _pick_tile_m(m):
    """Largest lane tile (<=1024, multiple of 128) that evenly divides M."""
    for tm in (1024, 512, 256, 128):
        if m % tm == 0:
            return tm
    return m  # tiny / odd M: single full-extent block (legal: equals array dim)


# --------------------------------------------------------------------------
# Pallas kernels
# --------------------------------------------------------------------------
@functools.lru_cache(maxsize=None)
def _make_mm_kernel(use_res: bool, use_relu: bool):
    """One (Cout, tm) tile: out = act((W @ A) * scale + shift [+ residual])."""

    def kernel(*refs):
        if use_res:
            w_ref, a_ref, s_ref, t_ref, r_ref, o_ref = refs
        else:
            w_ref, a_ref, s_ref, t_ref, o_ref = refs
        acc = jnp.dot(w_ref[...], a_ref[...],
                      preferred_element_type=jnp.float32)       # MXU, f32 acc
        acc = acc * s_ref[...] + t_ref[...]                      # folded BN
        if use_res:
            acc = acc + r_ref[...].astype(jnp.float32)           # residual add
        if use_relu:
            acc = jnp.maximum(acc, 0.0)
        o_ref[...] = acc.astype(o_ref.dtype)

    return kernel


def fused_conv_gemm(w, a, scale, shift, residual=None, relu=True,
                    out_dtype=jnp.bfloat16):
    """Lane-dense fused GEMM: (Cout, M) = W(Cout, Kp) @ A(Kp, M).

    M is tiled on the lane axis with a parallel grid; Cout and Kp (both small
    for this net) stay resident per tile. BN scale/shift, optional residual
    and optional ReLU are fused in the epilogue.
    """
    cout, kp = w.shape
    kp2, m = a.shape
    assert kp == kp2
    tm = _pick_tile_m(m)
    grid = (m // tm,)

    s2 = scale.reshape(cout, 1).astype(jnp.float32)
    t2 = shift.reshape(cout, 1).astype(jnp.float32)

    args = [w, a, s2, t2]
    in_specs = [
        pl.BlockSpec((cout, kp), lambda i: (0, 0)),   # weights: VMEM-resident
        pl.BlockSpec((kp, tm), lambda i: (0, i)),     # patches: streamed over M
        pl.BlockSpec((cout, 1), lambda i: (0, 0)),    # BN scale
        pl.BlockSpec((cout, 1), lambda i: (0, 0)),    # BN shift
    ]
    if residual is not None:
        args.append(residual)
        in_specs.append(pl.BlockSpec((cout, tm), lambda i: (0, i)))
    out_spec = pl.BlockSpec((cout, tm), lambda i: (0, i))

    def _nbytes(x):
        return x.size * jnp.dtype(x.dtype).itemsize

    bytes_accessed = (_nbytes(w) + _nbytes(a)
                      + cout * m * jnp.dtype(out_dtype).itemsize)
    if residual is not None:
        bytes_accessed += _nbytes(residual)

    return pl.pallas_call(
        _make_mm_kernel(residual is not None, relu),
        out_shape=jax.ShapeDtypeStruct((cout, m), out_dtype),
        grid=grid,
        in_specs=in_specs,
        out_specs=out_spec,
        compiler_params=pltpu.CompilerParams(
            dimension_semantics=("parallel",),        # megacore on v7x
            vmem_limit_bytes=32 * 1024 * 1024),       # explicit, fits all gens
        cost_estimate=pl.CostEstimate(
            flops=2 * m * cout * kp, transcendentals=0,
            bytes_accessed=bytes_accessed),
    )(*args)


def _avgpool_fc_kernel(x_ref, w_ref, b_ref, o_ref):
    # x_ref: (C, N, H*W) -> mean over spatial -> (C, N); out (num_class, N).
    pooled = jnp.mean(x_ref[...].astype(jnp.float32), axis=-1)
    o_ref[...] = (
        jnp.dot(w_ref[...], pooled, preferred_element_type=jnp.float32)
        + b_ref[...]
    )


def avgpool_fc(x_cnhw, fc_w, fc_b):
    """AdaptiveAvgPool2d((1,1)) + flatten + Linear. Input (C, N, H, W)."""
    c, n, h, w = x_cnhw.shape
    num_class = fc_w.shape[0]
    x3 = x_cnhw.reshape(c, n, h * w)
    out_t = pl.pallas_call(
        _avgpool_fc_kernel,
        out_shape=jax.ShapeDtypeStruct((num_class, n), jnp.float32),
        in_specs=[_VMEM, _VMEM, _VMEM],
        out_specs=_VMEM,
    )(x3, fc_w.astype(jnp.float32),
      fc_b.reshape(num_class, 1).astype(jnp.float32))
    return out_t.T  # (N, num_class)


# --------------------------------------------------------------------------
# Plain-JAX glue: transposed im2col, conv+bn wrapper, parameter construction
# --------------------------------------------------------------------------
def im2col_t(x, kh, kw, stride, pad):
    """x: (C, N, H, W) -> A^T of shape (K = kh*kw*C, M = N*Ho*Wo).

    K ordering is (di, dj, ci), matching the (Cout, kh, kw, Cin) weight
    reshape; M ordering is (n, y, x).
    """
    c, n, h, w = x.shape
    xp = jnp.pad(x, ((0, 0), (0, 0), (pad, pad), (pad, pad)))
    ho = (h + 2 * pad - kh) // stride + 1
    wo = (w + 2 * pad - kw) // stride + 1
    taps = []
    for di in range(kh):
        for dj in range(kw):
            taps.append(xp[:, :, di:di + stride * ho:stride,
                           dj:dj + stride * wo:stride])
    a = jnp.stack(taps, axis=0).reshape(kh * kw * c, n * ho * wo)
    return a, (n, ho, wo)


def conv_bn(x, w_oihw, scale, shift, stride, pad, residual=None, relu=True):
    """Conv2d (no bias) + folded BatchNorm (+ residual) (+ ReLU).

    Input/output activations are channels-first (C, N, H, W), bf16.
    """
    cout, cin, kh, kw = w_oihw.shape
    a, (n, ho, wo) = im2col_t(x, kh, kw, stride, pad)
    b = jnp.transpose(w_oihw, (0, 2, 3, 1)).reshape(cout, kh * kw * cin)

    # Pad K to the bf16 sublane tile multiple to keep the MXU feed aligned.
    k = kh * kw * cin
    kp = _round_up(k, 16)
    if kp != k:
        a = jnp.pad(a, ((0, kp - k), (0, 0)))
        b = jnp.pad(b, ((0, 0), (0, kp - k)))
    a = a.astype(jnp.bfloat16)
    b = b.astype(jnp.bfloat16)

    m = n * ho * wo
    res = None if residual is None else residual.reshape(cout, m)
    out = fused_conv_gemm(b, a, scale, shift, res, relu)  # (cout, m) bf16
    return out.reshape(cout, n, ho, wo)


def kaiming_conv(key, cin, cout, kh, kw):
    # nn.init.kaiming_normal_(mode='fan_out', nonlinearity='relu')
    fan_out = cout * kh * kw
    std = (2.0 / fan_out) ** 0.5
    return jax.random.normal(key, (cout, cin, kh, kw), jnp.float32) * std


def folded_bn(c):
    # eval-mode BN with default init -> scale = 1/sqrt(1+eps), shift = 0
    gamma = jnp.ones((c,), jnp.float32)
    beta = jnp.zeros((c,), jnp.float32)
    mean = jnp.zeros((c,), jnp.float32)
    var = jnp.ones((c,), jnp.float32)
    scale = gamma / jnp.sqrt(var + EPS)
    shift = beta - mean * scale
    return scale, shift


def build_params(key, layers, num_class=10):
    keys = iter(jax.random.split(key, 128))
    params = {"conv1_w": kaiming_conv(next(keys), 3, 16, 3, 3),
              "bn1": folded_bn(16)}

    inplanes = 16
    stages = []
    for planes, nblocks, stride in ((16, layers[0], 1),
                                    (32, layers[1], 2),
                                    (64, layers[2], 2)):
        blocks = []
        for bi in range(nblocks):
            s = stride if bi == 0 else 1
            bp = {"stride": s,
                  "conv1_w": kaiming_conv(next(keys), inplanes, planes, 3, 3),
                  "bn1": folded_bn(planes),
                  "conv2_w": kaiming_conv(next(keys), planes, planes, 3, 3),
                  "bn2": folded_bn(planes)}
            if s != 1 or inplanes != planes:
                bp["ds_w"] = kaiming_conv(next(keys), inplanes, planes, 1, 1)
                bp["ds_bn"] = folded_bn(planes)
            inplanes = planes
            blocks.append(bp)
        stages.append(blocks)
    params["stages"] = stages

    # nn.Linear default init: U(-1/sqrt(fan_in), 1/sqrt(fan_in)); PyTorch layout.
    kval = 1.0 / (64 ** 0.5)
    params["fc_w"] = jax.random.uniform(next(keys), (num_class, 64),
                                        jnp.float32, -kval, kval)
    params["fc_b"] = jax.random.uniform(next(keys), (num_class,),
                                        jnp.float32, -kval, kval)
    return params


def basic_block(x, bp):
    stride = bp["stride"]
    identity = x
    out = conv_bn(x, bp["conv1_w"], *bp["bn1"], stride=stride, pad=1, relu=True)
    if "ds_w" in bp:
        identity = conv_bn(x, bp["ds_w"], *bp["ds_bn"],
                           stride=stride, pad=0, relu=False)
    out = conv_bn(out, bp["conv2_w"], *bp["bn2"], stride=1, pad=1,
                  residual=identity, relu=True)
    return out


def resnet_forward(params, x_nchw):
    # PyTorch input is NCHW; move channels outermost -> (C, N, H, W) so the
    # flattened spatial*batch dimension lands on the lane axis of every GEMM.
    x = jnp.transpose(x_nchw, (1, 0, 2, 3)).astype(jnp.float32)
    x = conv_bn(x, params["conv1_w"], *params["bn1"], stride=1, pad=1,
                relu=True)
    # NOTE: the reference forward() never calls self.maxpool, so none is run.
    for blocks in params["stages"]:
        for bp in blocks:
            x = basic_block(x, bp)
    return avgpool_fc(x, params["fc_w"], params["fc_b"])


# --------------------------------------------------------------------------
if __name__ == "__main__":
    key = jax.random.PRNGKey(0)
    kparam, kx = jax.random.split(key)
    # ResNet(BasicBlock, layers=[1, 1, 1]), num_class=10
    params = build_params(kparam, layers=[1, 1, 1], num_class=10)
    x = jax.random.normal(kx, (2, 3, 16, 16), jnp.float32)  # NCHW like PyTorch

    fwd = jax.jit(lambda inp: resnet_forward(params, inp))
    out = fwd(x)
    jax.block_until_ready(out)
    assert out.shape == (2, 10), out.shape
    print("KERNEL_OK")
</pallas_src>

<mosaic_0001>
module attributes {stable_mosaic.version = 11 : i64} {
  func.func @kernel(%arg0: i32, %arg1: memref<16x32xbf16, #tpu.memory_space<vmem>>, %arg2: memref<32x512xbf16, #tpu.memory_space<vmem>>, %arg3: memref<16x1xf32, #tpu.memory_space<vmem>>, %arg4: memref<16x1xf32, #tpu.memory_space<vmem>>, %arg5: memref<16x512xbf16, #tpu.memory_space<vmem>>) attributes {dimension_semantics = [#tpu.dimension_semantics<parallel>], iteration_bounds = array<i64: 1>, scalar_prefetch = 0 : i64, scratch_operands = 0 : i64, tpu.core_type = #tpu.core_type<tc>, window_params = [{pipeline_mode = #tpu.pipeline_mode<synchronous>, transform_indices = @transform_0, window_bounds = array<i64: 16, 32>}, {transform_indices = @transform_1, window_bounds = array<i64: 32, 512>}, {pipeline_mode = #tpu.pipeline_mode<synchronous>, transform_indices = @transform_2, window_bounds = array<i64: 16, 1>}, {pipeline_mode = #tpu.pipeline_mode<synchronous>, transform_indices = @transform_3, window_bounds = array<i64: 16, 1>}, {transform_indices = @transform_4, window_bounds = array<i64: 16, 512>}]} {
    %c0 = arith.constant 0 : index
    %c0_0 = arith.constant 0 : index
    %0 = vector.load %arg1[%c0, %c0_0] : memref<16x32xbf16, #tpu.memory_space<vmem>>, vector<16x32xbf16>
    %c0_1 = arith.constant 0 : index
    %c0_2 = arith.constant 0 : index
    %1 = vector.load %arg2[%c0_1, %c0_2] : memref<32x512xbf16, #tpu.memory_space<vmem>>, vector<32x512xbf16>
    %cst = arith.constant dense<0.000000e+00> : vector<16x512xf32>
    %2 = tpu.matmul %0, %1, %cst {dimension_numbers = #tpu.dot_dimension_numbers<[1], [0], [0], [1], [0, 0, 1, 1], [], []>} : vector<16x32xbf16>, vector<32x512xbf16>, vector<16x512xf32> -> vector<16x512xf32>
    %c0_3 = arith.constant 0 : index
    %c0_4 = arith.constant 0 : index
    %3 = vector.load %arg3[%c0_3, %c0_4] : memref<16x1xf32, #tpu.memory_space<vmem>>, vector<16x1xf32>
    %4 = vector.broadcast %3 : vector<16x1xf32> to vector<16x512xf32>
    %5 = arith.mulf %2, %4 : vector<16x512xf32>
    %c0_5 = arith.constant 0 : index
    %c0_6 = arith.constant 0 : index
    %6 = vector.load %arg4[%c0_5, %c0_6] : memref<16x1xf32, #tpu.memory_space<vmem>>, vector<16x1xf32>
    %7 = vector.broadcast %6 : vector<16x1xf32> to vector<16x512xf32>
    %8 = arith.addf %5, %7 : vector<16x512xf32>
    %cst_7 = arith.constant 0.000000e+00 : f32
    %9 = vector.broadcast %cst_7 : f32 to vector<16x512xf32>
    %10 = arith.maximumf %8, %9 : vector<16x512xf32>
    %11 = arith.truncf %10 : vector<16x512xf32> to vector<16x512xbf16>
    %c0_8 = arith.constant 0 : index
    %c0_9 = arith.constant 0 : index
    %12 = vector.load %arg5[%c0_8, %c0_9] : memref<16x512xbf16, #tpu.memory_space<vmem>>, vector<16x512xbf16>
    tpu.vector_store %arg5[%c0_8, %c0_9], %11 {strides = array<i32>} : memref<16x512xbf16, #tpu.memory_space<vmem>>, vector<16x512xbf16>,
    return
  }
  func.func @transform_0(%arg0: i32) -> (i32, i32) {
    %c0_i32 = arith.constant 0 : i32
    %c0_i32_0 = arith.constant 0 : i32
    %c0_i32_1 = arith.constant 0 : i32
    return %c0_i32, %c0_i32_0 : i32, i32
  }
  func.func @transform_1(%arg0: i32) -> (i32, i32) {
    %c0_i32 = arith.constant 0 : i32
    %c0_i32_0 = arith.constant 0 : i32
    return %c0_i32, %arg0 : i32, i32
  }
  func.func @transform_2(%arg0: i32) -> (i32, i32) {
    %c0_i32 = arith.constant 0 : i32
    %c0_i32_0 = arith.constant 0 : i32
    %c0_i32_1 = arith.constant 0 : i32
    return %c0_i32, %c0_i32_0 : i32, i32
  }
  func.func @transform_3(%arg0: i32) -> (i32, i32) {
    %c0_i32 = arith.constant 0 : i32
    %c0_i32_0 = arith.constant 0 : i32
    %c0_i32_1 = arith.constant 0 : i32
    return %c0_i32, %c0_i32_0 : i32, i32
  }
  func.func @transform_4(%arg0: i32) -> (i32, i32) {
    %c0_i32 = arith.constant 0 : i32
    %c0_i32_0 = arith.constant 0 : i32
    return %c0_i32, %arg0 : i32, i32
  }
}

module attributes {stable_mosaic.version = 11 : i64} {
  func.func @kernel(%arg0: i32, %arg1: memref<16x144xbf16, #tpu.memory_space<vmem>>, %arg2: memref<144x512xbf16, #tpu.memory_space<vmem>>, %arg3: memref<16x1xf32, #tpu.memory_space<vmem>>, %arg4: memref<16x1xf32, #tpu.memory_space<vmem>>, %arg5: memref<16x512xbf16, #tpu.memory_space<vmem>>) attributes {dimension_semantics = [#tpu.dimension_semantics<parallel>], iteration_bounds = array<i64: 1>, scalar_prefetch = 0 : i64, scratch_operands = 0 : i64, tpu.core_type = #tpu.core_type<tc>, window_params = [{pipeline_mode = #tpu.pipeline_mode<synchronous>, transform_indices = @transform_0, window_bounds = array<i64: 16, 144>}, {transform_indices = @transform_1, window_bounds = array<i64: 144, 512>}, {pipeline_mode = #tpu.pipeline_mode<synchronous>, transform_indices = @transform_2, window_bounds = array<i64: 16, 1>}, {pipeline_mode = #tpu.pipeline_mode<synchronous>, transform_indices = @transform_3, window_bounds = array<i64: 16, 1>}, {transform_indices = @transform_4, window_bounds = array<i64: 16, 512>}]} {
    %c0 = arith.constant 0 : index
    %c0_0 = arith.constant 0 : index
    %0 = vector.load %arg1[%c0, %c0_0] : memref<16x144xbf16, #tpu.memory_space<vmem>>, vector<16x144xbf16>
    %c0_1 = arith.constant 0 : index
    %c0_2 = arith.constant 0 : index
    %1 = vector.load %arg2[%c0_1, %c0_2] : memref<144x512xbf16, #tpu.memory_space<vmem>>, vector<144x512xbf16>
    %cst = arith.constant dense<0.000000e+00> : vector<16x512xf32>
    %2 = tpu.matmul %0, %1, %cst {dimension_numbers = #tpu.dot_dimension_numbers<[1], [0], [0], [1], [0, 0, 1, 1], [], []>} : vector<16x144xbf16>, vector<144x512xbf16>, vector<16x512xf32> -> vector<16x512xf32>
    %c0_3 = arith.constant 0 : index
    %c0_4 = arith.constant 0 : index
    %3 = vector.load %arg3[%c0_3, %c0_4] : memref<16x1xf32, #tpu.memory_space<vmem>>, vector<16x1xf32>
    %4 = vector.broadcast %3 : vector<16x1xf32> to vector<16x512xf32>
    %5 = arith.mulf %2, %4 : vector<16x512xf32>
    %c0_5 = arith.constant 0 : index
    %c0_6 = arith.constant 0 : index
    %6 = vector.load %arg4[%c0_5, %c0_6] : memref<16x1xf32, #tpu.memory_space<vmem>>, vector<16x1xf32>
    %7 = vector.broadcast %6 : vector<16x1xf32> to vector<16x512xf32>
    %8 = arith.addf %5, %7 : vector<16x512xf32>
    %cst_7 = arith.constant 0.000000e+00 : f32
    %9 = vector.broadcast %cst_7 : f32 to vector<16x512xf32>
    %10 = arith.maximumf %8, %9 : vector<16x512xf32>
    %11 = arith.truncf %10 : vector<16x512xf32> to vector<16x512xbf16>
    %c0_8 = arith.constant 0 : index
    %c0_9 = arith.constant 0 : index
    %12 = vector.load %arg5[%c0_8, %c0_9] : memref<16x512xbf16, #tpu.memory_space<vmem>>, vector<16x512xbf16>
    tpu.vector_store %arg5[%c0_8, %c0_9], %11 {strides = array<i32>} : memref<16x512xbf16, #tpu.memory_space<vmem>>, vector<16x512xbf16>,
    return
  }
  func.func @transform_0(%arg0: i32) -> (i32, i32) {
    %c0_i32 = arith.constant 0 : i32
    %c0_i32_0 = arith.constant 0 : i32
    %c0_i32_1 = arith.constant 0 : i32
    return %c0_i32, %c0_i32_0 : i32, i32
  }
  func.func @transform_1(%arg0: i32) -> (i32, i32) {
    %c0_i32 = arith.constant 0 : i32
    %c0_i32_0 = arith.constant 0 : i32
    return %c0_i32, %arg0 : i32, i32
  }
  func.func @transform_2(%arg0: i32) -> (i32, i32) {
    %c0_i32 = arith.constant 0 : i32
    %c0_i32_0 = arith.constant 0 : i32
    %c0_i32_1 = arith.constant 0 : i32
    return %c0_i32, %c0_i32_0 : i32, i32
  }
  func.func @transform_3(%arg0: i32) -> (i32, i32) {
    %c0_i32 = arith.constant 0 : i32
    %c0_i32_0 = arith.constant 0 : i32
    %c0_i32_1 = arith.constant 0 : i32
    return %c0_i32, %c0_i32_0 : i32, i32
  }
  func.func @transform_4(%arg0: i32) -> (i32, i32) {
    %c0_i32 = arith.constant 0 : i32
    %c0_i32_0 = arith.constant 0 : i32
    return %c0_i32, %arg0 : i32, i32
  }
}

module attributes {stable_mosaic.version = 11 : i64} {
  func.func @kernel(%arg0: i32, %arg1: memref<16x144xbf16, #tpu.memory_space<vmem>>, %arg2: memref<144x512xbf16, #tpu.memory_space<vmem>>, %arg3: memref<16x1xf32, #tpu.memory_space<vmem>>, %arg4: memref<16x1xf32, #tpu.memory_space<vmem>>, %arg5: memref<16x512xbf16, #tpu.memory_space<vmem>>, %arg6: memref<16x512xbf16, #tpu.memory_space<vmem>>) attributes {dimension_semantics = [#tpu.dimension_semantics<parallel>], iteration_bounds = array<i64: 1>, scalar_prefetch = 0 : i64, scratch_operands = 0 : i64, tpu.core_type = #tpu.core_type<tc>, window_params = [{pipeline_mode = #tpu.pipeline_mode<synchronous>, transform_indices = @transform_0, window_bounds = array<i64: 16, 144>}, {transform_indices = @transform_1, window_bounds = array<i64: 144, 512>}, {pipeline_mode = #tpu.pipeline_mode<synchronous>, transform_indices = @transform_2, window_bounds = array<i64: 16, 1>}, {pipeline_mode = #tpu.pipeline_mode<synchronous>, transform_indices = @transform_3, window_bounds = array<i64: 16, 1>}, {transform_indices = @transform_4, window_bounds = array<i64: 16, 512>}, {transform_indices = @transform_5, window_bounds = array<i64: 16, 512>}]} {
    %c0 = arith.constant 0 : index
    %c0_0 = arith.constant 0 : index
    %0 = vector.load %arg1[%c0, %c0_0] : memref<16x144xbf16, #tpu.memory_space<vmem>>, vector<16x144xbf16>
    %c0_1 = arith.constant 0 : index
    %c0_2 = arith.constant 0 : index
    %1 = vector.load %arg2[%c0_1, %c0_2] : memref<144x512xbf16, #tpu.memory_space<vmem>>, vector<144x512xbf16>
    %cst = arith.constant dense<0.000000e+00> : vector<16x512xf32>
    %2 = tpu.matmul %0, %1, %cst {dimension_numbers = #tpu.dot_dimension_numbers<[1], [0], [0], [1], [0, 0, 1, 1], [], []>} : vector<16x144xbf16>, vector<144x512xbf16>, vector<16x512xf32> -> vector<16x512xf32>
    %c0_3 = arith.constant 0 : index
    %c0_4 = arith.constant 0 : index
    %3 = vector.load %arg3[%c0_3, %c0_4] : memref<16x1xf32, #tpu.memory_space<vmem>>, vector<16x1xf32>
    %4 = vector.broadcast %3 : vector<16x1xf32> to vector<16x512xf32>
    %5 = arith.mulf %2, %4 : vector<16x512xf32>
    %c0_5 = arith.constant 0 : index
    %c0_6 = arith.constant 0 : index
    %6 = vector.load %arg4[%c0_5, %c0_6] : memref<16x1xf32, #tpu.memory_space<vmem>>, vector<16x1xf32>
    %7 = vector.broadcast %6 : vector<16x1xf32> to vector<16x512xf32>
    %8 = arith.addf %5, %7 : vector<16x512xf32>
    %c0_7 = arith.constant 0 : index
    %c0_8 = arith.constant 0 : index
    %9 = vector.load %arg5[%c0_7, %c0_8] : memref<16x512xbf16, #tpu.memory_space<vmem>>, vector<16x512xbf16>
    %10 = arith.extf %9 : vector<16x512xbf16> to vector<16x512xf32>
    %11 = arith.addf %8, %10 : vector<16x512xf32>
    %cst_9 = arith.constant 0.000000e+00 : f32
    %12 = vector.broadcast %cst_9 : f32 to vector<16x512xf32>
    %13 = arith.maximumf %11, %12 : vector<16x512xf32>
    %14 = arith.truncf %13 : vector<16x512xf32> to vector<16x512xbf16>
    %c0_10 = arith.constant 0 : index
    %c0_11 = arith.constant 0 : index
    %15 = vector.load %arg6[%c0_10, %c0_11] : memref<16x512xbf16, #tpu.memory_space<vmem>>, vector<16x512xbf16>
    tpu.vector_store %arg6[%c0_10, %c0_11], %14 {strides = array<i32>} : memref<16x512xbf16, #tpu.memory_space<vmem>>, vector<16x512xbf16>,
    return
  }
  func.func @transform_0(%arg0: i32) -> (i32, i32) {
    %c0_i32 = arith.constant 0 : i32
    %c0_i32_0 = arith.constant 0 : i32
    %c0_i32_1 = arith.constant 0 : i32
    return %c0_i32, %c0_i32_0 : i32, i32
  }
  func.func @transform_1(%arg0: i32) -> (i32, i32) {
    %c0_i32 = arith.constant 0 : i32
    %c0_i32_0 = arith.constant 0 : i32
    return %c0_i32, %arg0 : i32, i32
  }
  func.func @transform_2(%arg0: i32) -> (i32, i32) {
    %c0_i32 = arith.constant 0 : i32
    %c0_i32_0 = arith.constant 0 : i32
    %c0_i32_1 = arith.constant 0 : i32
    return %c0_i32, %c0_i32_0 : i32, i32
  }
  func.func @transform_3(%arg0: i32) -> (i32, i32) {
    %c0_i32 = arith.constant 0 : i32
    %c0_i32_0 = arith.constant 0 : i32
    %c0_i32_1 = arith.constant 0 : i32
    return %c0_i32, %c0_i32_0 : i32, i32
  }
  func.func @transform_4(%arg0: i32) -> (i32, i32) {
    %c0_i32 = arith.constant 0 : i32
    %c0_i32_0 = arith.constant 0 : i32
    return %c0_i32, %arg0 : i32, i32
  }
  func.func @transform_5(%arg0: i32) -> (i32, i32) {
    %c0_i32 = arith.constant 0 : i32
    %c0_i32_0 = arith.constant 0 : i32
    return %c0_i32, %arg0 : i32, i32
  }
}

module attributes {stable_mosaic.version = 11 : i64} {
  func.func @kernel(%arg0: i32, %arg1: memref<32x144xbf16, #tpu.memory_space<vmem>>, %arg2: memref<144x128xbf16, #tpu.memory_space<vmem>>, %arg3: memref<32x1xf32, #tpu.memory_space<vmem>>, %arg4: memref<32x1xf32, #tpu.memory_space<vmem>>, %arg5: memref<32x128xbf16, #tpu.memory_space<vmem>>) attributes {dimension_semantics = [#tpu.dimension_semantics<parallel>], iteration_bounds = array<i64: 1>, scalar_prefetch = 0 : i64, scratch_operands = 0 : i64, tpu.core_type = #tpu.core_type<tc>, window_params = [{pipeline_mode = #tpu.pipeline_mode<synchronous>, transform_indices = @transform_0, window_bounds = array<i64: 32, 144>}, {transform_indices = @transform_1, window_bounds = array<i64: 144, 128>}, {pipeline_mode = #tpu.pipeline_mode<synchronous>, transform_indices = @transform_2, window_bounds = array<i64: 32, 1>}, {pipeline_mode = #tpu.pipeline_mode<synchronous>, transform_indices = @transform_3, window_bounds = array<i64: 32, 1>}, {transform_indices = @transform_4, window_bounds = array<i64: 32, 128>}]} {
    %c0 = arith.constant 0 : index
    %c0_0 = arith.constant 0 : index
    %0 = vector.load %arg1[%c0, %c0_0] : memref<32x144xbf16, #tpu.memory_space<vmem>>, vector<32x144xbf16>
    %c0_1 = arith.constant 0 : index
    %c0_2 = arith.constant 0 : index
    %1 = vector.load %arg2[%c0_1, %c0_2] : memref<144x128xbf16, #tpu.memory_space<vmem>>, vector<144x128xbf16>
    %cst = arith.constant dense<0.000000e+00> : vector<32x128xf32>
    %2 = tpu.matmul %0, %1, %cst {dimension_numbers = #tpu.dot_dimension_numbers<[1], [0], [0], [1], [0, 0, 1, 1], [], []>} : vector<32x144xbf16>, vector<144x128xbf16>, vector<32x128xf32> -> vector<32x128xf32>
    %c0_3 = arith.constant 0 : index
    %c0_4 = arith.constant 0 : index
    %3 = vector.load %arg3[%c0_3, %c0_4] : memref<32x1xf32, #tpu.memory_space<vmem>>, vector<32x1xf32>
    %4 = vector.broadcast %3 : vector<32x1xf32> to vector<32x128xf32>
    %5 = arith.mulf %2, %4 : vector<32x128xf32>
    %c0_5 = arith.constant 0 : index
    %c0_6 = arith.constant 0 : index
    %6 = vector.load %arg4[%c0_5, %c0_6] : memref<32x1xf32, #tpu.memory_space<vmem>>, vector<32x1xf32>
    %7 = vector.broadcast %6 : vector<32x1xf32> to vector<32x128xf32>
    %8 = arith.addf %5, %7 : vector<32x128xf32>
    %cst_7 = arith.constant 0.000000e+00 : f32
    %9 = vector.broadcast %cst_7 : f32 to vector<32x128xf32>
    %10 = arith.maximumf %8, %9 : vector<32x128xf32>
    %11 = arith.truncf %10 : vector<32x128xf32> to vector<32x128xbf16>
    %c0_8 = arith.constant 0 : index
    %c0_9 = arith.constant 0 : index
    %12 = vector.load %arg5[%c0_8, %c0_9] : memref<32x128xbf16, #tpu.memory_space<vmem>>, vector<32x128xbf16>
    tpu.vector_store %arg5[%c0_8, %c0_9], %11 {strides = array<i32>} : memref<32x128xbf16, #tpu.memory_space<vmem>>, vector<32x128xbf16>,
    return
  }
  func.func @transform_0(%arg0: i32) -> (i32, i32) {
    %c0_i32 = arith.constant 0 : i32
    %c0_i32_0 = arith.constant 0 : i32
    %c0_i32_1 = arith.constant 0 : i32
    return %c0_i32, %c0_i32_0 : i32, i32
  }
  func.func @transform_1(%arg0: i32) -> (i32, i32) {
    %c0_i32 = arith.constant 0 : i32
    %c0_i32_0 = arith.constant 0 : i32
    return %c0_i32, %arg0 : i32, i32
  }
  func.func @transform_2(%arg0: i32) -> (i32, i32) {
    %c0_i32 = arith.constant 0 : i32
    %c0_i32_0 = arith.constant 0 : i32
    %c0_i32_1 = arith.constant 0 : i32
    return %c0_i32, %c0_i32_0 : i32, i32
  }
  func.func @transform_3(%arg0: i32) -> (i32, i32) {
    %c0_i32 = arith.constant 0 : i32
    %c0_i32_0 = arith.constant 0 : i32
    %c0_i32_1 = arith.constant 0 : i32
    return %c0_i32, %c0_i32_0 : i32, i32
  }
  func.func @transform_4(%arg0: i32) -> (i32, i32) {
    %c0_i32 = arith.constant 0 : i32
    %c0_i32_0 = arith.constant 0 : i32
    return %c0_i32, %arg0 : i32, i32
  }
}

module attributes {stable_mosaic.version = 11 : i64} {
  func.func @kernel(%arg0: i32, %arg1: memref<32x16xbf16, #tpu.memory_space<vmem>>, %arg2: memref<16x128xbf16, #tpu.memory_space<vmem>>, %arg3: memref<32x1xf32, #tpu.memory_space<vmem>>, %arg4: memref<32x1xf32, #tpu.memory_space<vmem>>, %arg5: memref<32x128xbf16, #tpu.memory_space<vmem>>) attributes {dimension_semantics = [#tpu.dimension_semantics<parallel>], iteration_bounds = array<i64: 1>, scalar_prefetch = 0 : i64, scratch_operands = 0 : i64, tpu.core_type = #tpu.core_type<tc>, window_params = [{pipeline_mode = #tpu.pipeline_mode<synchronous>, transform_indices = @transform_0, window_bounds = array<i64: 32, 16>}, {transform_indices = @transform_1, window_bounds = array<i64: 16, 128>}, {pipeline_mode = #tpu.pipeline_mode<synchronous>, transform_indices = @transform_2, window_bounds = array<i64: 32, 1>}, {pipeline_mode = #tpu.pipeline_mode<synchronous>, transform_indices = @transform_3, window_bounds = array<i64: 32, 1>}, {transform_indices = @transform_4, window_bounds = array<i64: 32, 128>}]} {
    %c0 = arith.constant 0 : index
    %c0_0 = arith.constant 0 : index
    %0 = vector.load %arg1[%c0, %c0_0] : memref<32x16xbf16, #tpu.memory_space<vmem>>, vector<32x16xbf16>
    %c0_1 = arith.constant 0 : index
    %c0_2 = arith.constant 0 : index
    %1 = vector.load %arg2[%c0_1, %c0_2] : memref<16x128xbf16, #tpu.memory_space<vmem>>, vector<16x128xbf16>
    %cst = arith.constant dense<0.000000e+00> : vector<32x128xf32>
    %2 = tpu.matmul %0, %1, %cst {dimension_numbers = #tpu.dot_dimension_numbers<[1], [0], [0], [1], [0, 0, 1, 1], [], []>} : vector<32x16xbf16>, vector<16x128xbf16>, vector<32x128xf32> -> vector<32x128xf32>
    %c0_3 = arith.constant 0 : index
    %c0_4 = arith.constant 0 : index
    %3 = vector.load %arg3[%c0_3, %c0_4] : memref<32x1xf32, #tpu.memory_space<vmem>>, vector<32x1xf32>
    %4 = vector.broadcast %3 : vector<32x1xf32> to vector<32x128xf32>
    %5 = arith.mulf %2, %4 : vector<32x128xf32>
    %c0_5 = arith.constant 0 : index
    %c0_6 = arith.constant 0 : index
    %6 = vector.load %arg4[%c0_5, %c0_6] : memref<32x1xf32, #tpu.memory_space<vmem>>, vector<32x1xf32>
    %7 = vector.broadcast %6 : vector<32x1xf32> to vector<32x128xf32>
    %8 = arith.addf %5, %7 : vector<32x128xf32>
    %9 = arith.truncf %8 : vector<32x128xf32> to vector<32x128xbf16>
    %c0_7 = arith.constant 0 : index
    %c0_8 = arith.constant 0 : index
    %10 = vector.load %arg5[%c0_7, %c0_8] : memref<32x128xbf16, #tpu.memory_space<vmem>>, vector<32x128xbf16>
    tpu.vector_store %arg5[%c0_7, %c0_8], %9 {strides = array<i32>} : memref<32x128xbf16, #tpu.memory_space<vmem>>, vector<32x128xbf16>,
    return
  }
  func.func @transform_0(%arg0: i32) -> (i32, i32) {
    %c0_i32 = arith.constant 0 : i32
    %c0_i32_0 = arith.constant 0 : i32
    %c0_i32_1 = arith.constant 0 : i32
    return %c0_i32, %c0_i32_0 : i32, i32
  }
  func.func @transform_1(%arg0: i32) -> (i32, i32) {
    %c0_i32 = arith.constant 0 : i32
    %c0_i32_0 = arith.constant 0 : i32
    return %c0_i32, %arg0 : i32, i32
  }
  func.func @transform_2(%arg0: i32) -> (i32, i32) {
    %c0_i32 = arith.constant 0 : i32
    %c0_i32_0 = arith.constant 0 : i32
    %c0_i32_1 = arith.constant 0 : i32
    return %c0_i32, %c0_i32_0 : i32, i32
  }
  func.func @transform_3(%arg0: i32) -> (i32, i32) {
    %c0_i32 = arith.constant 0 : i32
    %c0_i32_0 = arith.constant 0 : i32
    %c0_i32_1 = arith.constant 0 : i32
    return %c0_i32, %c0_i32_0 : i32, i32
  }
  func.func @transform_4(%arg0: i32) -> (i32, i32) {
    %c0_i32 = arith.constant 0 : i32
    %c0_i32_0 = arith.constant 0 : i32
    return %c0_i32, %arg0 : i32, i32
  }
}

module attributes {stable_mosaic.version = 11 : i64} {
  func.func @kernel(%arg0: i32, %arg1: memref<32x288xbf16, #tpu.memory_space<vmem>>, %arg2: memref<288x128xbf16, #tpu.memory_space<vmem>>, %arg3: memref<32x1xf32, #tpu.memory_space<vmem>>, %arg4: memref<32x1xf32, #tpu.memory_space<vmem>>, %arg5: memref<32x128xbf16, #tpu.memory_space<vmem>>, %arg6: memref<32x128xbf16, #tpu.memory_space<vmem>>) attributes {dimension_semantics = [#tpu.dimension_semantics<parallel>], iteration_bounds = array<i64: 1>, scalar_prefetch = 0 : i64, scratch_operands = 0 : i64, tpu.core_type = #tpu.core_type<tc>, window_params = [{pipeline_mode = #tpu.pipeline_mode<synchronous>, transform_indices = @transform_0, window_bounds = array<i64: 32, 288>}, {transform_indices = @transform_1, window_bounds = array<i64: 288, 128>}, {pipeline_mode = #tpu.pipeline_mode<synchronous>, transform_indices = @transform_2, window_bounds = array<i64: 32, 1>}, {pipeline_mode = #tpu.pipeline_mode<synchronous>, transform_indices = @transform_3, window_bounds = array<i64: 32, 1>}, {transform_indices = @transform_4, window_bounds = array<i64: 32, 128>}, {transform_indices = @transform_5, window_bounds = array<i64: 32, 128>}]} {
    %c0 = arith.constant 0 : index
    %c0_0 = arith.constant 0 : index
    %0 = vector.load %arg1[%c0, %c0_0] : memref<32x288xbf16, #tpu.memory_space<vmem>>, vector<32x288xbf16>
    %c0_1 = arith.constant 0 : index
    %c0_2 = arith.constant 0 : index
    %1 = vector.load %arg2[%c0_1, %c0_2] : memref<288x128xbf16, #tpu.memory_space<vmem>>, vector<288x128xbf16>
    %cst = arith.constant dense<0.000000e+00> : vector<32x128xf32>
    %2 = tpu.matmul %0, %1, %cst {dimension_numbers = #tpu.dot_dimension_numbers<[1], [0], [0], [1], [0, 0, 1, 1], [], []>} : vector<32x288xbf16>, vector<288x128xbf16>, vector<32x128xf32> -> vector<32x128xf32>
    %c0_3 = arith.constant 0 : index
    %c0_4 = arith.constant 0 : index
    %3 = vector.load %arg3[%c0_3, %c0_4] : memref<32x1xf32, #tpu.memory_space<vmem>>, vector<32x1xf32>
    %4 = vector.broadcast %3 : vector<32x1xf32> to vector<32x128xf32>
    %5 = arith.mulf %2, %4 : vector<32x128xf32>
    %c0_5 = arith.constant 0 : index
    %c0_6 = arith.constant 0 : index
    %6 = vector.load %arg4[%c0_5, %c0_6] : memref<32x1xf32, #tpu.memory_space<vmem>>, vector<32x1xf32>
    %7 = vector.broadcast %6 : vector<32x1xf32> to vector<32x128xf32>
    %8 = arith.addf %5, %7 : vector<32x128xf32>
    %c0_7 = arith.constant 0 : index
    %c0_8 = arith.constant 0 : index
    %9 = vector.load %arg5[%c0_7, %c0_8] : memref<32x128xbf16, #tpu.memory_space<vmem>>, vector<32x128xbf16>
    %10 = arith.extf %9 : vector<32x128xbf16> to vector<32x128xf32>
    %11 = arith.addf %8, %10 : vector<32x128xf32>
    %cst_9 = arith.constant 0.000000e+00 : f32
    %12 = vector.broadcast %cst_9 : f32 to vector<32x128xf32>
    %13 = arith.maximumf %11, %12 : vector<32x128xf32>
    %14 = arith.truncf %13 : vector<32x128xf32> to vector<32x128xbf16>
    %c0_10 = arith.constant 0 : index
    %c0_11 = arith.constant 0 : index
    %15 = vector.load %arg6[%c0_10, %c0_11] : memref<32x128xbf16, #tpu.memory_space<vmem>>, vector<32x128xbf16>
    tpu.vector_store %arg6[%c0_10, %c0_11], %14 {strides = array<i32>} : memref<32x128xbf16, #tpu.memory_space<vmem>>, vector<32x128xbf16>,
    return
  }
  func.func @transform_0(%arg0: i32) -> (i32, i32) {
    %c0_i32 = arith.constant 0 : i32
    %c0_i32_0 = arith.constant 0 : i32
    %c0_i32_1 = arith.constant 0 : i32
    return %c0_i32, %c0_i32_0 : i32, i32
  }
  func.func @transform_1(%arg0: i32) -> (i32, i32) {
    %c0_i32 = arith.constant 0 : i32
    %c0_i32_0 = arith.constant 0 : i32
    return %c0_i32, %arg0 : i32, i32
  }
  func.func @transform_2(%arg0: i32) -> (i32, i32) {
    %c0_i32 = arith.constant 0 : i32
    %c0_i32_0 = arith.constant 0 : i32
    %c0_i32_1 = arith.constant 0 : i32
    return %c0_i32, %c0_i32_0 : i32, i32
  }
  func.func @transform_3(%arg0: i32) -> (i32, i32) {
    %c0_i32 = arith.constant 0 : i32
    %c0_i32_0 = arith.constant 0 : i32
    %c0_i32_1 = arith.constant 0 : i32
    return %c0_i32, %c0_i32_0 : i32, i32
  }
  func.func @transform_4(%arg0: i32) -> (i32, i32) {
    %c0_i32 = arith.constant 0 : i32
    %c0_i32_0 = arith.constant 0 : i32
    return %c0_i32, %arg0 : i32, i32
  }
  func.func @transform_5(%arg0: i32) -> (i32, i32) {
    %c0_i32 = arith.constant 0 : i32
    %c0_i32_0 = arith.constant 0 : i32
    return %c0_i32, %arg0 : i32, i32
  }
}

module attributes {stable_mosaic.version = 11 : i64} {
  func.func @kernel(%arg0: i32, %arg1: memref<64x288xbf16, #tpu.memory_space<vmem>>, %arg2: memref<288x32xbf16, #tpu.memory_space<vmem>>, %arg3: memref<64x1xf32, #tpu.memory_space<vmem>>, %arg4: memref<64x1xf32, #tpu.memory_space<vmem>>, %arg5: memref<64x32xbf16, #tpu.memory_space<vmem>>) attributes {dimension_semantics = [#tpu.dimension_semantics<parallel>], iteration_bounds = array<i64: 1>, scalar_prefetch = 0 : i64, scratch_operands = 0 : i64, tpu.core_type = #tpu.core_type<tc>, window_params = [{pipeline_mode = #tpu.pipeline_mode<synchronous>, transform_indices = @transform_0, window_bounds = array<i64: 64, 288>}, {transform_indices = @transform_1, window_bounds = array<i64: 288, 32>}, {pipeline_mode = #tpu.pipeline_mode<synchronous>, transform_indices = @transform_2, window_bounds = array<i64: 64, 1>}, {pipeline_mode = #tpu.pipeline_mode<synchronous>, transform_indices = @transform_3, window_bounds = array<i64: 64, 1>}, {transform_indices = @transform_4, window_bounds = array<i64: 64, 32>}]} {
    %c0 = arith.constant 0 : index
    %c0_0 = arith.constant 0 : index
    %0 = vector.load %arg1[%c0, %c0_0] : memref<64x288xbf16, #tpu.memory_space<vmem>>, vector<64x288xbf16>
    %c0_1 = arith.constant 0 : index
    %c0_2 = arith.constant 0 : index
    %1 = vector.load %arg2[%c0_1, %c0_2] : memref<288x32xbf16, #tpu.memory_space<vmem>>, vector<288x32xbf16>
    %cst = arith.constant dense<0.000000e+00> : vector<64x32xf32>
    %2 = tpu.matmul %0, %1, %cst {dimension_numbers = #tpu.dot_dimension_numbers<[1], [0], [0], [1], [0, 0, 1, 1], [], []>} : vector<64x288xbf16>, vector<288x32xbf16>, vector<64x32xf32> -> vector<64x32xf32>
    %c0_3 = arith.constant 0 : index
    %c0_4 = arith.constant 0 : index
    %3 = vector.load %arg3[%c0_3, %c0_4] : memref<64x1xf32, #tpu.memory_space<vmem>>, vector<64x1xf32>
    %4 = vector.broadcast %3 : vector<64x1xf32> to vector<64x32xf32>
    %5 = arith.mulf %2, %4 : vector<64x32xf32>
    %c0_5 = arith.constant 0 : index
    %c0_6 = arith.constant 0 : index
    %6 = vector.load %arg4[%c0_5, %c0_6] : memref<64x1xf32, #tpu.memory_space<vmem>>, vector<64x1xf32>
    %7 = vector.broadcast %6 : vector<64x1xf32> to vector<64x32xf32>
    %8 = arith.addf %5, %7 : vector<64x32xf32>
    %cst_7 = arith.constant 0.000000e+00 : f32
    %9 = vector.broadcast %cst_7 : f32 to vector<64x32xf32>
    %10 = arith.maximumf %8, %9 : vector<64x32xf32>
    %11 = arith.truncf %10 : vector<64x32xf32> to vector<64x32xbf16>
    %c0_8 = arith.constant 0 : index
    %c0_9 = arith.constant 0 : index
    %12 = vector.load %arg5[%c0_8, %c0_9] : memref<64x32xbf16, #tpu.memory_space<vmem>>, vector<64x32xbf16>
    tpu.vector_store %arg5[%c0_8, %c0_9], %11 {strides = array<i32>} : memref<64x32xbf16, #tpu.memory_space<vmem>>, vector<64x32xbf16>,
    return
  }
  func.func @transform_0(%arg0: i32) -> (i32, i32) {
    %c0_i32 = arith.constant 0 : i32
    %c0_i32_0 = arith.constant 0 : i32
    %c0_i32_1 = arith.constant 0 : i32
    return %c0_i32, %c0_i32_0 : i32, i32
  }
  func.func @transform_1(%arg0: i32) -> (i32, i32) {
    %c0_i32 = arith.constant 0 : i32
    %c0_i32_0 = arith.constant 0 : i32
    return %c0_i32, %arg0 : i32, i32
  }
  func.func @transform_2(%arg0: i32) -> (i32, i32) {
    %c0_i32 = arith.constant 0 : i32
    %c0_i32_0 = arith.constant 0 : i32
    %c0_i32_1 = arith.constant 0 : i32
    return %c0_i32, %c0_i32_0 : i32, i32
  }
  func.func @transform_3(%arg0: i32) -> (i32, i32) {
    %c0_i32 = arith.constant 0 : i32
    %c0_i32_0 = arith.constant 0 : i32
    %c0_i32_1 = arith.constant 0 : i32
    return %c0_i32, %c0_i32_0 : i32, i32
  }
  func.func @transform_4(%arg0: i32) -> (i32, i32) {
    %c0_i32 = arith.constant 0 : i32
    %c0_i32_0 = arith.constant 0 : i32
    return %c0_i32, %arg0 : i32, i32
  }
}

module attributes {stable_mosaic.version = 11 : i64} {
  func.func @kernel(%arg0: i32, %arg1: memref<64x576xbf16, #tpu.memory_space<vmem>>, %arg2: memref<576x32xbf16, #tpu.memory_space<vmem>>, %arg3: memref<64x1xf32, #tpu.memory_space<vmem>>, %arg4: memref<64x1xf32, #tpu.memory_space<vmem>>, %arg5: memref<64x32xbf16, #tpu.memory_space<vmem>>, %arg6: memref<64x32xbf16, #tpu.memory_space<vmem>>) attributes {dimension_semantics = [#tpu.dimension_semantics<parallel>], iteration_bounds = array<i64: 1>, scalar_prefetch = 0 : i64, scratch_operands = 0 : i64, tpu.core_type = #tpu.core_type<tc>, window_params = [{pipeline_mode = #tpu.pipeline_mode<synchronous>, transform_indices = @transform_0, window_bounds = array<i64: 64, 576>}, {transform_indices = @transform_1, window_bounds = array<i64: 576, 32>}, {pipeline_mode = #tpu.pipeline_mode<synchronous>, transform_indices = @transform_2, window_bounds = array<i64: 64, 1>}, {pipeline_mode = #tpu.pipeline_mode<synchronous>, transform_indices = @transform_3, window_bounds = array<i64: 64, 1>}, {transform_indices = @transform_4, window_bounds = array<i64: 64, 32>}, {transform_indices = @transform_5, window_bounds = array<i64: 64, 32>}]} {
    %c0 = arith.constant 0 : index
    %c0_0 = arith.constant 0 : index
    %0 = vector.load %arg1[%c0, %c0_0] : memref<64x576xbf16, #tpu.memory_space<vmem>>, vector<64x576xbf16>
    %c0_1 = arith.constant 0 : index
    %c0_2 = arith.constant 0 : index
    %1 = vector.load %arg2[%c0_1, %c0_2] : memref<576x32xbf16, #tpu.memory_space<vmem>>, vector<576x32xbf16>
    %cst = arith.constant dense<0.000000e+00> : vector<64x32xf32>
    %2 = tpu.matmul %0, %1, %cst {dimension_numbers = #tpu.dot_dimension_numbers<[1], [0], [0], [1], [0, 0, 1, 1], [], []>} : vector<64x576xbf16>, vector<576x32xbf16>, vector<64x32xf32> -> vector<64x32xf32>
    %c0_3 = arith.constant 0 : index
    %c0_4 = arith.constant 0 : index
    %3 = vector.load %arg3[%c0_3, %c0_4] : memref<64x1xf32, #tpu.memory_space<vmem>>, vector<64x1xf32>
    %4 = vector.broadcast %3 : vector<64x1xf32> to vector<64x32xf32>
    %5 = arith.mulf %2, %4 : vector<64x32xf32>
    %c0_5 = arith.constant 0 : index
    %c0_6 = arith.constant 0 : index
    %6 = vector.load %arg4[%c0_5, %c0_6] : memref<64x1xf32, #tpu.memory_space<vmem>>, vector<64x1xf32>
    %7 = vector.broadcast %6 : vector<64x1xf32> to vector<64x32xf32>
    %8 = arith.addf %5, %7 : vector<64x32xf32>
    %c0_7 = arith.constant 0 : index
    %c0_8 = arith.constant 0 : index
    %9 = vector.load %arg5[%c0_7, %c0_8] : memref<64x32xbf16, #tpu.memory_space<vmem>>, vector<64x32xbf16>
    %10 = arith.extf %9 : vector<64x32xbf16> to vector<64x32xf32>
    %11 = arith.addf %8, %10 : vector<64x32xf32>
    %cst_9 = arith.constant 0.000000e+00 : f32
    %12 = vector.broadcast %cst_9 : f32 to vector<64x32xf32>
    %13 = arith.maximumf %11, %12 : vector<64x32xf32>
    %14 = arith.truncf %13 : vector<64x32xf32> to vector<64x32xbf16>
    %c0_10 = arith.constant 0 : index
    %c0_11 = arith.constant 0 : index
    %15 = vector.load %arg6[%c0_10, %c0_11] : memref<64x32xbf16, #tpu.memory_space<vmem>>, vector<64x32xbf16>
    tpu.vector_store %arg6[%c0_10, %c0_11], %14 {strides = array<i32>} : memref<64x32xbf16, #tpu.memory_space<vmem>>, vector<64x32xbf16>,
    return
  }
  func.func @transform_0(%arg0: i32) -> (i32, i32) {
    %c0_i32 = arith.constant 0 : i32
    %c0_i32_0 = arith.constant 0 : i32
    %c0_i32_1 = arith.constant 0 : i32
    return %c0_i32, %c0_i32_0 : i32, i32
  }
  func.func @transform_1(%arg0: i32) -> (i32, i32) {
    %c0_i32 = arith.constant 0 : i32
    %c0_i32_0 = arith.constant 0 : i32
    return %c0_i32, %arg0 : i32, i32
  }
  func.func @transform_2(%arg0: i32) -> (i32, i32) {
    %c0_i32 = arith.constant 0 : i32
    %c0_i32_0 = arith.constant 0 : i32
    %c0_i32_1 = arith.constant 0 : i32
    return %c0_i32, %c0_i32_0 : i32, i32
  }
  func.func @transform_3(%arg0: i32) -> (i32, i32) {
    %c0_i32 = arith.constant 0 : i32
    %c0_i32_0 = arith.constant 0 : i32
    %c0_i32_1 = arith.constant 0 : i32
    return %c0_i32, %c0_i32_0 : i32, i32
  }
  func.func @transform_4(%arg0: i32) -> (i32, i32) {
    %c0_i32 = arith.constant 0 : i32
    %c0_i32_0 = arith.constant 0 : i32
    return %c0_i32, %arg0 : i32, i32
  }
  func.func @transform_5(%arg0: i32) -> (i32, i32) {
    %c0_i32 = arith.constant 0 : i32
    %c0_i32_0 = arith.constant 0 : i32
    return %c0_i32, %arg0 : i32, i32
  }
}

module attributes {stable_mosaic.version = 11 : i64} {
  func.func @kernel(%arg0: i32, %arg1: memref<64x32xbf16, #tpu.memory_space<vmem>>, %arg2: memref<32x32xbf16, #tpu.memory_space<vmem>>, %arg3: memref<64x1xf32, #tpu.memory_space<vmem>>, %arg4: memref<64x1xf32, #tpu.memory_space<vmem>>, %arg5: memref<64x32xbf16, #tpu.memory_space<vmem>>) attributes {dimension_semantics = [#tpu.dimension_semantics<parallel>], iteration_bounds = array<i64: 1>, scalar_prefetch = 0 : i64, scratch_operands = 0 : i64, tpu.core_type = #tpu.core_type<tc>, window_params = [{pipeline_mode = #tpu.pipeline_mode<synchronous>, transform_indices = @transform_0, window_bounds = array<i64: 64, 32>}, {transform_indices = @transform_1, window_bounds = array<i64: 32, 32>}, {pipeline_mode = #tpu.pipeline_mode<synchronous>, transform_indices = @transform_2, window_bounds = array<i64: 64, 1>}, {pipeline_mode = #tpu.pipeline_mode<synchronous>, transform_indices = @transform_3, window_bounds = array<i64: 64, 1>}, {transform_indices = @transform_4, window_bounds = array<i64: 64, 32>}]} {
    %c0 = arith.constant 0 : index
    %c0_0 = arith.constant 0 : index
    %0 = vector.load %arg1[%c0, %c0_0] : memref<64x32xbf16, #tpu.memory_space<vmem>>, vector<64x32xbf16>
    %c0_1 = arith.constant 0 : index
    %c0_2 = arith.constant 0 : index
    %1 = vector.load %arg2[%c0_1, %c0_2] : memref<32x32xbf16, #tpu.memory_space<vmem>>, vector<32x32xbf16>
    %cst = arith.constant dense<0.000000e+00> : vector<64x32xf32>
    %2 = tpu.matmul %0, %1, %cst {dimension_numbers = #tpu.dot_dimension_numbers<[1], [0], [0], [1], [0, 0, 1, 1], [], []>} : vector<64x32xbf16>, vector<32x32xbf16>, vector<64x32xf32> -> vector<64x32xf32>
    %c0_3 = arith.constant 0 : index
    %c0_4 = arith.constant 0 : index
    %3 = vector.load %arg3[%c0_3, %c0_4] : memref<64x1xf32, #tpu.memory_space<vmem>>, vector<64x1xf32>
    %4 = vector.broadcast %3 : vector<64x1xf32> to vector<64x32xf32>
    %5 = arith.mulf %2, %4 : vector<64x32xf32>
    %c0_5 = arith.constant 0 : index
    %c0_6 = arith.constant 0 : index
    %6 = vector.load %arg4[%c0_5, %c0_6] : memref<64x1xf32, #tpu.memory_space<vmem>>, vector<64x1xf32>
    %7 = vector.broadcast %6 : vector<64x1xf32> to vector<64x32xf32>
    %8 = arith.addf %5, %7 : vector<64x32xf32>
    %9 = arith.truncf %8 : vector<64x32xf32> to vector<64x32xbf16>
    %c0_7 = arith.constant 0 : index
    %c0_8 = arith.constant 0 : index
    %10 = vector.load %arg5[%c0_7, %c0_8] : memref<64x32xbf16, #tpu.memory_space<vmem>>, vector<64x32xbf16>
    tpu.vector_store %arg5[%c0_7, %c0_8], %9 {strides = array<i32>} : memref<64x32xbf16, #tpu.memory_space<vmem>>, vector<64x32xbf16>,
    return
  }
  func.func @transform_0(%arg0: i32) -> (i32, i32) {
    %c0_i32 = arith.constant 0 : i32
    %c0_i32_0 = arith.constant 0 : i32
    %c0_i32_1 = arith.constant 0 : i32
    return %c0_i32, %c0_i32_0 : i32, i32
  }
  func.func @transform_1(%arg0: i32) -> (i32, i32) {
    %c0_i32 = arith.constant 0 : i32
    %c0_i32_0 = arith.constant 0 : i32
    return %c0_i32, %arg0 : i32, i32
  }
  func.func @transform_2(%arg0: i32) -> (i32, i32) {
    %c0_i32 = arith.constant 0 : i32
    %c0_i32_0 = arith.constant 0 : i32
    %c0_i32_1 = arith.constant 0 : i32
    return %c0_i32, %c0_i32_0 : i32, i32
  }
  func.func @transform_3(%arg0: i32) -> (i32, i32) {
    %c0_i32 = arith.constant 0 : i32
    %c0_i32_0 = arith.constant 0 : i32
    %c0_i32_1 = arith.constant 0 : i32
    return %c0_i32, %c0_i32_0 : i32, i32
  }
  func.func @transform_4(%arg0: i32) -> (i32, i32) {
    %c0_i32 = arith.constant 0 : i32
    %c0_i32_0 = arith.constant 0 : i32
    return %c0_i32, %arg0 : i32, i32
  }
}

module attributes {stable_mosaic.version = 11 : i64} {
  func.func @_avgpool_fc_kernel(%arg0: memref<64x2x16xbf16, #tpu.memory_space<vmem>>, %arg1: memref<10x64xf32, #tpu.memory_space<vmem>>, %arg2: memref<10x1xf32, #tpu.memory_space<vmem>>, %arg3: memref<10x2xf32, #tpu.memory_space<vmem>>) attributes {dimension_semantics = [], scalar_prefetch = 0 : i64, scratch_operands = 0 : i64, tpu.core_type = #tpu.core_type<tc>} {
    %c0 = arith.constant 0 : index
    %c0_0 = arith.constant 0 : index
    %c0_1 = arith.constant 0 : index
    %0 = vector.load %arg0[%c0, %c0_0, %c0_1] : memref<64x2x16xbf16, #tpu.memory_space<vmem>>, vector<64x2x16xbf16>
    %1 = arith.extf %0 : vector<64x2x16xbf16> to vector<64x2x16xf32>
    %cst = arith.constant dense<0.000000e+00> : vector<64x2xf32>
    %2 = vector.multi_reduction <add>, %1, %cst [2] : vector<64x2x16xf32> to vector<64x2xf32>
    %cst_2 = arith.constant 1.600000e+01 : f32
    %3 = vector.broadcast %cst_2 : f32 to vector<64x2xf32>
    %4 = arith.divf %2, %3 : vector<64x2xf32>
    %c0_3 = arith.constant 0 : index
    %c0_4 = arith.constant 0 : index
    %5 = vector.load %arg1[%c0_3, %c0_4] : memref<10x64xf32, #tpu.memory_space<vmem>>, vector<10x64xf32>
    %cst_5 = arith.constant dense<0.000000e+00> : vector<10x2xf32>
    %6 = tpu.matmul %5, %4, %cst_5 {dimension_numbers = #tpu.dot_dimension_numbers<[1], [0], [0], [1], [0, 0, 1, 1], [], []>} : vector<10x64xf32>, vector<64x2xf32>, vector<10x2xf32> -> vector<10x2xf32>
    %c0_6 = arith.constant 0 : index
    %c0_7 = arith.constant 0 : index
    %7 = vector.load %arg2[%c0_6, %c0_7] : memref<10x1xf32, #tpu.memory_space<vmem>>, vector<10x1xf32>
    %8 = vector.broadcast %7 : vector<10x1xf32> to vector<10x2xf32>
    %9 = arith.addf %6, %8 : vector<10x2xf32>
    %c0_8 = arith.constant 0 : index
    %c0_9 = arith.constant 0 : index
    %10 = vector.load %arg3[%c0_8, %c0_9] : memref<10x2xf32, #tpu.memory_space<vmem>>, vector<10x2xf32>
    tpu.vector_store %arg3[%c0_8, %c0_9], %9 {strides = array<i32>} : memref<10x2xf32, #tpu.memory_space<vmem>>, vector<10x2xf32>,
    return
  }
}

</mosaic_0001>

<llo_original>
// kernel: _lambda_.10
$region0: #{_lambda_.10}
  #allocation0 [shape = 'u32[]', space=smem, size = 0x4, offset = 0x4, fixed_abs, tag = 'smem constant byte address 0x4 - core index']
  #allocation1 [shape = 'u32[144,128]{1,0:T(1,128)}', space=vmem, size = 0x12000, scoped, tag = 'internal scratch']
  %s0 = inlined_call_operand.vmem [shape: bf16[16,32], index: 0, kind: input, shape index: {}]
  %s1 = inlined_call_operand.vmem [shape: bf16[32,512], index: 1, kind: input, shape index: {}]
  %s2 = inlined_call_operand.vmem [shape: f32[16,1], index: 2, kind: input, shape index: {}]
  %s3 = inlined_call_operand.vmem [shape: f32[16,1], index: 3, kind: input, shape index: {}]
  %s4 = inlined_call_operand.vmem [shape: bf16[16,512], index: 4, kind: output, shape index: {}]
  %s5 = sld [smem:[#allocation0]]
  $region26: #{_lambda_.10} parent=0
    _
  %s7 = ssub.s32 1, %s5
  %s8 = scalar_select 0, %s7, %s5
  // Predicated region
  $region2: #{_lambda_.10} parent=0 // pred_check
    _
  $region3: #{_lambda_.10} parent=0 // pred_check_branch
    %10 = sbr.rel (0) target = $region5
  $region4: #{_lambda_.10} parent=0 // pred_region
    _
  $region5: #{_lambda_.10} parent=0 // pred_fallthru
    _
  // Predicated region
  $region6: #{_lambda_.10} parent=0 // pred_check
    _
  $region7: #{_lambda_.10} parent=0 // pred_check_branch
    %12 = sbr.rel (0) target = $region9
  $region8: #{_lambda_.10} parent=0 // pred_region
    _
  $region9: #{_lambda_.10} parent=0 // pred_fallthru
    _
  // Predicated region
  $region10: #{_lambda_.10} parent=0 // pred_check
    _
  $region11: #{_lambda_.10} parent=0 // pred_check_branch
    %14 = sbr.rel (0) target = $region13
  $region12: #{_lambda_.10} parent=0 // pred_region
    _
  $region13: #{_lambda_.10} parent=0 // pred_fallthru
    _
  // Predicated region
  $region14: #{_lambda_.10} parent=0 // pred_check
    _
  $region15: #{_lambda_.10} parent=0 // pred_check_branch
    %16 = sbr.rel (0) target = $region17
  $region16: #{_lambda_.10} parent=0 // pred_region
    _
  $region17: #{_lambda_.10} parent=0 // pred_fallthru
    _
  %v18 = vld [vmem:[%s0] sm:$0xf]
  %v19 = vld [vmem:[%s0 + $0x4] sm:$0xf]
  %v20 = vld [vmem:[%s1] sm:$0xff]
  %v21 = vld [vmem:[%s1 + $0x8] sm:$0xff]
  %v22 = vld [vmem:[%s1 + $0x10] sm:$0xff]
  %v23 = vld [vmem:[%s1 + $0x18] sm:$0xff]
  %v24 = vld [vmem:[%s1 + $0x20] sm:$0xff]
  %v25 = vld [vmem:[%s1 + $0x28] sm:$0xff]
  %v26 = vld [vmem:[%s1 + $0x30] sm:$0xff]
  %v27 = vld [vmem:[%s1 + $0x38] sm:$0xff]
  %v30 = vunpack.c.l.b16 %v18
  %v31 = vunpack.c.l.b16 %v19
  %v32 = vpack.c.b16 %v31, %v30
  %v41 = vunpack.c.l.b16 %v20
  %v42 = vunpack.c.h.b16 %v20
  %v43 = vunpack.c.l.b16 %v21
  %v44 = vunpack.c.h.b16 %v21
  %v45 = vunpack.c.l.b16 %v22
  %v46 = vunpack.c.h.b16 %v22
  %v47 = vunpack.c.l.b16 %v23
  %v48 = vunpack.c.h.b16 %v23
  %v49 = vunpack.c.l.b16 %v24
  %v50 = vunpack.c.h.b16 %v24
  %v51 = vunpack.c.l.b16 %v25
  %v52 = vunpack.c.h.b16 %v25
  %v53 = vunpack.c.l.b16 %v26
  %v54 = vunpack.c.h.b16 %v26
  %v55 = vunpack.c.l.b16 %v27
  %v56 = vunpack.c.h.b16 %v27
  %v57 = vpack.c.b16 %v45, %v41
  %v58 = vpack.c.b16 %v46, %v42
  %v59 = vpack.c.b16 %v47, %v43
  %v60 = vpack.c.b16 %v48, %v44
  %v61 = vpack.c.b16 %v53, %v49
  %v62 = vpack.c.b16 %v54, %v50
  %v63 = vpack.c.b16 %v55, %v51
  %v64 = vpack.c.b16 %v56, %v52
  %vm73 = vcmask 261120
  %v75 = vsel %vm73, %v32, 0
  %77 = vmatprep.subr.bf16.mxu0 %v58
  %78 = vmatpush1.bf16.msra.mxu0 %v57
  %79 = vmatprep.subr.bf16.mxu0 %v62
  %80 = vmatpush1.bf16.msra.mxu0 %v61
  %81 = vmatprep.subr.bf16.mxu0 0
  %82 = vmatpush1.bf16.msra.mxu0 0
  %83 = vmatprep.subr.bf16.mxu0 0
  %84 = vmatpush1.bf16.msra.mxu0 0
  %85 = vmatprep.subr.bf16.mxu0 0
  %86 = vmatpush1.bf16.msra.mxu0 0
  %87 = vmatprep.subr.bf16.mxu0 0
  %88 = vmatpush1.bf16.msra.mxu0 0
  %89 = vmatprep.subr.bf16.mxu0 0
  %90 = vmatpush1.bf16.msra.mxu0 0
  %91 = vmatprep.subr.bf16.mxu0 0
  %92 = vmatpush1.bf16.msra.mxu0 0
  %93 = vmatprep.subr.bf16.mxu0 0
  %94 = vmatpush1.bf16.msra.mxu0 0
  %95 = vmatprep.subr.bf16.mxu0 0
  %96 = vmatpush1.bf16.msra.mxu0 0
  %97 = vmatprep.subr.bf16.mxu0 0
  %98 = vmatpush1.bf16.msra.mxu0 0
  %99 = vmatprep.subr.bf16.mxu0 0
  %100 = vmatpush1.bf16.msra.mxu0 0
  %101 = vmatprep.subr.bf16.mxu0 0
  %102 = vmatpush1.bf16.msra.mxu0 0
  %103 = vmatprep.subr.bf16.mxu0 0
  %104 = vmatpush1.bf16.msra.mxu0 0
  %105 = vmatprep.subr.bf16.mxu0 0
  %106 = vmatpush1.bf16.msra.mxu0 0
  %107 = vmatprep.subr.bf16.mxu0 0
  %108 = vmatpush1.bf16.msra.mxu0 0
  %109 = vmatprep.mubr.bf16.mxu0 0
  %110 = vmatmul.mubr.bf16.gmra.mrb[0].mxu0 %v75
  %v111 = vpop.f32.mrb[0].mxu0
  %v112 = vadd.f32 0.0, %v111
  %v113 = vpop.f32.mrb[0].mxu0
  %v114 = vadd.f32 0.0, %v113
  %v115 = vpop.f32.mrb[0].mxu0
  %v116 = vadd.f32 0.0, %v115
  %v117 = vpop.f32.mrb[0].mxu0
  %v118 = vadd.f32 0.0, %v117
  %119 = vdwg.mxu0
  %120 = vmatprep.subr.bf16.mxu0 %v60
  %121 = vmatpush1.bf16.msra.mxu0 %v59
  %122 = vmatprep.subr.bf16.mxu0 %v64
  %123 = vmatpush1.bf16.msra.mxu0 %v63
  %124 = vmatprep.subr.bf16.mxu0 0
  %125 = vmatpush1.bf16.msra.mxu0 0
  %126 = vmatprep.subr.bf16.mxu0 0
  %127 = vmatpush1.bf16.msra.mxu0 0
  %128 = vmatprep.subr.bf16.mxu0 0
  %129 = vmatpush1.bf16.msra.mxu0 0
  %130 = vmatprep.subr.bf16.mxu0 0
  %131 = vmatpush1.bf16.msra.mxu0 0
  %132 = vmatprep.subr.bf16.mxu0 0
  %133 = vmatpush1.bf16.msra.mxu0 0
  %134 = vmatprep.subr.bf16.mxu0 0
  %135 = vmatpush1.bf16.msra.mxu0 0
  %136 = vmatprep.subr.bf16.mxu0 0
  %137 = vmatpush1.bf16.msra.mxu0 0
  %138 = vmatprep.subr.bf16.mxu0 0
  %139 = vmatpush1.bf16.msra.mxu0 0
  %140 = vmatprep.subr.bf16.mxu0 0
  %141 = vmatpush1.bf16.msra.mxu0 0
  %142 = vmatprep.subr.bf16.mxu0 0
  %143 = vmatpush1.bf16.msra.mxu0 0
  %144 = vmatprep.subr.bf16.mxu0 0
  %145 = vmatpush1.bf16.msra.mxu0 0
  %146 = vmatprep.subr.bf16.mxu0 0
  %147 = vmatpush1.bf16.msra.mxu0 0
  %148 = vmatprep.subr.bf16.mxu0 0
  %149 = vmatpush1.bf16.msra.mxu0 0
  %150 = vmatprep.subr.bf16.mxu0 0
  %151 = vmatpush1.bf16.msra.mxu0 0
  %152 = vmatprep.mubr.bf16.mxu0 0
  %153 = vmatmul.mubr.bf16.gmra.mrb[0].mxu0 %v75
  %v154 = vpop.f32.mrb[0].mxu0
  %v155 = vadd.f32 0.0, %v154
  %v156 = vpop.f32.mrb[0].mxu0
  %v157 = vadd.f32 0.0, %v156
  %v158 = vpop.f32.mrb[0].mxu0
  %v159 = vadd.f32 0.0, %v158
  %v160 = vpop.f32.mrb[0].mxu0
  %v161 = vadd.f32 0.0, %v160
  %162 = vdwg.mxu0
  %v163 = vld [vmem:[%s2] sm:$0xff]
  %v164 = vld [vmem:[%s2 + $0x8] sm:$0xff]
  %166 = vset.pattern.permute.xlu0 0
  %167 = vperm.xlu0 %166, %v163
  %v168 = vpop.permute.xlu0 %167
  %171 = vset.pattern.permute.xlu0 0
  %172 = vperm.xlu0 %171, %v164
  %v173 = vpop.permute.xlu0 %172
  %v175 = vmul.f32 %v112, %v168
  %v176 = vmul.f32 %v114, %v168
  %v177 = vmul.f32 %v155, %v168
  %v178 = vmul.f32 %v157, %v168
  %v179 = vmul.f32 %v116, %v173
  %v180 = vmul.f32 %v118, %v173
  %v181 = vmul.f32 %v159, %v173
  %v182 = vmul.f32 %v161, %v173
  %v183 = vld [vmem:[%s3] sm:$0xff]
  %v184 = vld [vmem:[%s3 + $0x8] sm:$0xff]
  %186 = vset.pattern.permute.xlu0 0
  %187 = vperm.xlu0 %186, %v183
  %v188 = vpop.permute.xlu0 %187
  %191 = vset.pattern.permute.xlu0 0
  %192 = vperm.xlu0 %191, %v184
  %v193 = vpop.permute.xlu0 %192
  %v195 = vadd.f32 %v175, %v188
  %v196 = vadd.f32 %v176, %v188
  %v197 = vadd.f32 %v177, %v188
  %v198 = vadd.f32 %v178, %v188
  %v199 = vadd.f32 %v179, %v193
  %v200 = vadd.f32 %v180, %v193
  %v201 = vadd.f32 %v181, %v193
  %v202 = vadd.f32 %v182, %v193
  %v203 = vmax.f32 %v195, 0.0
  %v204 = vmax.f32 %v196, 0.0
  %v205 = vmax.f32 %v197, 0.0
  %v206 = vmax.f32 %v198, 0.0
  %v207 = vmax.f32 %v199, 0.0
  %v208 = vmax.f32 %v200, 0.0
  %v209 = vmax.f32 %v201, 0.0
  %v210 = vmax.f32 %v202, 0.0
  %v211 = vpack.c.bf16 %v207, %v203
  %v212 = vpack.c.bf16 %v208, %v204
  %v213 = vpack.c.bf16 %v209, %v205
  %v214 = vpack.c.bf16 %v210, %v206
  %v219 = vunpack.c.l.b16 %v211
  %v220 = vunpack.c.l.b16 %v212
  %v221 = vunpack.c.l.b16 %v213
  %v222 = vunpack.c.l.b16 %v214
  %v223 = vunpack.c.h.b16 %v211
  %v224 = vunpack.c.h.b16 %v212
  %v225 = vunpack.c.h.b16 %v213
  %v226 = vunpack.c.h.b16 %v214
  %v227 = vpack.c.b16 %v220, %v219
  %v228 = vpack.c.b16 %v222, %v221
  %v229 = vpack.c.b16 %v224, %v223
  %v230 = vpack.c.b16 %v226, %v225
  %235 = vst [vmem:[%s4] sm:$0xff] %v227
  %236 = vst [vmem:[%s4 + $0x8] sm:$0xff] %v228
  %237 = vst [vmem:[%s4 + $0x10] sm:$0xff] %v229
  %238 = vst [vmem:[%s4 + $0x18] sm:$0xff] %v230
  // Predicated region
  $region18: #{_lambda_.10} parent=0 // pred_check
    _
  $region19: #{_lambda_.10} parent=0 // pred_check_branch
    %240 = sbr.rel (0) target = $region21
  $region20: #{_lambda_.10} parent=0 // pred_region
    _
  $region21: #{_lambda_.10} parent=0 // pred_fallthru
    _
  // Predicated region
  $region22: #{_lambda_.10} parent=0 // pred_check
    _
  $region23: #{_lambda_.10} parent=0 // pred_check_branch
    %242 = sbr.rel (0) target = $region25
  $region24: #{_lambda_.10} parent=0 // pred_region
    _
  $region25: #{_lambda_.10} parent=0 // pred_fallthru
    _

// kernel: _lambda_.11
$region0: #{_lambda_.11}
  #allocation0 [shape = 'u32[]', space=smem, size = 0x4, offset = 0x4, fixed_abs, tag = 'smem constant byte address 0x4 - core index']
  #allocation1 [shape = 'u32[144,128]{1,0:T(1,128)}', space=vmem, size = 0x12000, scoped, tag = 'internal scratch']
  %s0 = inlined_call_operand.vmem [shape: bf16[16,144], index: 0, kind: input, shape index: {}]
  %s1 = inlined_call_operand.vmem [shape: bf16[144,512], index: 1, kind: input, shape index: {}]
  %s2 = inlined_call_operand.vmem [shape: f32[16,1], index: 2, kind: input, shape index: {}]
  %s3 = inlined_call_operand.vmem [shape: f32[16,1], index: 3, kind: input, shape index: {}]
  %s4 = inlined_call_operand.vmem [shape: bf16[16,512], index: 4, kind: output, shape index: {}]
  %s5 = sld [smem:[#allocation0]]
  $region26: #{_lambda_.11} parent=0
    _
  %s7 = ssub.s32 1, %s5
  %s8 = scalar_select 0, %s7, %s5
  // Predicated region
  $region2: #{_lambda_.11} parent=0 // pred_check
    _
  $region3: #{_lambda_.11} parent=0 // pred_check_branch
    %10 = sbr.rel (0) target = $region5
  $region4: #{_lambda_.11} parent=0 // pred_region
    _
  $region5: #{_lambda_.11} parent=0 // pred_fallthru
    _
  // Predicated region
  $region6: #{_lambda_.11} parent=0 // pred_check
    _
  $region7: #{_lambda_.11} parent=0 // pred_check_branch
    %12 = sbr.rel (0) target = $region9
  $region8: #{_lambda_.11} parent=0 // pred_region
    _
  $region9: #{_lambda_.11} parent=0 // pred_fallthru
    _
  // Predicated region
  $region10: #{_lambda_.11} parent=0 // pred_check
    _
  $region11: #{_lambda_.11} parent=0 // pred_check_branch
    %14 = sbr.rel (0) target = $region13
  $region12: #{_lambda_.11} parent=0 // pred_region
    _
  $region13: #{_lambda_.11} parent=0 // pred_fallthru
    _
  // Predicated region
  $region14: #{_lambda_.11} parent=0 // pred_check
    _
  $region15: #{_lambda_.11} parent=0 // pred_check_branch
    %16 = sbr.rel (0) target = $region17
  $region16: #{_lambda_.11} parent=0 // pred_region
    _
  $region17: #{_lambda_.11} parent=0 // pred_fallthru
    _
  %v18 = vld [vmem:[%s0] sm:$0xff]
  %v19 = vld [vmem:[%s0 + $0x8] sm:$0xff]
  %v20 = vld [vmem:[%s1] sm:$0xff]
  %v21 = vld [vmem:[%s1 + $0x8] sm:$0xff]
  %v22 = vld [vmem:[%s1 + $0x10] sm:$0xff]
  %v23 = vld [vmem:[%s1 + $0x18] sm:$0xff]
  %v24 = vld [vmem:[%s1 + $0x20] sm:$0xff]
  %v25 = vld [vmem:[%s1 + $0x28] sm:$0xff]
  %v26 = vld [vmem:[%s1 + $0x30] sm:$0xff]
  %v27 = vld [vmem:[%s1 + $0x38] sm:$0xff]
  %v28 = vld [vmem:[%s1 + $0x40] sm:$0xff]
  %v29 = vld [vmem:[%s1 + $0x48] sm:$0xff]
  %v30 = vld [vmem:[%s1 + $0x50] sm:$0xff]
  %v31 = vld [vmem:[%s1 + $0x58] sm:$0xff]
  %v32 = vld [vmem:[%s1 + $0x60] sm:$0xff]
  %v33 = vld [vmem:[%s1 + $0x68] sm:$0xff]
  %v34 = vld [vmem:[%s1 + $0x70] sm:$0xff]
  %v35 = vld [vmem:[%s1 + $0x78] sm:$0xff]
  %v36 = vld [vmem:[%s1 + $0x80] sm:$0xff]
  %v37 = vld [vmem:[%s1 + $0x88] sm:$0xff]
  %v38 = vld [vmem:[%s1 + $0x90] sm:$0xff]
  %v39 = vld [vmem:[%s1 + $0x98] sm:$0xff]
  %v40 = vld [vmem:[%s1 + $0xa0] sm:$0xff]
  %v41 = vld [vmem:[%s1 + $0xa8] sm:$0xff]
  %v42 = vld [vmem:[%s1 + $0xb0] sm:$0xff]
  %v43 = vld [vmem:[%s1 + $0xb8] sm:$0xff]
  %v44 = vld [vmem:[%s1 + $0xc0] sm:$0xff]
  %v45 = vld [vmem:[%s1 + $0xc8] sm:$0xff]
  %v46 = vld [vmem:[%s1 + $0xd0] sm:$0xff]
  %v47 = vld [vmem:[%s1 + $0xd8] sm:$0xff]
  %v48 = vld [vmem:[%s1 + $0xe0] sm:$0xff]
  %v49 = vld [vmem:[%s1 + $0xe8] sm:$0xff]
  %v50 = vld [vmem:[%s1 + $0xf0] sm:$0xff]
  %v51 = vld [vmem:[%s1 + $0xf8] sm:$0xff]
  %v52 = vld [vmem:[%s1 + $0x100] sm:$0xff]
  %v53 = vld [vmem:[%s1 + $0x108] sm:$0xff]
  %v54 = vld [vmem:[%s1 + $0x110] sm:$0xff]
  %v55 = vld [vmem:[%s1 + $0x118] sm:$0xff]
  %v58 = vunpack.c.l.b16 %v18
  %v59 = vunpack.c.h.b16 %v18
  %v60 = vunpack.c.l.b16 %v19
  %v61 = vunpack.c.h.b16 %v19
  %v62 = vpack.c.b16 %v60, %v58
  %v63 = vpack.c.b16 %v61, %v59
  %v101 = vunpack.c.l.b16 %v20
  %v102 = vunpack.c.h.b16 %v20
  %v103 = vunpack.c.l.b16 %v21
  %v104 = vunpack.c.h.b16 %v21
  %v105 = vunpack.c.l.b16 %v22
  %v106 = vunpack.c.h.b16 %v22
  %v107 = vunpack.c.l.b16 %v23
  %v108 = vunpack.c.h.b16 %v23
  %v109 = vunpack.c.l.b16 %v24
  %v110 = vunpack.c.h.b16 %v24
  %v111 = vunpack.c.l.b16 %v25
  %v112 = vunpack.c.h.b16 %v25
  %v113 = vunpack.c.l.b16 %v26
  %v114 = vunpack.c.h.b16 %v26
  %v115 = vunpack.c.l.b16 %v27
  %v116 = vunpack.c.h.b16 %v27
  %v117 = vunpack.c.l.b16 %v28
  %v118 = vunpack.c.h.b16 %v28
  %v119 = vunpack.c.l.b16 %v29
  %v120 = vunpack.c.h.b16 %v29
  %v121 = vunpack.c.l.b16 %v30
  %v122 = vunpack.c.h.b16 %v30
  %v123 = vunpack.c.l.b16 %v31
  %v124 = vunpack.c.h.b16 %v31
  %v125 = vunpack.c.l.b16 %v32
  %v126 = vunpack.c.h.b16 %v32
  %v127 = vunpack.c.l.b16 %v33
  %v128 = vunpack.c.h.b16 %v33
  %v129 = vunpack.c.l.b16 %v34
  %v130 = vunpack.c.h.b16 %v34
  %v131 = vunpack.c.l.b16 %v35
  %v132 = vunpack.c.h.b16 %v35
  %v133 = vunpack.c.l.b16 %v36
  %v134 = vunpack.c.h.b16 %v36
  %v135 = vunpack.c.l.b16 %v37
  %v136 = vunpack.c.h.b16 %v37
  %v137 = vunpack.c.l.b16 %v38
  %v138 = vunpack.c.h.b16 %v38
  %v139 = vunpack.c.l.b16 %v39
  %v140 = vunpack.c.h.b16 %v39
  %v141 = vunpack.c.l.b16 %v40
  %v142 = vunpack.c.h.b16 %v40
  %v143 = vunpack.c.l.b16 %v41
  %v144 = vunpack.c.h.b16 %v41
  %v145 = vunpack.c.l.b16 %v42
  %v146 = vunpack.c.h.b16 %v42
  %v147 = vunpack.c.l.b16 %v43
  %v148 = vunpack.c.h.b16 %v43
  %v149 = vunpack.c.l.b16 %v44
  %v150 = vunpack.c.h.b16 %v44
  %v151 = vunpack.c.l.b16 %v45
  %v152 = vunpack.c.h.b16 %v45
  %v153 = vunpack.c.l.b16 %v46
  %v154 = vunpack.c.h.b16 %v46
  %v155 = vunpack.c.l.b16 %v47
  %v156 = vunpack.c.h.b16 %v47
  %v157 = vunpack.c.l.b16 %v48
  %v158 = vunpack.c.h.b16 %v48
  %v159 = vunpack.c.l.b16 %v49
  %v160 = vunpack.c.h.b16 %v49
  %v161 = vunpack.c.l.b16 %v50
  %v162 = vunpack.c.h.b16 %v50
  %v163 = vunpack.c.l.b16 %v51
  %v164 = vunpack.c.h.b16 %v51
  %v165 = vunpack.c.l.b16 %v52
  %v166 = vunpack.c.h.b16 %v52
  %v167 = vunpack.c.l.b16 %v53
  %v168 = vunpack.c.h.b16 %v53
  %v169 = vunpack.c.l.b16 %v54
  %v170 = vunpack.c.h.b16 %v54
  %v171 = vunpack.c.l.b16 %v55
  %v172 = vunpack.c.h.b16 %v55
  %v173 = vpack.c.b16 %v105, %v101
  %v174 = vpack.c.b16 %v106, %v102
  %v175 = vpack.c.b16 %v107, %v103
  %v176 = vpack.c.b16 %v108, %v104
  %v177 = vpack.c.b16 %v113, %v109
  %v178 = vpack.c.b16 %v114, %v110
  %v179 = vpack.c.b16 %v115, %v111
  %v180 = vpack.c.b16 %v116, %v112
  %v181 = vpack.c.b16 %v121, %v117
  %v182 = vpack.c.b16 %v122, %v118
  %v183 = vpack.c.b16 %v123, %v119
  %v184 = vpack.c.b16 %v124, %v120
  %v185 = vpack.c.b16 %v129, %v125
  %v186 = vpack.c.b16 %v130, %v126
  %v187 = vpack.c.b16 %v131, %v127
  %v188 = vpack.c.b16 %v132, %v128
  %v189 = vpack.c.b16 %v137, %v133
  %v190 = vpack.c.b16 %v138, %v134
  %v191 = vpack.c.b16 %v139, %v135
  %v192 = vpack.c.b16 %v140, %v136
  %v193 = vpack.c.b16 %v145, %v141
  %v194 = vpack.c.b16 %v146, %v142
  %v195 = vpack.c.b16 %v147, %v143
  %v196 = vpack.c.b16 %v148, %v144
  %v197 = vpack.c.b16 %v153, %v149
  %v198 = vpack.c.b16 %v154, %v150
  %v199 = vpack.c.b16 %v155, %v151
  %v200 = vpack.c.b16 %v156, %v152
  %v201 = vpack.c.b16 %v161, %v157
  %v202 = vpack.c.b16 %v162, %v158
  %v203 = vpack.c.b16 %v163, %v159
  %v204 = vpack.c.b16 %v164, %v160
  %v205 = vpack.c.b16 %v169, %v165
  %v206 = vpack.c.b16 %v170, %v166
  %v207 = vpack.c.b16 %v171, %v167
  %v208 = vpack.c.b16 %v172, %v168
  %vm245 = vcmask 130048
  %v247 = vsel %vm245, %v63, 0
  %249 = vmatprep.subr.bf16.mxu0 %v174
  %250 = vmatpush1.bf16.msra.mxu0 %v173
  %251 = vmatprep.subr.bf16.mxu0 %v178
  %252 = vmatpush1.bf16.msra.mxu0 %v177
  %253 = vmatprep.subr.bf16.mxu0 %v182
  %254 = vmatpush1.bf16.msra.mxu0 %v181
  %255 = vmatprep.subr.bf16.mxu0 %v186
  %256 = vmatpush1.bf16.msra.mxu0 %v185
  %257 = vmatprep.subr.bf16.mxu0 %v190
  %258 = vmatpush1.bf16.msra.mxu0 %v189
  %259 = vmatprep.subr.bf16.mxu0 %v194
  %260 = vmatpush1.bf16.msra.mxu0 %v193
  %261 = vmatprep.subr.bf16.mxu0 %v198
  %262 = vmatpush1.bf16.msra.mxu0 %v197
  %263 = vmatprep.subr.bf16.mxu0 %v202
  %264 = vmatpush1.bf16.msra.mxu0 %v201
  %265 = vmatprep.subr.bf16.mxu0 %v206
  %266 = vmatpush1.bf16.msra.mxu0 %v205
  %267 = vmatprep.subr.bf16.mxu0 0
  %268 = vmatpush1.bf16.msra.mxu0 0
  %269 = vmatprep.subr.bf16.mxu0 0
  %270 = vmatpush1.bf16.msra.mxu0 0
  %271 = vmatprep.subr.bf16.mxu0 0
  %272 = vmatpush1.bf16.msra.mxu0 0
  %273 = vmatprep.subr.bf16.mxu0 0
  %274 = vmatpush1.bf16.msra.mxu0 0
  %275 = vmatprep.subr.bf16.mxu0 0
  %276 = vmatpush1.bf16.msra.mxu0 0
  %277 = vmatprep.subr.bf16.mxu0 0
  %278 = vmatpush1.bf16.msra.mxu0 0
  %279 = vmatprep.subr.bf16.mxu0 0
  %280 = vmatpush1.bf16.msra.mxu0 0
  %281 = vmatprep.mubr.bf16.mxu0 %v247
  %282 = vmatmul.mubr.bf16.gmra.mrb[0].mxu0 %v62
  %v283 = vpop.f32.mrb[0].mxu0
  %v284 = vadd.f32 0.0, %v283
  %v285 = vpop.f32.mrb[0].mxu0
  %v286 = vadd.f32 0.0, %v285
  %v287 = vpop.f32.mrb[0].mxu0
  %v288 = vadd.f32 0.0, %v287
  %v289 = vpop.f32.mrb[0].mxu0
  %v290 = vadd.f32 0.0, %v289
  %291 = vdwg.mxu0
  %292 = vmatprep.subr.bf16.mxu0 %v176
  %293 = vmatpush1.bf16.msra.mxu0 %v175
  %294 = vmatprep.subr.bf16.mxu0 %v180
  %295 = vmatpush1.bf16.msra.mxu0 %v179
  %296 = vmatprep.subr.bf16.mxu0 %v184
  %297 = vmatpush1.bf16.msra.mxu0 %v183
  %298 = vmatprep.subr.bf16.mxu0 %v188
  %299 = vmatpush1.bf16.msra.mxu0 %v187
  %300 = vmatprep.subr.bf16.mxu0 %v192
  %301 = vmatpush1.bf16.msra.mxu0 %v191
  %302 = vmatprep.subr.bf16.mxu0 %v196
  %303 = vmatpush1.bf16.msra.mxu0 %v195
  %304 = vmatprep.subr.bf16.mxu0 %v200
  %305 = vmatpush1.bf16.msra.mxu0 %v199
  %306 = vmatprep.subr.bf16.mxu0 %v204
  %307 = vmatpush1.bf16.msra.mxu0 %v203
  %308 = vmatprep.subr.bf16.mxu0 %v208
  %309 = vmatpush1.bf16.msra.mxu0 %v207
  %310 = vmatprep.subr.bf16.mxu0 0
  %311 = vmatpush1.bf16.msra.mxu0 0
  %312 = vmatprep.subr.bf16.mxu0 0
  %313 = vmatpush1.bf16.msra.mxu0 0
  %314 = vmatprep.subr.bf16.mxu0 0
  %315 = vmatpush1.bf16.msra.mxu0 0
  %316 = vmatprep.subr.bf16.mxu0 0
  %317 = vmatpush1.bf16.msra.mxu0 0
  %318 = vmatprep.subr.bf16.mxu0 0
  %319 = vmatpush1.bf16.msra.mxu0 0
  %320 = vmatprep.subr.bf16.mxu0 0
  %321 = vmatpush1.bf16.msra.mxu0 0
  %322 = vmatprep.subr.bf16.mxu0 0
  %323 = vmatpush1.bf16.msra.mxu0 0
  %324 = vmatprep.mubr.bf16.mxu0 %v247
  %325 = vmatmul.mubr.bf16.gmra.mrb[0].mxu0 %v62
  %v326 = vpop.f32.mrb[0].mxu0
  %v327 = vadd.f32 0.0, %v326
  %v328 = vpop.f32.mrb[0].mxu0
  %v329 = vadd.f32 0.0, %v328
  %v330 = vpop.f32.mrb[0].mxu0
  %v331 = vadd.f32 0.0, %v330
  %v332 = vpop.f32.mrb[0].mxu0
  %v333 = vadd.f32 0.0, %v332
  %334 = vdwg.mxu0
  %v335 = vld [vmem:[%s2] sm:$0xff]
  %v336 = vld [vmem:[%s2 + $0x8] sm:$0xff]
  %338 = vset.pattern.permute.xlu0 0
  %339 = vperm.xlu0 %338, %v335
  %v340 = vpop.permute.xlu0 %339
  %343 = vset.pattern.permute.xlu0 0
  %344 = vperm.xlu0 %343, %v336
  %v345 = vpop.permute.xlu0 %344
  %v347 = vmul.f32 %v284, %v340
  %v348 = vmul.f32 %v286, %v340
  %v349 = vmul.f32 %v327, %v340
  %v350 = vmul.f32 %v329, %v340
  %v351 = vmul.f32 %v288, %v345
  %v352 = vmul.f32 %v290, %v345
  %v353 = vmul.f32 %v331, %v345
  %v354 = vmul.f32 %v333, %v345
  %v355 = vld [vmem:[%s3] sm:$0xff]
  %v356 = vld [vmem:[%s3 + $0x8] sm:$0xff]
  %358 = vset.pattern.permute.xlu0 0
  %359 = vperm.xlu0 %358, %v355
  %v360 = vpop.permute.xlu0 %359
  %363 = vset.pattern.permute.xlu0 0
  %364 = vperm.xlu0 %363, %v356
  %v365 = vpop.permute.xlu0 %364
  %v367 = vadd.f32 %v347, %v360
  %v368 = vadd.f32 %v348, %v360
  %v369 = vadd.f32 %v349, %v360
  %v370 = vadd.f32 %v350, %v360
  %v371 = vadd.f32 %v351, %v365
  %v372 = vadd.f32 %v352, %v365
  %v373 = vadd.f32 %v353, %v365
  %v374 = vadd.f32 %v354, %v365
  %v375 = vmax.f32 %v367, 0.0
  %v376 = vmax.f32 %v368, 0.0
  %v377 = vmax.f32 %v369, 0.0
  %v378 = vmax.f32 %v370, 0.0
  %v379 = vmax.f32 %v371, 0.0
  %v380 = vmax.f32 %v372, 0.0
  %v381 = vmax.f32 %v373, 0.0
  %v382 = vmax.f32 %v374, 0.0
  %v383 = vpack.c.bf16 %v379, %v375
  %v384 = vpack.c.bf16 %v380, %v376
  %v385 = vpack.c.bf16 %v381, %v377
  %v386 = vpack.c.bf16 %v382, %v378
  %v391 = vunpack.c.l.b16 %v383
  %v392 = vunpack.c.l.b16 %v384
  %v393 = vunpack.c.l.b16 %v385
  %v394 = vunpack.c.l.b16 %v386
  %v395 = vunpack.c.h.b16 %v383
  %v396 = vunpack.c.h.b16 %v384
  %v397 = vunpack.c.h.b16 %v385
  %v398 = vunpack.c.h.b16 %v386
  %v399 = vpack.c.b16 %v392, %v391
  %v400 = vpack.c.b16 %v394, %v393
  %v401 = vpack.c.b16 %v396, %v395
  %v402 = vpack.c.b16 %v398, %v397
  %407 = vst [vmem:[%s4] sm:$0xff] %v399
  %408 = vst [vmem:[%s4 + $0x8] sm:$0xff] %v400
  %409 = vst [vmem:[%s4 + $0x10] sm:$0xff] %v401
  %410 = vst [vmem:[%s4 + $0x18] sm:$0xff] %v402
  // Predicated region
  $region18: #{_lambda_.11} parent=0 // pred_check
    _
  $region19: #{_lambda_.11} parent=0 // pred_check_branch
    %412 = sbr.rel (0) target = $region21
  $region20: #{_lambda_.11} parent=0 // pred_region
    _
  $region21: #{_lambda_.11} parent=0 // pred_fallthru
    _
  // Predicated region
  $region22: #{_lambda_.11} parent=0 // pred_check
    _
  $region23: #{_lambda_.11} parent=0 // pred_check_branch
    %414 = sbr.rel (0) target = $region25
  $region24: #{_lambda_.11} parent=0 // pred_region
    _
  $region25: #{_lambda_.11} parent=0 // pred_fallthru
    _

// kernel: _lambda_.12
$region0: #{_lambda_.12}
  #allocation0 [shape = 'u32[]', space=smem, size = 0x4, offset = 0x4, fixed_abs, tag = 'smem constant byte address 0x4 - core index']
  #allocation1 [shape = 'u32[144,128]{1,0:T(1,128)}', space=vmem, size = 0x12000, scoped, tag = 'internal scratch']
  %s0 = inlined_call_operand.vmem [shape: bf16[16,144], index: 0, kind: input, shape index: {}]
  %s1 = inlined_call_operand.vmem [shape: bf16[144,512], index: 1, kind: input, shape index: {}]
  %s2 = inlined_call_operand.vmem [shape: f32[16,1], index: 2, kind: input, shape index: {}]
  %s3 = inlined_call_operand.vmem [shape: f32[16,1], index: 3, kind: input, shape index: {}]
  %s4 = inlined_call_operand.vmem [shape: bf16[16,512], index: 4, kind: input, shape index: {}]
  %s5 = inlined_call_operand.vmem [shape: bf16[16,512], index: 5, kind: output, shape index: {}]
  %s6 = sld [smem:[#allocation0]]
  $region30: #{_lambda_.12} parent=0
    _
  %s8 = ssub.s32 1, %s6
  %s9 = scalar_select 0, %s8, %s6
  // Predicated region
  $region2: #{_lambda_.12} parent=0 // pred_check
    _
  $region3: #{_lambda_.12} parent=0 // pred_check_branch
    %11 = sbr.rel (0) target = $region5
  $region4: #{_lambda_.12} parent=0 // pred_region
    _
  $region5: #{_lambda_.12} parent=0 // pred_fallthru
    _
  // Predicated region
  $region6: #{_lambda_.12} parent=0 // pred_check
    _
  $region7: #{_lambda_.12} parent=0 // pred_check_branch
    %13 = sbr.rel (0) target = $region9
  $region8: #{_lambda_.12} parent=0 // pred_region
    _
  $region9: #{_lambda_.12} parent=0 // pred_fallthru
    _
  // Predicated region
  $region10: #{_lambda_.12} parent=0 // pred_check
    _
  $region11: #{_lambda_.12} parent=0 // pred_check_branch
    %15 = sbr.rel (0) target = $region13
  $region12: #{_lambda_.12} parent=0 // pred_region
    _
  $region13: #{_lambda_.12} parent=0 // pred_fallthru
    _
  // Predicated region
  $region14: #{_lambda_.12} parent=0 // pred_check
    _
  $region15: #{_lambda_.12} parent=0 // pred_check_branch
    %17 = sbr.rel (0) target = $region17
  $region16: #{_lambda_.12} parent=0 // pred_region
    _
  $region17: #{_lambda_.12} parent=0 // pred_fallthru
    _
  // Predicated region
  $region18: #{_lambda_.12} parent=0 // pred_check
    _
  $region19: #{_lambda_.12} parent=0 // pred_check_branch
    %19 = sbr.rel (0) target = $region21
  $region20: #{_lambda_.12} parent=0 // pred_region
    _
  $region21: #{_lambda_.12} parent=0 // pred_fallthru
    _
  %v21 = vld [vmem:[%s0] sm:$0xff]
  %v22 = vld [vmem:[%s0 + $0x8] sm:$0xff]
  %v23 = vld [vmem:[%s1] sm:$0xff]
  %v24 = vld [vmem:[%s1 + $0x8] sm:$0xff]
  %v25 = vld [vmem:[%s1 + $0x10] sm:$0xff]
  %v26 = vld [vmem:[%s1 + $0x18] sm:$0xff]
  %v27 = vld [vmem:[%s1 + $0x20] sm:$0xff]
  %v28 = vld [vmem:[%s1 + $0x28] sm:$0xff]
  %v29 = vld [vmem:[%s1 + $0x30] sm:$0xff]
  %v30 = vld [vmem:[%s1 + $0x38] sm:$0xff]
  %v31 = vld [vmem:[%s1 + $0x40] sm:$0xff]
  %v32 = vld [vmem:[%s1 + $0x48] sm:$0xff]
  %v33 = vld [vmem:[%s1 + $0x50] sm:$0xff]
  %v34 = vld [vmem:[%s1 + $0x58] sm:$0xff]
  %v35 = vld [vmem:[%s1 + $0x60] sm:$0xff]
  %v36 = vld [vmem:[%s1 + $0x68] sm:$0xff]
  %v37 = vld [vmem:[%s1 + $0x70] sm:$0xff]
  %v38 = vld [vmem:[%s1 + $0x78] sm:$0xff]
  %v39 = vld [vmem:[%s1 + $0x80] sm:$0xff]
  %v40 = vld [vmem:[%s1 + $0x88] sm:$0xff]
  %v41 = vld [vmem:[%s1 + $0x90] sm:$0xff]
  %v42 = vld [vmem:[%s1 + $0x98] sm:$0xff]
  %v43 = vld [vmem:[%s1 + $0xa0] sm:$0xff]
  %v44 = vld [vmem:[%s1 + $0xa8] sm:$0xff]
  %v45 = vld [vmem:[%s1 + $0xb0] sm:$0xff]
  %v46 = vld [vmem:[%s1 + $0xb8] sm:$0xff]
  %v47 = vld [vmem:[%s1 + $0xc0] sm:$0xff]
  %v48 = vld [vmem:[%s1 + $0xc8] sm:$0xff]
  %v49 = vld [vmem:[%s1 + $0xd0] sm:$0xff]
  %v50 = vld [vmem:[%s1 + $0xd8] sm:$0xff]
  %v51 = vld [vmem:[%s1 + $0xe0] sm:$0xff]
  %v52 = vld [vmem:[%s1 + $0xe8] sm:$0xff]
  %v53 = vld [vmem:[%s1 + $0xf0] sm:$0xff]
  %v54 = vld [vmem:[%s1 + $0xf8] sm:$0xff]
  %v55 = vld [vmem:[%s1 + $0x100] sm:$0xff]
  %v56 = vld [vmem:[%s1 + $0x108] sm:$0xff]
  %v57 = vld [vmem:[%s1 + $0x110] sm:$0xff]
  %v58 = vld [vmem:[%s1 + $0x118] sm:$0xff]
  %v61 = vunpack.c.l.b16 %v21
  %v62 = vunpack.c.h.b16 %v21
  %v63 = vunpack.c.l.b16 %v22
  %v64 = vunpack.c.h.b16 %v22
  %v65 = vpack.c.b16 %v63, %v61
  %v66 = vpack.c.b16 %v64, %v62
  %v104 = vunpack.c.l.b16 %v23
  %v105 = vunpack.c.h.b16 %v23
  %v106 = vunpack.c.l.b16 %v24
  %v107 = vunpack.c.h.b16 %v24
  %v108 = vunpack.c.l.b16 %v25
  %v109 = vunpack.c.h.b16 %v25
  %v110 = vunpack.c.l.b16 %v26
  %v111 = vunpack.c.h.b16 %v26
  %v112 = vunpack.c.l.b16 %v27
  %v113 = vunpack.c.h.b16 %v27
  %v114 = vunpack.c.l.b16 %v28
  %v115 = vunpack.c.h.b16 %v28
  %v116 = vunpack.c.l.b16 %v29
  %v117 = vunpack.c.h.b16 %v29
  %v118 = vunpack.c.l.b16 %v30
  %v119 = vunpack.c.h.b16 %v30
  %v120 = vunpack.c.l.b16 %v31
  %v121 = vunpack.c.h.b16 %v31
  %v122 = vunpack.c.l.b16 %v32
  %v123 = vunpack.c.h.b16 %v32
  %v124 = vunpack.c.l.b16 %v33
  %v125 = vunpack.c.h.b16 %v33
  %v126 = vunpack.c.l.b16 %v34
  %v127 = vunpack.c.h.b16 %v34
  %v128 = vunpack.c.l.b16 %v35
  %v129 = vunpack.c.h.b16 %v35
  %v130 = vunpack.c.l.b16 %v36
  %v131 = vunpack.c.h.b16 %v36
  %v132 = vunpack.c.l.b16 %v37
  %v133 = vunpack.c.h.b16 %v37
  %v134 = vunpack.c.l.b16 %v38
  %v135 = vunpack.c.h.b16 %v38
  %v136 = vunpack.c.l.b16 %v39
  %v137 = vunpack.c.h.b16 %v39
  %v138 = vunpack.c.l.b16 %v40
  %v139 = vunpack.c.h.b16 %v40
  %v140 = vunpack.c.l.b16 %v41
  %v141 = vunpack.c.h.b16 %v41
  %v142 = vunpack.c.l.b16 %v42
  %v143 = vunpack.c.h.b16 %v42
  %v144 = vunpack.c.l.b16 %v43
  %v145 = vunpack.c.h.b16 %v43
  %v146 = vunpack.c.l.b16 %v44
  %v147 = vunpack.c.h.b16 %v44
  %v148 = vunpack.c.l.b16 %v45
  %v149 = vunpack.c.h.b16 %v45
  %v150 = vunpack.c.l.b16 %v46
  %v151 = vunpack.c.h.b16 %v46
  %v152 = vunpack.c.l.b16 %v47
  %v153 = vunpack.c.h.b16 %v47
  %v154 = vunpack.c.l.b16 %v48
  %v155 = vunpack.c.h.b16 %v48
  %v156 = vunpack.c.l.b16 %v49
  %v157 = vunpack.c.h.b16 %v49
  %v158 = vunpack.c.l.b16 %v50
  %v159 = vunpack.c.h.b16 %v50
  %v160 = vunpack.c.l.b16 %v51
  %v161 = vunpack.c.h.b16 %v51
  %v162 = vunpack.c.l.b16 %v52
  %v163 = vunpack.c.h.b16 %v52
  %v164 = vunpack.c.l.b16 %v53
  %v165 = vunpack.c.h.b16 %v53
  %v166 = vunpack.c.l.b16 %v54
  %v167 = vunpack.c.h.b16 %v54
  %v168 = vunpack.c.l.b16 %v55
  %v169 = vunpack.c.h.b16 %v55
  %v170 = vunpack.c.l.b16 %v56
  %v171 = vunpack.c.h.b16 %v56
  %v172 = vunpack.c.l.b16 %v57
  %v173 = vunpack.c.h.b16 %v57
  %v174 = vunpack.c.l.b16 %v58
  %v175 = vunpack.c.h.b16 %v58
  %v176 = vpack.c.b16 %v108, %v104
  %v177 = vpack.c.b16 %v109, %v105
  %v178 = vpack.c.b16 %v110, %v106
  %v179 = vpack.c.b16 %v111, %v107
  %v180 = vpack.c.b16 %v116, %v112
  %v181 = vpack.c.b16 %v117, %v113
  %v182 = vpack.c.b16 %v118, %v114
  %v183 = vpack.c.b16 %v119, %v115
  %v184 = vpack.c.b16 %v124, %v120
  %v185 = vpack.c.b16 %v125, %v121
  %v186 = vpack.c.b16 %v126, %v122
  %v187 = vpack.c.b16 %v127, %v123
  %v188 = vpack.c.b16 %v132, %v128
  %v189 = vpack.c.b16 %v133, %v129
  %v190 = vpack.c.b16 %v134, %v130
  %v191 = vpack.c.b16 %v135, %v131
  %v192 = vpack.c.b16 %v140, %v136
  %v193 = vpack.c.b16 %v141, %v137
  %v194 = vpack.c.b16 %v142, %v138
  %v195 = vpack.c.b16 %v143, %v139
  %v196 = vpack.c.b16 %v148, %v144
  %v197 = vpack.c.b16 %v149, %v145
  %v198 = vpack.c.b16 %v150, %v146
  %v199 = vpack.c.b16 %v151, %v147
  %v200 = vpack.c.b16 %v156, %v152
  %v201 = vpack.c.b16 %v157, %v153
  %v202 = vpack.c.b16 %v158, %v154
  %v203 = vpack.c.b16 %v159, %v155
  %v204 = vpack.c.b16 %v164, %v160
  %v205 = vpack.c.b16 %v165, %v161
  %v206 = vpack.c.b16 %v166, %v162
  %v207 = vpack.c.b16 %v167, %v163
  %v208 = vpack.c.b16 %v172, %v168
  %v209 = vpack.c.b16 %v173, %v169
  %v210 = vpack.c.b16 %v174, %v170
  %v211 = vpack.c.b16 %v175, %v171
  %vm248 = vcmask 130048
  %v250 = vsel %vm248, %v66, 0
  %252 = vmatprep.subr.bf16.mxu0 %v177
  %253 = vmatpush1.bf16.msra.mxu0 %v176
  %254 = vmatprep.subr.bf16.mxu0 %v181
  %255 = vmatpush1.bf16.msra.mxu0 %v180
  %256 = vmatprep.subr.bf16.mxu0 %v185
  %257 = vmatpush1.bf16.msra.mxu0 %v184
  %258 = vmatprep.subr.bf16.mxu0 %v189
  %259 = vmatpush1.bf16.msra.mxu0 %v188
  %260 = vmatprep.subr.bf16.mxu0 %v193
  %261 = vmatpush1.bf16.msra.mxu0 %v192
  %262 = vmatprep.subr.bf16.mxu0 %v197
  %263 = vmatpush1.bf16.msra.mxu0 %v196
  %264 = vmatprep.subr.bf16.mxu0 %v201
  %265 = vmatpush1.bf16.msra.mxu0 %v200
  %266 = vmatprep.subr.bf16.mxu0 %v205
  %267 = vmatpush1.bf16.msra.mxu0 %v204
  %268 = vmatprep.subr.bf16.mxu0 %v209
  %269 = vmatpush1.bf16.msra.mxu0 %v208
  %270 = vmatprep.subr.bf16.mxu0 0
  %271 = vmatpush1.bf16.msra.mxu0 0
  %272 = vmatprep.subr.bf16.mxu0 0
  %273 = vmatpush1.bf16.msra.mxu0 0
  %274 = vmatprep.subr.bf16.mxu0 0
  %275 = vmatpush1.bf16.msra.mxu0 0
  %276 = vmatprep.subr.bf16.mxu0 0
  %277 = vmatpush1.bf16.msra.mxu0 0
  %278 = vmatprep.subr.bf16.mxu0 0
  %279 = vmatpush1.bf16.msra.mxu0 0
  %280 = vmatprep.subr.bf16.mxu0 0
  %281 = vmatpush1.bf16.msra.mxu0 0
  %282 = vmatprep.subr.bf16.mxu0 0
  %283 = vmatpush1.bf16.msra.mxu0 0
  %284 = vmatprep.mubr.bf16.mxu0 %v250
  %285 = vmatmul.mubr.bf16.gmra.mrb[0].mxu0 %v65
  %v286 = vpop.f32.mrb[0].mxu0
  %v287 = vadd.f32 0.0, %v286
  %v288 = vpop.f32.mrb[0].mxu0
  %v289 = vadd.f32 0.0, %v288
  %v290 = vpop.f32.mrb[0].mxu0
  %v291 = vadd.f32 0.0, %v290
  %v292 = vpop.f32.mrb[0].mxu0
  %v293 = vadd.f32 0.0, %v292
  %294 = vdwg.mxu0
  %295 = vmatprep.subr.bf16.mxu0 %v179
  %296 = vmatpush1.bf16.msra.mxu0 %v178
  %297 = vmatprep.subr.bf16.mxu0 %v183
  %298 = vmatpush1.bf16.msra.mxu0 %v182
  %299 = vmatprep.subr.bf16.mxu0 %v187
  %300 = vmatpush1.bf16.msra.mxu0 %v186
  %301 = vmatprep.subr.bf16.mxu0 %v191
  %302 = vmatpush1.bf16.msra.mxu0 %v190
  %303 = vmatprep.subr.bf16.mxu0 %v195
  %304 = vmatpush1.bf16.msra.mxu0 %v194
  %305 = vmatprep.subr.bf16.mxu0 %v199
  %306 = vmatpush1.bf16.msra.mxu0 %v198
  %307 = vmatprep.subr.bf16.mxu0 %v203
  %308 = vmatpush1.bf16.msra.mxu0 %v202
  %309 = vmatprep.subr.bf16.mxu0 %v207
  %310 = vmatpush1.bf16.msra.mxu0 %v206
  %311 = vmatprep.subr.bf16.mxu0 %v211
  %312 = vmatpush1.bf16.msra.mxu0 %v210
  %313 = vmatprep.subr.bf16.mxu0 0
  %314 = vmatpush1.bf16.msra.mxu0 0
  %315 = vmatprep.subr.bf16.mxu0 0
  %316 = vmatpush1.bf16.msra.mxu0 0
  %317 = vmatprep.subr.bf16.mxu0 0
  %318 = vmatpush1.bf16.msra.mxu0 0
  %319 = vmatprep.subr.bf16.mxu0 0
  %320 = vmatpush1.bf16.msra.mxu0 0
  %321 = vmatprep.subr.bf16.mxu0 0
  %322 = vmatpush1.bf16.msra.mxu0 0
  %323 = vmatprep.subr.bf16.mxu0 0
  %324 = vmatpush1.bf16.msra.mxu0 0
  %325 = vmatprep.subr.bf16.mxu0 0
  %326 = vmatpush1.bf16.msra.mxu0 0
  %327 = vmatprep.mubr.bf16.mxu0 %v250
  %328 = vmatmul.mubr.bf16.gmra.mrb[0].mxu0 %v65
  %v329 = vpop.f32.mrb[0].mxu0
  %v330 = vadd.f32 0.0, %v329
  %v331 = vpop.f32.mrb[0].mxu0
  %v332 = vadd.f32 0.0, %v331
  %v333 = vpop.f32.mrb[0].mxu0
  %v334 = vadd.f32 0.0, %v333
  %v335 = vpop.f32.mrb[0].mxu0
  %v336 = vadd.f32 0.0, %v335
  %337 = vdwg.mxu0
  %v338 = vld [vmem:[%s2] sm:$0xff]
  %v339 = vld [vmem:[%s2 + $0x8] sm:$0xff]
  %341 = vset.pattern.permute.xlu0 0
  %342 = vperm.xlu0 %341, %v338
  %v343 = vpop.permute.xlu0 %342
  %346 = vset.pattern.permute.xlu0 0
  %347 = vperm.xlu0 %346, %v339
  %v348 = vpop.permute.xlu0 %347
  %v350 = vmul.f32 %v287, %v343
  %v351 = vmul.f32 %v289, %v343
  %v352 = vmul.f32 %v330, %v343
  %v353 = vmul.f32 %v332, %v343
  %v354 = vmul.f32 %v291, %v348
  %v355 = vmul.f32 %v293, %v348
  %v356 = vmul.f32 %v334, %v348
  %v357 = vmul.f32 %v336, %v348
  %v358 = vld [vmem:[%s3] sm:$0xff]
  %v359 = vld [vmem:[%s3 + $0x8] sm:$0xff]
  %361 = vset.pattern.permute.xlu0 0
  %362 = vperm.xlu0 %361, %v358
  %v363 = vpop.permute.xlu0 %362
  %366 = vset.pattern.permute.xlu0 0
  %367 = vperm.xlu0 %366, %v359
  %v368 = vpop.permute.xlu0 %367
  %v370 = vadd.f32 %v350, %v363
  %v371 = vadd.f32 %v351, %v363
  %v372 = vadd.f32 %v352, %v363
  %v373 = vadd.f32 %v353, %v363
  %v374 = vadd.f32 %v354, %v368
  %v375 = vadd.f32 %v355, %v368
  %v376 = vadd.f32 %v356, %v368
  %v377 = vadd.f32 %v357, %v368
  %v378 = vld [vmem:[%s4] sm:$0xff]
  %v379 = vld [vmem:[%s4 + $0x8] sm:$0xff]
  %v380 = vld [vmem:[%s4 + $0x10] sm:$0xff]
  %v381 = vld [vmem:[%s4 + $0x18] sm:$0xff]
  %v382 = vunpack.c.l.bf16 %v378
  %v383 = vunpack.c.h.bf16 %v378
  %v384 = vunpack.c.l.bf16 %v379
  %v385 = vunpack.c.h.bf16 %v379
  %v386 = vunpack.c.l.bf16 %v380
  %v387 = vunpack.c.h.bf16 %v380
  %v388 = vunpack.c.l.bf16 %v381
  %v389 = vunpack.c.h.bf16 %v381
  %v390 = vadd.f32 %v370, %v382
  %v391 = vadd.f32 %v371, %v383
  %v392 = vadd.f32 %v372, %v384
  %v393 = vadd.f32 %v373, %v385
  %v394 = vadd.f32 %v374, %v386
  %v395 = vadd.f32 %v375, %v387
  %v396 = vadd.f32 %v376, %v388
  %v397 = vadd.f32 %v377, %v389
  %v398 = vmax.f32 %v390, 0.0
  %v399 = vmax.f32 %v391, 0.0
  %v400 = vmax.f32 %v392, 0.0
  %v401 = vmax.f32 %v393, 0.0
  %v402 = vmax.f32 %v394, 0.0
  %v403 = vmax.f32 %v395, 0.0
  %v404 = vmax.f32 %v396, 0.0
  %v405 = vmax.f32 %v397, 0.0
  %v406 = vpack.c.bf16 %v402, %v398
  %v407 = vpack.c.bf16 %v403, %v399
  %v408 = vpack.c.bf16 %v404, %v400
  %v409 = vpack.c.bf16 %v405, %v401
  %v414 = vunpack.c.l.b16 %v406
  %v415 = vunpack.c.l.b16 %v407
  %v416 = vunpack.c.l.b16 %v408
  %v417 = vunpack.c.l.b16 %v409
  %v418 = vunpack.c.h.b16 %v406
  %v419 = vunpack.c.h.b16 %v407
  %v420 = vunpack.c.h.b16 %v408
  %v421 = vunpack.c.h.b16 %v409
  %v422 = vpack.c.b16 %v415, %v414
  %v423 = vpack.c.b16 %v417, %v416
  %v424 = vpack.c.b16 %v419, %v418
  %v425 = vpack.c.b16 %v421, %v420
  %430 = vst [vmem:[%s5] sm:$0xff] %v422
  %431 = vst [vmem:[%s5 + $0x8] sm:$0xff] %v423
  %432 = vst [vmem:[%s5 + $0x10] sm:$0xff] %v424
  %433 = vst [vmem:[%s5 + $0x18] sm:$0xff] %v425
  // Predicated region
  $region22: #{_lambda_.12} parent=0 // pred_check
    _
  $region23: #{_lambda_.12} parent=0 // pred_check_branch
    %435 = sbr.rel (0) target = $region25
  $region24: #{_lambda_.12} parent=0 // pred_region
    _
  $region25: #{_lambda_.12} parent=0 // pred_fallthru
    _
  // Predicated region
  $region26: #{_lambda_.12} parent=0 // pred_check
    _
  $region27: #{_lambda_.12} parent=0 // pred_check_branch
    %437 = sbr.rel (0) target = $region29
  $region28: #{_lambda_.12} parent=0 // pred_region
    _
  $region29: #{_lambda_.12} parent=0 // pred_fallthru
    _

// kernel: _lambda_.13
$region0: #{_lambda_.13}
  #allocation0 [shape = 'u32[]', space=smem, size = 0x4, offset = 0x4, fixed_abs, tag = 'smem constant byte address 0x4 - core index']
  #allocation1 [shape = 'u32[144,128]{1,0:T(1,128)}', space=vmem, size = 0x12000, scoped, tag = 'internal scratch']
  %s0 = inlined_call_operand.vmem [shape: bf16[32,144], index: 0, kind: input, shape index: {}]
  %s1 = inlined_call_operand.vmem [shape: bf16[144,128], index: 1, kind: input, shape index: {}]
  %s2 = inlined_call_operand.vmem [shape: f32[32,1], index: 2, kind: input, shape index: {}]
  %s3 = inlined_call_operand.vmem [shape: f32[32,1], index: 3, kind: input, shape index: {}]
  %s4 = inlined_call_operand.vmem [shape: bf16[32,128], index: 4, kind: output, shape index: {}]
  %s5 = sld [smem:[#allocation0]]
  $region26: #{_lambda_.13} parent=0
    _
  %s7 = ssub.s32 1, %s5
  %s8 = scalar_select 0, %s7, %s5
  // Predicated region
  $region2: #{_lambda_.13} parent=0 // pred_check
    _
  $region3: #{_lambda_.13} parent=0 // pred_check_branch
    %10 = sbr.rel (0) target = $region5
  $region4: #{_lambda_.13} parent=0 // pred_region
    _
  $region5: #{_lambda_.13} parent=0 // pred_fallthru
    _
  // Predicated region
  $region6: #{_lambda_.13} parent=0 // pred_check
    _
  $region7: #{_lambda_.13} parent=0 // pred_check_branch
    %12 = sbr.rel (0) target = $region9
  $region8: #{_lambda_.13} parent=0 // pred_region
    _
  $region9: #{_lambda_.13} parent=0 // pred_fallthru
    _
  // Predicated region
  $region10: #{_lambda_.13} parent=0 // pred_check
    _
  $region11: #{_lambda_.13} parent=0 // pred_check_branch
    %14 = sbr.rel (0) target = $region13
  $region12: #{_lambda_.13} parent=0 // pred_region
    _
  $region13: #{_lambda_.13} parent=0 // pred_fallthru
    _
  // Predicated region
  $region14: #{_lambda_.13} parent=0 // pred_check
    _
  $region15: #{_lambda_.13} parent=0 // pred_check_branch
    %16 = sbr.rel (0) target = $region17
  $region16: #{_lambda_.13} parent=0 // pred_region
    _
  $region17: #{_lambda_.13} parent=0 // pred_fallthru
    _
  %v18 = vld [vmem:[%s0] sm:$0xff]
  %v19 = vld [vmem:[%s0 + $0x8] sm:$0xff]
  %v20 = vld [vmem:[%s0 + $0x10] sm:$0xff]
  %v21 = vld [vmem:[%s0 + $0x18] sm:$0xff]
  %v22 = vld [vmem:[%s1] sm:$0xf]
  %v23 = vld [vmem:[%s1 + $0x4] sm:$0xf]
  %v24 = vld [vmem:[%s1 + $0x8] sm:$0xf]
  %v25 = vld [vmem:[%s1 + $0xc] sm:$0xf]
  %v26 = vld [vmem:[%s1 + $0x10] sm:$0xf]
  %v27 = vld [vmem:[%s1 + $0x14] sm:$0xf]
  %v28 = vld [vmem:[%s1 + $0x18] sm:$0xf]
  %v29 = vld [vmem:[%s1 + $0x1c] sm:$0xf]
  %v30 = vld [vmem:[%s1 + $0x20] sm:$0xf]
  %v31 = vld [vmem:[%s1 + $0x24] sm:$0xf]
  %v32 = vld [vmem:[%s1 + $0x28] sm:$0xf]
  %v33 = vld [vmem:[%s1 + $0x2c] sm:$0xf]
  %v34 = vld [vmem:[%s1 + $0x30] sm:$0xf]
  %v35 = vld [vmem:[%s1 + $0x34] sm:$0xf]
  %v36 = vld [vmem:[%s1 + $0x38] sm:$0xf]
  %v37 = vld [vmem:[%s1 + $0x3c] sm:$0xf]
  %v38 = vld [vmem:[%s1 + $0x40] sm:$0xf]
  %v39 = vld [vmem:[%s1 + $0x44] sm:$0xf]
  %v44 = vunpack.c.l.b16 %v18
  %v45 = vunpack.c.h.b16 %v18
  %v46 = vunpack.c.l.b16 %v19
  %v47 = vunpack.c.h.b16 %v19
  %v48 = vunpack.c.l.b16 %v20
  %v49 = vunpack.c.h.b16 %v20
  %v50 = vunpack.c.l.b16 %v21
  %v51 = vunpack.c.h.b16 %v21
  %v52 = vpack.c.b16 %v46, %v44
  %v53 = vpack.c.b16 %v47, %v45
  %v54 = vpack.c.b16 %v50, %v48
  %v55 = vpack.c.b16 %v51, %v49
  %v76 = vunpack.c.l.b16 %v22
  %v77 = vunpack.c.l.b16 %v23
  %v78 = vunpack.c.l.b16 %v24
  %v79 = vunpack.c.l.b16 %v25
  %v80 = vunpack.c.l.b16 %v26
  %v81 = vunpack.c.l.b16 %v27
  %v82 = vunpack.c.l.b16 %v28
  %v83 = vunpack.c.l.b16 %v29
  %v84 = vunpack.c.l.b16 %v30
  %v85 = vunpack.c.l.b16 %v31
  %v86 = vunpack.c.l.b16 %v32
  %v87 = vunpack.c.l.b16 %v33
  %v88 = vunpack.c.l.b16 %v34
  %v89 = vunpack.c.l.b16 %v35
  %v90 = vunpack.c.l.b16 %v36
  %v91 = vunpack.c.l.b16 %v37
  %v92 = vunpack.c.l.b16 %v38
  %v93 = vunpack.c.l.b16 %v39
  %v94 = vpack.c.b16 %v77, %v76
  %v95 = vpack.c.b16 %v79, %v78
  %v96 = vpack.c.b16 %v81, %v80
  %v97 = vpack.c.b16 %v83, %v82
  %v98 = vpack.c.b16 %v85, %v84
  %v99 = vpack.c.b16 %v87, %v86
  %v100 = vpack.c.b16 %v89, %v88
  %v101 = vpack.c.b16 %v91, %v90
  %v102 = vpack.c.b16 %v93, %v92
  %vm112 = vcmask 130048
  %v114 = vsel %vm112, %v53, 0
  %v117 = vsel %vm112, %v55, 0
  %119 = vmatprep.subr.bf16.mxu0 0
  %120 = vmatpush1.bf16.msra.mxu0 %v94
  %121 = vmatprep.subr.bf16.mxu0 0
  %122 = vmatpush1.bf16.msra.mxu0 %v95
  %123 = vmatprep.subr.bf16.mxu0 0
  %124 = vmatpush1.bf16.msra.mxu0 %v96
  %125 = vmatprep.subr.bf16.mxu0 0
  %126 = vmatpush1.bf16.msra.mxu0 %v97
  %127 = vmatprep.subr.bf16.mxu0 0
  %128 = vmatpush1.bf16.msra.mxu0 %v98
  %129 = vmatprep.subr.bf16.mxu0 0
  %130 = vmatpush1.bf16.msra.mxu0 %v99
  %131 = vmatprep.subr.bf16.mxu0 0
  %132 = vmatpush1.bf16.msra.mxu0 %v100
  %133 = vmatprep.subr.bf16.mxu0 0
  %134 = vmatpush1.bf16.msra.mxu0 %v101
  %135 = vmatprep.subr.bf16.mxu0 0
  %136 = vmatpush1.bf16.msra.mxu0 %v102
  %137 = vmatprep.subr.bf16.mxu0 0
  %138 = vmatpush1.bf16.msra.mxu0 0
  %139 = vmatprep.subr.bf16.mxu0 0
  %140 = vmatpush1.bf16.msra.mxu0 0
  %141 = vmatprep.subr.bf16.mxu0 0
  %142 = vmatpush1.bf16.msra.mxu0 0
  %143 = vmatprep.subr.bf16.mxu0 0
  %144 = vmatpush1.bf16.msra.mxu0 0
  %145 = vmatprep.subr.bf16.mxu0 0
  %146 = vmatpush1.bf16.msra.mxu0 0
  %147 = vmatprep.subr.bf16.mxu0 0
  %148 = vmatpush1.bf16.msra.mxu0 0
  %149 = vmatprep.subr.bf16.mxu0 0
  %150 = vmatpush1.bf16.msra.mxu0 0
  %151 = vmatprep.mubr.bf16.mxu0 %v114
  %152 = vmatmul.mubr.bf16.gmra.mrb[0].mxu0 %v52
  %v153 = vpop.f32.mrb[0].mxu0
  %v154 = vadd.f32 0.0, %v153
  %v155 = vpop.f32.mrb[0].mxu0
  %v156 = vpop.f32.mrb[0].mxu0
  %v157 = vadd.f32 0.0, %v156
  %v158 = vpop.f32.mrb[0].mxu0
  %159 = vmatprep.mubr.bf16.mxu0 %v117
  %160 = vmatmul.mubr.bf16.gmra.mrb[0].mxu0 %v54
  %v161 = vpop.f32.mrb[0].mxu0
  %v162 = vadd.f32 0.0, %v161
  %v163 = vpop.f32.mrb[0].mxu0
  %v164 = vpop.f32.mrb[0].mxu0
  %v165 = vadd.f32 0.0, %v164
  %v166 = vpop.f32.mrb[0].mxu0
  %167 = vdwg.mxu0
  %v168 = vld [vmem:[%s2] sm:$0xff]
  %v169 = vld [vmem:[%s2 + $0x8] sm:$0xff]
  %v170 = vld [vmem:[%s2 + $0x10] sm:$0xff]
  %v171 = vld [vmem:[%s2 + $0x18] sm:$0xff]
  %173 = vset.pattern.permute.xlu0 0
  %174 = vperm.xlu0 %173, %v168
  %v175 = vpop.permute.xlu0 %174
  %178 = vset.pattern.permute.xlu0 0
  %179 = vperm.xlu0 %178, %v169
  %v180 = vpop.permute.xlu0 %179
  %183 = vset.pattern.permute.xlu0 0
  %184 = vperm.xlu0 %183, %v170
  %v185 = vpop.permute.xlu0 %184
  %188 = vset.pattern.permute.xlu0 0
  %189 = vperm.xlu0 %188, %v171
  %v190 = vpop.permute.xlu0 %189
  %v192 = vmul.f32 %v154, %v175
  %v193 = vmul.f32 %v157, %v180
  %v194 = vmul.f32 %v162, %v185
  %v195 = vmul.f32 %v165, %v190
  %v196 = vld [vmem:[%s3] sm:$0xff]
  %v197 = vld [vmem:[%s3 + $0x8] sm:$0xff]
  %v198 = vld [vmem:[%s3 + $0x10] sm:$0xff]
  %v199 = vld [vmem:[%s3 + $0x18] sm:$0xff]
  %201 = vset.pattern.permute.xlu0 0
  %202 = vperm.xlu0 %201, %v196
  %v203 = vpop.permute.xlu0 %202
  %206 = vset.pattern.permute.xlu0 0
  %207 = vperm.xlu0 %206, %v197
  %v208 = vpop.permute.xlu0 %207
  %211 = vset.pattern.permute.xlu0 0
  %212 = vperm.xlu0 %211, %v198
  %v213 = vpop.permute.xlu0 %212
  %216 = vset.pattern.permute.xlu0 0
  %217 = vperm.xlu0 %216, %v199
  %v218 = vpop.permute.xlu0 %217
  %v220 = vadd.f32 %v192, %v203
  %v221 = vadd.f32 %v193, %v208
  %v222 = vadd.f32 %v194, %v213
  %v223 = vadd.f32 %v195, %v218
  %v224 = vmax.f32 %v220, 0.0
  %v225 = vmax.f32 %v221, 0.0
  %v226 = vmax.f32 %v222, 0.0
  %v227 = vmax.f32 %v223, 0.0
  %v228 = vpack.c.bf16 %v225, %v224
  %v229 = vpack.c.bf16 %v227, %v226
  %v232 = vunpack.c.l.b16 %v228
  %v233 = vunpack.c.h.b16 %v228
  %v234 = vunpack.c.l.b16 %v229
  %v235 = vunpack.c.h.b16 %v229
  %v236 = vpack.c.b16 %v232, %v232
  %v237 = vpack.c.b16 %v233, %v233
  %v238 = vpack.c.b16 %v234, %v234
  %v239 = vpack.c.b16 %v235, %v235
  %244 = vst [vmem:[%s4] sm:$0xf] %v236
  %245 = vst [vmem:[%s4 + $0x4] sm:$0xf] %v237
  %246 = vst [vmem:[%s4 + $0x8] sm:$0xf] %v238
  %247 = vst [vmem:[%s4 + $0xc] sm:$0xf] %v239
  // Predicated region
  $region18: #{_lambda_.13} parent=0 // pred_check
    _
  $region19: #{_lambda_.13} parent=0 // pred_check_branch
    %249 = sbr.rel (0) target = $region21
  $region20: #{_lambda_.13} parent=0 // pred_region
    _
  $region21: #{_lambda_.13} parent=0 // pred_fallthru
    _
  // Predicated region
  $region22: #{_lambda_.13} parent=0 // pred_check
    _
  $region23: #{_lambda_.13} parent=0 // pred_check_branch
    %251 = sbr.rel (0) target = $region25
  $region24: #{_lambda_.13} parent=0 // pred_region
    _
  $region25: #{_lambda_.13} parent=0 // pred_fallthru
    _

// kernel: _lambda_.14
$region0: #{_lambda_.14}
  #allocation0 [shape = 'u32[]', space=smem, size = 0x4, offset = 0x4, fixed_abs, tag = 'smem constant byte address 0x4 - core index']
  #allocation1 [shape = 'u32[144,128]{1,0:T(1,128)}', space=vmem, size = 0x12000, scoped, tag = 'internal scratch']
  %s0 = inlined_call_operand.vmem [shape: bf16[32,16], index: 0, kind: input, shape index: {}]
  %s1 = inlined_call_operand.vmem [shape: bf16[16,128], index: 1, kind: input, shape index: {}]
  %s2 = inlined_call_operand.vmem [shape: f32[32,1], index: 2, kind: input, shape index: {}]
  %s3 = inlined_call_operand.vmem [shape: f32[32,1], index: 3, kind: input, shape index: {}]
  %s4 = inlined_call_operand.vmem [shape: bf16[32,128], index: 4, kind: output, shape index: {}]
  %s5 = sld [smem:[#allocation0]]
  $region26: #{_lambda_.14} parent=0
    _
  %s7 = ssub.s32 1, %s5
  %s8 = scalar_select 0, %s7, %s5
  // Predicated region
  $region2: #{_lambda_.14} parent=0 // pred_check
    _
  $region3: #{_lambda_.14} parent=0 // pred_check_branch
    %10 = sbr.rel (0) target = $region5
  $region4: #{_lambda_.14} parent=0 // pred_region
    _
  $region5: #{_lambda_.14} parent=0 // pred_fallthru
    _
  // Predicated region
  $region6: #{_lambda_.14} parent=0 // pred_check
    _
  $region7: #{_lambda_.14} parent=0 // pred_check_branch
    %12 = sbr.rel (0) target = $region9
  $region8: #{_lambda_.14} parent=0 // pred_region
    _
  $region9: #{_lambda_.14} parent=0 // pred_fallthru
    _
  // Predicated region
  $region10: #{_lambda_.14} parent=0 // pred_check
    _
  $region11: #{_lambda_.14} parent=0 // pred_check_branch
    %14 = sbr.rel (0) target = $region13
  $region12: #{_lambda_.14} parent=0 // pred_region
    _
  $region13: #{_lambda_.14} parent=0 // pred_fallthru
    _
  // Predicated region
  $region14: #{_lambda_.14} parent=0 // pred_check
    _
  $region15: #{_lambda_.14} parent=0 // pred_check_branch
    %16 = sbr.rel (0) target = $region17
  $region16: #{_lambda_.14} parent=0 // pred_region
    _
  $region17: #{_lambda_.14} parent=0 // pred_fallthru
    _
  %v18 = vld [vmem:[%s0] sm:$0xf]
  %v19 = vld [vmem:[%s0 + $0x4] sm:$0xf]
  %v20 = vld [vmem:[%s0 + $0x8] sm:$0xf]
  %v21 = vld [vmem:[%s0 + $0xc] sm:$0xf]
  %v22 = vld [vmem:[%s1] sm:$0xf]
  %v23 = vld [vmem:[%s1 + $0x4] sm:$0xf]
  %v28 = vunpack.c.l.b16 %v18
  %v29 = vunpack.c.l.b16 %v19
  %v30 = vunpack.c.l.b16 %v20
  %v31 = vunpack.c.l.b16 %v21
  %v32 = vpack.c.b16 %v29, %v28
  %v33 = vpack.c.b16 %v31, %v30
  %v36 = vunpack.c.l.b16 %v22
  %v37 = vunpack.c.l.b16 %v23
  %v38 = vpack.c.b16 %v37, %v36
  %vm40 = vcmask 130048
  %v42 = vsel %vm40, %v32, 0
  %v45 = vsel %vm40, %v33, 0
  %47 = vmatprep.subr.bf16.mxu0 0
  %48 = vmatpush1.bf16.msra.mxu0 %v38
  %49 = vmatprep.subr.bf16.mxu0 0
  %50 = vmatpush1.bf16.msra.mxu0 0
  %51 = vmatprep.subr.bf16.mxu0 0
  %52 = vmatpush1.bf16.msra.mxu0 0
  %53 = vmatprep.subr.bf16.mxu0 0
  %54 = vmatpush1.bf16.msra.mxu0 0
  %55 = vmatprep.subr.bf16.mxu0 0
  %56 = vmatpush1.bf16.msra.mxu0 0
  %57 = vmatprep.subr.bf16.mxu0 0
  %58 = vmatpush1.bf16.msra.mxu0 0
  %59 = vmatprep.subr.bf16.mxu0 0
  %60 = vmatpush1.bf16.msra.mxu0 0
  %61 = vmatprep.subr.bf16.mxu0 0
  %62 = vmatpush1.bf16.msra.mxu0 0
  %63 = vmatprep.subr.bf16.mxu0 0
  %64 = vmatpush1.bf16.msra.mxu0 0
  %65 = vmatprep.subr.bf16.mxu0 0
  %66 = vmatpush1.bf16.msra.mxu0 0
  %67 = vmatprep.subr.bf16.mxu0 0
  %68 = vmatpush1.bf16.msra.mxu0 0
  %69 = vmatprep.subr.bf16.mxu0 0
  %70 = vmatpush1.bf16.msra.mxu0 0
  %71 = vmatprep.subr.bf16.mxu0 0
  %72 = vmatpush1.bf16.msra.mxu0 0
  %73 = vmatprep.subr.bf16.mxu0 0
  %74 = vmatpush1.bf16.msra.mxu0 0
  %75 = vmatprep.subr.bf16.mxu0 0
  %76 = vmatpush1.bf16.msra.mxu0 0
  %77 = vmatprep.subr.bf16.mxu0 0
  %78 = vmatpush1.bf16.msra.mxu0 0
  %79 = vmatprep.mubr.bf16.mxu0 0
  %80 = vmatmul.mubr.bf16.gmra.mrb[0].mxu0 %v42
  %v81 = vpop.f32.mrb[0].mxu0
  %v82 = vadd.f32 0.0, %v81
  %v83 = vpop.f32.mrb[0].mxu0
  %v84 = vpop.f32.mrb[0].mxu0
  %v85 = vadd.f32 0.0, %v84
  %v86 = vpop.f32.mrb[0].mxu0
  %87 = vmatprep.mubr.bf16.mxu0 0
  %88 = vmatmul.mubr.bf16.gmra.mrb[0].mxu0 %v45
  %v89 = vpop.f32.mrb[0].mxu0
  %v90 = vadd.f32 0.0, %v89
  %v91 = vpop.f32.mrb[0].mxu0
  %v92 = vpop.f32.mrb[0].mxu0
  %v93 = vadd.f32 0.0, %v92
  %v94 = vpop.f32.mrb[0].mxu0
  %95 = vdwg.mxu0
  %v96 = vld [vmem:[%s2] sm:$0xff]
  %v97 = vld [vmem:[%s2 + $0x8] sm:$0xff]
  %v98 = vld [vmem:[%s2 + $0x10] sm:$0xff]
  %v99 = vld [vmem:[%s2 + $0x18] sm:$0xff]
  %101 = vset.pattern.permute.xlu0 0
  %102 = vperm.xlu0 %101, %v96
  %v103 = vpop.permute.xlu0 %102
  %106 = vset.pattern.permute.xlu0 0
  %107 = vperm.xlu0 %106, %v97
  %v108 = vpop.permute.xlu0 %107
  %111 = vset.pattern.permute.xlu0 0
  %112 = vperm.xlu0 %111, %v98
  %v113 = vpop.permute.xlu0 %112
  %116 = vset.pattern.permute.xlu0 0
  %117 = vperm.xlu0 %116, %v99
  %v118 = vpop.permute.xlu0 %117
  %v120 = vmul.f32 %v82, %v103
  %v121 = vmul.f32 %v85, %v108
  %v122 = vmul.f32 %v90, %v113
  %v123 = vmul.f32 %v93, %v118
  %v124 = vld [vmem:[%s3] sm:$0xff]
  %v125 = vld [vmem:[%s3 + $0x8] sm:$0xff]
  %v126 = vld [vmem:[%s3 + $0x10] sm:$0xff]
  %v127 = vld [vmem:[%s3 + $0x18] sm:$0xff]
  %129 = vset.pattern.permute.xlu0 0
  %130 = vperm.xlu0 %129, %v124
  %v131 = vpop.permute.xlu0 %130
  %134 = vset.pattern.permute.xlu0 0
  %135 = vperm.xlu0 %134, %v125
  %v136 = vpop.permute.xlu0 %135
  %139 = vset.pattern.permute.xlu0 0
  %140 = vperm.xlu0 %139, %v126
  %v141 = vpop.permute.xlu0 %140
  %144 = vset.pattern.permute.xlu0 0
  %145 = vperm.xlu0 %144, %v127
  %v146 = vpop.permute.xlu0 %145
  %v148 = vadd.f32 %v120, %v131
  %v149 = vadd.f32 %v121, %v136
  %v150 = vadd.f32 %v122, %v141
  %v151 = vadd.f32 %v123, %v146
  %v152 = vpack.c.bf16 %v149, %v148
  %v153 = vpack.c.bf16 %v151, %v150
  %v156 = vunpack.c.l.b16 %v152
  %v157 = vunpack.c.h.b16 %v152
  %v158 = vunpack.c.l.b16 %v153
  %v159 = vunpack.c.h.b16 %v153
  %v160 = vpack.c.b16 %v156, %v156
  %v161 = vpack.c.b16 %v157, %v157
  %v162 = vpack.c.b16 %v158, %v158
  %v163 = vpack.c.b16 %v159, %v159
  %168 = vst [vmem:[%s4] sm:$0xf] %v160
  %169 = vst [vmem:[%s4 + $0x4] sm:$0xf] %v161
  %170 = vst [vmem:[%s4 + $0x8] sm:$0xf] %v162
  %171 = vst [vmem:[%s4 + $0xc] sm:$0xf] %v163
  // Predicated region
  $region18: #{_lambda_.14} parent=0 // pred_check
    _
  $region19: #{_lambda_.14} parent=0 // pred_check_branch
    %173 = sbr.rel (0) target = $region21
  $region20: #{_lambda_.14} parent=0 // pred_region
    _
  $region21: #{_lambda_.14} parent=0 // pred_fallthru
    _
  // Predicated region
  $region22: #{_lambda_.14} parent=0 // pred_check
    _
  $region23: #{_lambda_.14} parent=0 // pred_check_branch
    %175 = sbr.rel (0) target = $region25
  $region24: #{_lambda_.14} parent=0 // pred_region
    _
  $region25: #{_lambda_.14} parent=0 // pred_fallthru
    _

// kernel: _lambda_.15
$region0: #{_lambda_.15}
  #allocation0 [shape = 'u32[]', space=smem, size = 0x4, offset = 0x4, fixed_abs, tag = 'smem constant byte address 0x4 - core index']
  #allocation1 [shape = 'u32[144,128]{1,0:T(1,128)}', space=vmem, size = 0x12000, scoped, tag = 'internal scratch']
  %s0 = inlined_call_operand.vmem [shape: bf16[32,288], index: 0, kind: input, shape index: {}]
  %s1 = inlined_call_operand.vmem [shape: bf16[288,128], index: 1, kind: input, shape index: {}]
  %s2 = inlined_call_operand.vmem [shape: f32[32,1], index: 2, kind: input, shape index: {}]
  %s3 = inlined_call_operand.vmem [shape: f32[32,1], index: 3, kind: input, shape index: {}]
  %s4 = inlined_call_operand.vmem [shape: bf16[32,128], index: 4, kind: input, shape index: {}]
  %s5 = inlined_call_operand.vmem [shape: bf16[32,128], index: 5, kind: output, shape index: {}]
  %s6 = sld [smem:[#allocation0]]
  $region30: #{_lambda_.15} parent=0
    _
  %s8 = ssub.s32 1, %s6
  %s9 = scalar_select 0, %s8, %s6
  // Predicated region
  $region2: #{_lambda_.15} parent=0 // pred_check
    _
  $region3: #{_lambda_.15} parent=0 // pred_check_branch
    %11 = sbr.rel (0) target = $region5
  $region4: #{_lambda_.15} parent=0 // pred_region
    _
  $region5: #{_lambda_.15} parent=0 // pred_fallthru
    _
  // Predicated region
  $region6: #{_lambda_.15} parent=0 // pred_check
    _
  $region7: #{_lambda_.15} parent=0 // pred_check_branch
    %13 = sbr.rel (0) target = $region9
  $region8: #{_lambda_.15} parent=0 // pred_region
    _
  $region9: #{_lambda_.15} parent=0 // pred_fallthru
    _
  // Predicated region
  $region10: #{_lambda_.15} parent=0 // pred_check
    _
  $region11: #{_lambda_.15} parent=0 // pred_check_branch
    %15 = sbr.rel (0) target = $region13
  $region12: #{_lambda_.15} parent=0 // pred_region
    _
  $region13: #{_lambda_.15} parent=0 // pred_fallthru
    _
  // Predicated region
  $region14: #{_lambda_.15} parent=0 // pred_check
    _
  $region15: #{_lambda_.15} parent=0 // pred_check_branch
    %17 = sbr.rel (0) target = $region17
  $region16: #{_lambda_.15} parent=0 // pred_region
    _
  $region17: #{_lambda_.15} parent=0 // pred_fallthru
    _
  // Predicated region
  $region18: #{_lambda_.15} parent=0 // pred_check
    _
  $region19: #{_lambda_.15} parent=0 // pred_check_branch
    %19 = sbr.rel (0) target = $region21
  $region20: #{_lambda_.15} parent=0 // pred_region
    _
  $region21: #{_lambda_.15} parent=0 // pred_fallthru
    _
  %v21 = vld [vmem:[%s0] sm:$0xff]
  %v22 = vld [vmem:[%s0 + $0x8] sm:$0xf]
  %v23 = vld [vmem:[%s0 + $0xc] sm:$0xff]
  %v24 = vld [vmem:[%s0 + $0x14] sm:$0xf]
  %v25 = vld [vmem:[%s0 + $0x18] sm:$0xff]
  %v26 = vld [vmem:[%s0 + $0x20] sm:$0xf]
  %v27 = vld [vmem:[%s0 + $0x24] sm:$0xff]
  %v28 = vld [vmem:[%s0 + $0x2c] sm:$0xf]
  %v29 = vld [vmem:[%s1] sm:$0xf]
  %v30 = vld [vmem:[%s1 + $0x4] sm:$0xf]
  %v31 = vld [vmem:[%s1 + $0x8] sm:$0xf]
  %v32 = vld [vmem:[%s1 + $0xc] sm:$0xf]
  %v33 = vld [vmem:[%s1 + $0x10] sm:$0xf]
  %v34 = vld [vmem:[%s1 + $0x14] sm:$0xf]
  %v35 = vld [vmem:[%s1 + $0x18] sm:$0xf]
  %v36 = vld [vmem:[%s1 + $0x1c] sm:$0xf]
  %v37 = vld [vmem:[%s1 + $0x20] sm:$0xf]
  %v38 = vld [vmem:[%s1 + $0x24] sm:$0xf]
  %v39 = vld [vmem:[%s1 + $0x28] sm:$0xf]
  %v40 = vld [vmem:[%s1 + $0x2c] sm:$0xf]
  %v41 = vld [vmem:[%s1 + $0x30] sm:$0xf]
  %v42 = vld [vmem:[%s1 + $0x34] sm:$0xf]
  %v43 = vld [vmem:[%s1 + $0x38] sm:$0xf]
  %v44 = vld [vmem:[%s1 + $0x3c] sm:$0xf]
  %v45 = vld [vmem:[%s1 + $0x40] sm:$0xf]
  %v46 = vld [vmem:[%s1 + $0x44] sm:$0xf]
  %v47 = vld [vmem:[%s1 + $0x48] sm:$0xf]
  %v48 = vld [vmem:[%s1 + $0x4c] sm:$0xf]
  %v49 = vld [vmem:[%s1 + $0x50] sm:$0xf]
  %v50 = vld [vmem:[%s1 + $0x54] sm:$0xf]
  %v51 = vld [vmem:[%s1 + $0x58] sm:$0xf]
  %v52 = vld [vmem:[%s1 + $0x5c] sm:$0xf]
  %v53 = vld [vmem:[%s1 + $0x60] sm:$0xf]
  %v54 = vld [vmem:[%s1 + $0x64] sm:$0xf]
  %v55 = vld [vmem:[%s1 + $0x68] sm:$0xf]
  %v56 = vld [vmem:[%s1 + $0x6c] sm:$0xf]
  %v57 = vld [vmem:[%s1 + $0x70] sm:$0xf]
  %v58 = vld [vmem:[%s1 + $0x74] sm:$0xf]
  %v59 = vld [vmem:[%s1 + $0x78] sm:$0xf]
  %v60 = vld [vmem:[%s1 + $0x7c] sm:$0xf]
  %v61 = vld [vmem:[%s1 + $0x80] sm:$0xf]
  %v62 = vld [vmem:[%s1 + $0x84] sm:$0xf]
  %v63 = vld [vmem:[%s1 + $0x88] sm:$0xf]
  %v64 = vld [vmem:[%s1 + $0x8c] sm:$0xf]
  %v73 = vunpack.c.l.b16 %v21
  %v74 = vunpack.c.h.b16 %v21
  %v75 = vunpack.c.l.b16 %v22
  %v76 = vunpack.c.l.b16 %v23
  %v77 = vunpack.c.h.b16 %v23
  %v78 = vunpack.c.l.b16 %v24
  %v79 = vunpack.c.l.b16 %v25
  %v80 = vunpack.c.h.b16 %v25
  %v81 = vunpack.c.l.b16 %v26
  %v82 = vunpack.c.l.b16 %v27
  %v83 = vunpack.c.h.b16 %v27
  %v84 = vunpack.c.l.b16 %v28
  %v85 = vpack.c.b16 %v76, %v73
  %v86 = vpack.c.b16 %v77, %v74
  %v87 = vpack.c.b16 %v78, %v75
  %v88 = vpack.c.b16 %v82, %v79
  %v89 = vpack.c.b16 %v83, %v80
  %v90 = vpack.c.b16 %v84, %v81
  %v131 = vunpack.c.l.b16 %v29
  %v132 = vunpack.c.l.b16 %v30
  %v133 = vunpack.c.l.b16 %v31
  %v134 = vunpack.c.l.b16 %v32
  %v135 = vunpack.c.l.b16 %v33
  %v136 = vunpack.c.l.b16 %v34
  %v137 = vunpack.c.l.b16 %v35
  %v138 = vunpack.c.l.b16 %v36
  %v139 = vunpack.c.l.b16 %v37
  %v140 = vunpack.c.l.b16 %v38
  %v141 = vunpack.c.l.b16 %v39
  %v142 = vunpack.c.l.b16 %v40
  %v143 = vunpack.c.l.b16 %v41
  %v144 = vunpack.c.l.b16 %v42
  %v145 = vunpack.c.l.b16 %v43
  %v146 = vunpack.c.l.b16 %v44
  %v147 = vunpack.c.l.b16 %v45
  %v148 = vunpack.c.l.b16 %v46
  %v149 = vunpack.c.l.b16 %v47
  %v150 = vunpack.c.l.b16 %v48
  %v151 = vunpack.c.l.b16 %v49
  %v152 = vunpack.c.l.b16 %v50
  %v153 = vunpack.c.l.b16 %v51
  %v154 = vunpack.c.l.b16 %v52
  %v155 = vunpack.c.l.b16 %v53
  %v156 = vunpack.c.l.b16 %v54
  %v157 = vunpack.c.l.b16 %v55
  %v158 = vunpack.c.l.b16 %v56
  %v159 = vunpack.c.l.b16 %v57
  %v160 = vunpack.c.l.b16 %v58
  %v161 = vunpack.c.l.b16 %v59
  %v162 = vunpack.c.l.b16 %v60
  %v163 = vunpack.c.l.b16 %v61
  %v164 = vunpack.c.l.b16 %v62
  %v165 = vunpack.c.l.b16 %v63
  %v166 = vunpack.c.l.b16 %v64
  %v167 = vpack.c.b16 %v132, %v131
  %v168 = vpack.c.b16 %v134, %v133
  %v169 = vpack.c.b16 %v136, %v135
  %v170 = vpack.c.b16 %v138, %v137
  %v171 = vpack.c.b16 %v140, %v139
  %v172 = vpack.c.b16 %v142, %v141
  %v173 = vpack.c.b16 %v144, %v143
  %v174 = vpack.c.b16 %v146, %v145
  %v175 = vpack.c.b16 %v148, %v147
  %v176 = vpack.c.b16 %v150, %v149
  %v177 = vpack.c.b16 %v152, %v151
  %v178 = vpack.c.b16 %v154, %v153
  %v179 = vpack.c.b16 %v156, %v155
  %v180 = vpack.c.b16 %v158, %v157
  %v181 = vpack.c.b16 %v160, %v159
  %v182 = vpack.c.b16 %v162, %v161
  %v183 = vpack.c.b16 %v164, %v163
  %v184 = vpack.c.b16 %v166, %v165
  %vm203 = vcmask 261120
  %v205 = vsel %vm203, %v87, 0
  %v208 = vsel %vm203, %v90, 0
  %210 = vmatprep.subr.bf16.mxu0 0
  %211 = vmatpush1.bf16.msra.mxu0 %v167
  %212 = vmatprep.subr.bf16.mxu0 0
  %213 = vmatpush1.bf16.msra.mxu0 %v168
  %214 = vmatprep.subr.bf16.mxu0 0
  %215 = vmatpush1.bf16.msra.mxu0 %v169
  %216 = vmatprep.subr.bf16.mxu0 0
  %217 = vmatpush1.bf16.msra.mxu0 %v170
  %218 = vmatprep.subr.bf16.mxu0 0
  %219 = vmatpush1.bf16.msra.mxu0 %v171
  %220 = vmatprep.subr.bf16.mxu0 0
  %221 = vmatpush1.bf16.msra.mxu0 %v172
  %222 = vmatprep.subr.bf16.mxu0 0
  %223 = vmatpush1.bf16.msra.mxu0 %v173
  %224 = vmatprep.subr.bf16.mxu0 0
  %225 = vmatpush1.bf16.msra.mxu0 %v174
  %226 = vmatprep.subr.bf16.mxu0 0
  %227 = vmatpush1.bf16.msra.mxu0 %v175
  %228 = vmatprep.subr.bf16.mxu0 0
  %229 = vmatpush1.bf16.msra.mxu0 %v176
  %230 = vmatprep.subr.bf16.mxu0 0
  %231 = vmatpush1.bf16.msra.mxu0 %v177
  %232 = vmatprep.subr.bf16.mxu0 0
  %233 = vmatpush1.bf16.msra.mxu0 %v178
  %234 = vmatprep.subr.bf16.mxu0 0
  %235 = vmatpush1.bf16.msra.mxu0 %v179
  %236 = vmatprep.subr.bf16.mxu0 0
  %237 = vmatpush1.bf16.msra.mxu0 %v180
  %238 = vmatprep.subr.bf16.mxu0 0
  %239 = vmatpush1.bf16.msra.mxu0 %v181
  %240 = vmatprep.subr.bf16.mxu0 0
  %241 = vmatpush1.bf16.msra.mxu0 %v182
  %242 = vmatprep.mubr.bf16.mxu0 %v86
  %243 = vmatmul.mubr.bf16.gmra.mrb[0].mxu0 %v85
  %v244 = vpop.f32.mrb[0].mxu0
  %v245 = vadd.f32 0.0, %v244
  %v246 = vpop.f32.mrb[0].mxu0
  %v247 = vpop.f32.mrb[0].mxu0
  %v248 = vadd.f32 0.0, %v247
  %v249 = vpop.f32.mrb[0].mxu0
  %250 = vmatprep.mubr.bf16.mxu0 %v89
  %251 = vmatmul.mubr.bf16.gmra.mrb[0].mxu0 %v88
  %v252 = vpop.f32.mrb[0].mxu0
  %v253 = vadd.f32 0.0, %v252
  %v254 = vpop.f32.mrb[0].mxu0
  %v255 = vpop.f32.mrb[0].mxu0
  %v256 = vadd.f32 0.0, %v255
  %v257 = vpop.f32.mrb[0].mxu0
  %258 = vdwg.mxu0
  %259 = vmatprep.subr.bf16.mxu0 0
  %260 = vmatpush1.bf16.msra.mxu0 %v183
  %261 = vmatprep.subr.bf16.mxu0 0
  %262 = vmatpush1.bf16.msra.mxu0 %v184
  %263 = vmatprep.subr.bf16.mxu0 0
  %264 = vmatpush1.bf16.msra.mxu0 0
  %265 = vmatprep.subr.bf16.mxu0 0
  %266 = vmatpush1.bf16.msra.mxu0 0
  %267 = vmatprep.subr.bf16.mxu0 0
  %268 = vmatpush1.bf16.msra.mxu0 0
  %269 = vmatprep.subr.bf16.mxu0 0
  %270 = vmatpush1.bf16.msra.mxu0 0
  %271 = vmatprep.subr.bf16.mxu0 0
  %272 = vmatpush1.bf16.msra.mxu0 0
  %273 = vmatprep.subr.bf16.mxu0 0
  %274 = vmatpush1.bf16.msra.mxu0 0
  %275 = vmatprep.subr.bf16.mxu0 0
  %276 = vmatpush1.bf16.msra.mxu0 0
  %277 = vmatprep.subr.bf16.mxu0 0
  %278 = vmatpush1.bf16.msra.mxu0 0
  %279 = vmatprep.subr.bf16.mxu0 0
  %280 = vmatpush1.bf16.msra.mxu0 0
  %281 = vmatprep.subr.bf16.mxu0 0
  %282 = vmatpush1.bf16.msra.mxu0 0
  %283 = vmatprep.subr.bf16.mxu0 0
  %284 = vmatpush1.bf16.msra.mxu0 0
  %285 = vmatprep.subr.bf16.mxu0 0
  %286 = vmatpush1.bf16.msra.mxu0 0
  %287 = vmatprep.subr.bf16.mxu0 0
  %288 = vmatpush1.bf16.msra.mxu0 0
  %289 = vmatprep.subr.bf16.mxu0 0
  %290 = vmatpush1.bf16.msra.mxu0 0
  %291 = vmatprep.mubr.bf16.mxu0 0
  %292 = vmatmul.mubr.bf16.gmra.mrb[0].mxu0 %v205
  %v293 = vpop.f32.mrb[0].mxu0
  %v294 = vadd.f32 %v245, %v293
  %v295 = vpop.f32.mrb[0].mxu0
  %v296 = vpop.f32.mrb[0].mxu0
  %v297 = vadd.f32 %v248, %v296
  %v298 = vpop.f32.mrb[0].mxu0
  %299 = vmatprep.mubr.bf16.mxu0 0
  %300 = vmatmul.mubr.bf16.gmra.mrb[0].mxu0 %v208
  %v301 = vpop.f32.mrb[0].mxu0
  %v302 = vadd.f32 %v253, %v301
  %v303 = vpop.f32.mrb[0].mxu0
  %v304 = vpop.f32.mrb[0].mxu0
  %v305 = vadd.f32 %v256, %v304
  %v306 = vpop.f32.mrb[0].mxu0
  %307 = vdwg.mxu0
  %v308 = vld [vmem:[%s2] sm:$0xff]
  %v309 = vld [vmem:[%s2 + $0x8] sm:$0xff]
  %v310 = vld [vmem:[%s2 + $0x10] sm:$0xff]
  %v311 = vld [vmem:[%s2 + $0x18] sm:$0xff]
  %313 = vset.pattern.permute.xlu0 0
  %314 = vperm.xlu0 %313, %v308
  %v315 = vpop.permute.xlu0 %314
  %318 = vset.pattern.permute.xlu0 0
  %319 = vperm.xlu0 %318, %v309
  %v320 = vpop.permute.xlu0 %319
  %323 = vset.pattern.permute.xlu0 0
  %324 = vperm.xlu0 %323, %v310
  %v325 = vpop.permute.xlu0 %324
  %328 = vset.pattern.permute.xlu0 0
  %329 = vperm.xlu0 %328, %v311
  %v330 = vpop.permute.xlu0 %329
  %v332 = vmul.f32 %v294, %v315
  %v333 = vmul.f32 %v297, %v320
  %v334 = vmul.f32 %v302, %v325
  %v335 = vmul.f32 %v305, %v330
  %v336 = vld [vmem:[%s3] sm:$0xff]
  %v337 = vld [vmem:[%s3 + $0x8] sm:$0xff]
  %v338 = vld [vmem:[%s3 + $0x10] sm:$0xff]
  %v339 = vld [vmem:[%s3 + $0x18] sm:$0xff]
  %341 = vset.pattern.permute.xlu0 0
  %342 = vperm.xlu0 %341, %v336
  %v343 = vpop.permute.xlu0 %342
  %346 = vset.pattern.permute.xlu0 0
  %347 = vperm.xlu0 %346, %v337
  %v348 = vpop.permute.xlu0 %347
  %351 = vset.pattern.permute.xlu0 0
  %352 = vperm.xlu0 %351, %v338
  %v353 = vpop.permute.xlu0 %352
  %356 = vset.pattern.permute.xlu0 0
  %357 = vperm.xlu0 %356, %v339
  %v358 = vpop.permute.xlu0 %357
  %v360 = vadd.f32 %v332, %v343
  %v361 = vadd.f32 %v333, %v348
  %v362 = vadd.f32 %v334, %v353
  %v363 = vadd.f32 %v335, %v358
  %v364 = vld [vmem:[%s4] sm:$0xf]
  %v365 = vld [vmem:[%s4 + $0x4] sm:$0xf]
  %v366 = vld [vmem:[%s4 + $0x8] sm:$0xf]
  %v367 = vld [vmem:[%s4 + $0xc] sm:$0xf]
  %v368 = vunpack.c.l.bf16 %v364
  %v369 = vunpack.c.l.bf16 %v365
  %v370 = vunpack.c.l.bf16 %v366
  %v371 = vunpack.c.l.bf16 %v367
  %v372 = vadd.f32 %v360, %v368
  %v373 = vadd.f32 %v361, %v369
  %v374 = vadd.f32 %v362, %v370
  %v375 = vadd.f32 %v363, %v371
  %v376 = vmax.f32 %v372, 0.0
  %v377 = vmax.f32 %v373, 0.0
  %v378 = vmax.f32 %v374, 0.0
  %v379 = vmax.f32 %v375, 0.0
  %v380 = vpack.c.bf16 %v377, %v376
  %v381 = vpack.c.bf16 %v379, %v378
  %v384 = vunpack.c.l.b16 %v380
  %v385 = vunpack.c.h.b16 %v380
  %v386 = vunpack.c.l.b16 %v381
  %v387 = vunpack.c.h.b16 %v381
  %v388 = vpack.c.b16 %v384, %v384
  %v389 = vpack.c.b16 %v385, %v385
  %v390 = vpack.c.b16 %v386, %v386
  %v391 = vpack.c.b16 %v387, %v387
  %396 = vst [vmem:[%s5] sm:$0xf] %v388
  %397 = vst [vmem:[%s5 + $0x4] sm:$0xf] %v389
  %398 = vst [vmem:[%s5 + $0x8] sm:$0xf] %v390
  %399 = vst [vmem:[%s5 + $0xc] sm:$0xf] %v391
  // Predicated region
  $region22: #{_lambda_.15} parent=0 // pred_check
    _
  $region23: #{_lambda_.15} parent=0 // pred_check_branch
    %401 = sbr.rel (0) target = $region25
  $region24: #{_lambda_.15} parent=0 // pred_region
    _
  $region25: #{_lambda_.15} parent=0 // pred_fallthru
    _
  // Predicated region
  $region26: #{_lambda_.15} parent=0 // pred_check
    _
  $region27: #{_lambda_.15} parent=0 // pred_check_branch
    %403 = sbr.rel (0) target = $region29
  $region28: #{_lambda_.15} parent=0 // pred_region
    _
  $region29: #{_lambda_.15} parent=0 // pred_fallthru
    _

// kernel: _lambda_.16
$region0: #{_lambda_.16}
  #allocation0 [shape = 'u32[]', space=smem, size = 0x4, offset = 0x4, fixed_abs, tag = 'smem constant byte address 0x4 - core index']
  #allocation1 [shape = 'u32[144,128]{1,0:T(1,128)}', space=vmem, size = 0x12000, scoped, tag = 'internal scratch']
  %s0 = inlined_call_operand.vmem [shape: bf16[64,288], index: 0, kind: input, shape index: {}]
  %s1 = inlined_call_operand.vmem [shape: bf16[288,32], index: 1, kind: input, shape index: {}]
  %s2 = inlined_call_operand.vmem [shape: f32[64,1], index: 2, kind: input, shape index: {}]
  %s3 = inlined_call_operand.vmem [shape: f32[64,1], index: 3, kind: input, shape index: {}]
  %s4 = inlined_call_operand.vmem [shape: bf16[64,32], index: 4, kind: output, shape index: {}]
  %s5 = sld [smem:[#allocation0]]
  $region26: #{_lambda_.16} parent=0
    _
  %s7 = ssub.s32 1, %s5
  %s8 = scalar_select 0, %s7, %s5
  // Predicated region
  $region2: #{_lambda_.16} parent=0 // pred_check
    _
  $region3: #{_lambda_.16} parent=0 // pred_check_branch
    %10 = sbr.rel (0) target = $region5
  $region4: #{_lambda_.16} parent=0 // pred_region
    _
  $region5: #{_lambda_.16} parent=0 // pred_fallthru
    _
  // Predicated region
  $region6: #{_lambda_.16} parent=0 // pred_check
    _
  $region7: #{_lambda_.16} parent=0 // pred_check_branch
    %12 = sbr.rel (0) target = $region9
  $region8: #{_lambda_.16} parent=0 // pred_region
    _
  $region9: #{_lambda_.16} parent=0 // pred_fallthru
    _
  // Predicated region
  $region10: #{_lambda_.16} parent=0 // pred_check
    _
  $region11: #{_lambda_.16} parent=0 // pred_check_branch
    %14 = sbr.rel (0) target = $region13
  $region12: #{_lambda_.16} parent=0 // pred_region
    _
  $region13: #{_lambda_.16} parent=0 // pred_fallthru
    _
  // Predicated region
  $region14: #{_lambda_.16} parent=0 // pred_check
    _
  $region15: #{_lambda_.16} parent=0 // pred_check_branch
    %16 = sbr.rel (0) target = $region17
  $region16: #{_lambda_.16} parent=0 // pred_region
    _
  $region17: #{_lambda_.16} parent=0 // pred_fallthru
    _
  %v18 = vld [vmem:[%s0] sm:$0xff]
  %v19 = vld [vmem:[%s0 + $0x8] sm:$0xf]
  %v20 = vld [vmem:[%s0 + $0xc] sm:$0xff]
  %v21 = vld [vmem:[%s0 + $0x14] sm:$0xf]
  %v22 = vld [vmem:[%s0 + $0x18] sm:$0xff]
  %v23 = vld [vmem:[%s0 + $0x20] sm:$0xf]
  %v24 = vld [vmem:[%s0 + $0x24] sm:$0xff]
  %v25 = vld [vmem:[%s0 + $0x2c] sm:$0xf]
  %v26 = vld [vmem:[%s0 + $0x30] sm:$0xff]
  %v27 = vld [vmem:[%s0 + $0x38] sm:$0xf]
  %v28 = vld [vmem:[%s0 + $0x3c] sm:$0xff]
  %v29 = vld [vmem:[%s0 + $0x44] sm:$0xf]
  %v30 = vld [vmem:[%s0 + $0x48] sm:$0xff]
  %v31 = vld [vmem:[%s0 + $0x50] sm:$0xf]
  %v32 = vld [vmem:[%s0 + $0x54] sm:$0xff]
  %v33 = vld [vmem:[%s0 + $0x5c] sm:$0xf]
  %v34 = vld [vmem:[%s1] sm:$0xf]
  %v35 = vld [vmem:[%s1 + $0x4] sm:$0xf]
  %v36 = vld [vmem:[%s1 + $0x8] sm:$0xf]
  %v37 = vld [vmem:[%s1 + $0xc] sm:$0xf]
  %v38 = vld [vmem:[%s1 + $0x10] sm:$0xf]
  %v39 = vld [vmem:[%s1 + $0x14] sm:$0xf]
  %v40 = vld [vmem:[%s1 + $0x18] sm:$0xf]
  %v41 = vld [vmem:[%s1 + $0x1c] sm:$0xf]
  %v42 = vld [vmem:[%s1 + $0x20] sm:$0xf]
  %v43 = vld [vmem:[%s1 + $0x24] sm:$0xf]
  %v44 = vld [vmem:[%s1 + $0x28] sm:$0xf]
  %v45 = vld [vmem:[%s1 + $0x2c] sm:$0xf]
  %v46 = vld [vmem:[%s1 + $0x30] sm:$0xf]
  %v47 = vld [vmem:[%s1 + $0x34] sm:$0xf]
  %v48 = vld [vmem:[%s1 + $0x38] sm:$0xf]
  %v49 = vld [vmem:[%s1 + $0x3c] sm:$0xf]
  %v50 = vld [vmem:[%s1 + $0x40] sm:$0xf]
  %v51 = vld [vmem:[%s1 + $0x44] sm:$0xf]
  %v52 = vld [vmem:[%s1 + $0x48] sm:$0xf]
  %v53 = vld [vmem:[%s1 + $0x4c] sm:$0xf]
  %v54 = vld [vmem:[%s1 + $0x50] sm:$0xf]
  %v55 = vld [vmem:[%s1 + $0x54] sm:$0xf]
  %v56 = vld [vmem:[%s1 + $0x58] sm:$0xf]
  %v57 = vld [vmem:[%s1 + $0x5c] sm:$0xf]
  %v58 = vld [vmem:[%s1 + $0x60] sm:$0xf]
  %v59 = vld [vmem:[%s1 + $0x64] sm:$0xf]
  %v60 = vld [vmem:[%s1 + $0x68] sm:$0xf]
  %v61 = vld [vmem:[%s1 + $0x6c] sm:$0xf]
  %v62 = vld [vmem:[%s1 + $0x70] sm:$0xf]
  %v63 = vld [vmem:[%s1 + $0x74] sm:$0xf]
  %v64 = vld [vmem:[%s1 + $0x78] sm:$0xf]
  %v65 = vld [vmem:[%s1 + $0x7c] sm:$0xf]
  %v66 = vld [vmem:[%s1 + $0x80] sm:$0xf]
  %v67 = vld [vmem:[%s1 + $0x84] sm:$0xf]
  %v68 = vld [vmem:[%s1 + $0x88] sm:$0xf]
  %v69 = vld [vmem:[%s1 + $0x8c] sm:$0xf]
  %v86 = vunpack.c.l.b16 %v18
  %v87 = vunpack.c.h.b16 %v18
  %v88 = vunpack.c.l.b16 %v19
  %v89 = vunpack.c.l.b16 %v20
  %v90 = vunpack.c.h.b16 %v20
  %v91 = vunpack.c.l.b16 %v21
  %v92 = vunpack.c.l.b16 %v22
  %v93 = vunpack.c.h.b16 %v22
  %v94 = vunpack.c.l.b16 %v23
  %v95 = vunpack.c.l.b16 %v24
  %v96 = vunpack.c.h.b16 %v24
  %v97 = vunpack.c.l.b16 %v25
  %v98 = vunpack.c.l.b16 %v26
  %v99 = vunpack.c.h.b16 %v26
  %v100 = vunpack.c.l.b16 %v27
  %v101 = vunpack.c.l.b16 %v28
  %v102 = vunpack.c.h.b16 %v28
  %v103 = vunpack.c.l.b16 %v29
  %v104 = vunpack.c.l.b16 %v30
  %v105 = vunpack.c.h.b16 %v30
  %v106 = vunpack.c.l.b16 %v31
  %v107 = vunpack.c.l.b16 %v32
  %v108 = vunpack.c.h.b16 %v32
  %v109 = vunpack.c.l.b16 %v33
  %v110 = vpack.c.b16 %v89, %v86
  %v111 = vpack.c.b16 %v90, %v87
  %v112 = vpack.c.b16 %v91, %v88
  %v113 = vpack.c.b16 %v95, %v92
  %v114 = vpack.c.b16 %v96, %v93
  %v115 = vpack.c.b16 %v97, %v94
  %v116 = vpack.c.b16 %v101, %v98
  %v117 = vpack.c.b16 %v102, %v99
  %v118 = vpack.c.b16 %v103, %v100
  %v119 = vpack.c.b16 %v107, %v104
  %v120 = vpack.c.b16 %v108, %v105
  %v121 = vpack.c.b16 %v109, %v106
  %v166 = vunpack.c.l.b16 %v34
  %v167 = vunpack.c.l.b16 %v35
  %v168 = vunpack.c.l.b16 %v36
  %v169 = vunpack.c.l.b16 %v37
  %v170 = vunpack.c.l.b16 %v38
  %v171 = vunpack.c.l.b16 %v39
  %v172 = vunpack.c.l.b16 %v40
  %v173 = vunpack.c.l.b16 %v41
  %v174 = vunpack.c.l.b16 %v42
  %v175 = vunpack.c.l.b16 %v43
  %v176 = vunpack.c.l.b16 %v44
  %v177 = vunpack.c.l.b16 %v45
  %v178 = vunpack.c.l.b16 %v46
  %v179 = vunpack.c.l.b16 %v47
  %v180 = vunpack.c.l.b16 %v48
  %v181 = vunpack.c.l.b16 %v49
  %v182 = vunpack.c.l.b16 %v50
  %v183 = vunpack.c.l.b16 %v51
  %v184 = vunpack.c.l.b16 %v52
  %v185 = vunpack.c.l.b16 %v53
  %v186 = vunpack.c.l.b16 %v54
  %v187 = vunpack.c.l.b16 %v55
  %v188 = vunpack.c.l.b16 %v56
  %v189 = vunpack.c.l.b16 %v57
  %v190 = vunpack.c.l.b16 %v58
  %v191 = vunpack.c.l.b16 %v59
  %v192 = vunpack.c.l.b16 %v60
  %v193 = vunpack.c.l.b16 %v61
  %v194 = vunpack.c.l.b16 %v62
  %v195 = vunpack.c.l.b16 %v63
  %v196 = vunpack.c.l.b16 %v64
  %v197 = vunpack.c.l.b16 %v65
  %v198 = vunpack.c.l.b16 %v66
  %v199 = vunpack.c.l.b16 %v67
  %v200 = vunpack.c.l.b16 %v68
  %v201 = vunpack.c.l.b16 %v69
  %v202 = vpack.c.b16 %v167, %v166
  %v203 = vpack.c.b16 %v169, %v168
  %v204 = vpack.c.b16 %v171, %v170
  %v205 = vpack.c.b16 %v173, %v172
  %v206 = vpack.c.b16 %v175, %v174
  %v207 = vpack.c.b16 %v177, %v176
  %v208 = vpack.c.b16 %v179, %v178
  %v209 = vpack.c.b16 %v181, %v180
  %v210 = vpack.c.b16 %v183, %v182
  %v211 = vpack.c.b16 %v185, %v184
  %v212 = vpack.c.b16 %v187, %v186
  %v213 = vpack.c.b16 %v189, %v188
  %v214 = vpack.c.b16 %v191, %v190
  %v215 = vpack.c.b16 %v193, %v192
  %v216 = vpack.c.b16 %v195, %v194
  %v217 = vpack.c.b16 %v197, %v196
  %v218 = vpack.c.b16 %v199, %v198
  %v219 = vpack.c.b16 %v201, %v200
  %vm238 = vcmask 261120
  %v240 = vsel %vm238, %v112, 0
  %v243 = vsel %vm238, %v115, 0
  %v246 = vsel %vm238, %v118, 0
  %v249 = vsel %vm238, %v121, 0
  %251 = vmatprep.subr.bf16.mxu0 0
  %252 = vmatpush1.bf16.msra.mxu0 %v202
  %253 = vmatprep.subr.bf16.mxu0 0
  %254 = vmatpush1.bf16.msra.mxu0 %v203
  %255 = vmatprep.subr.bf16.mxu0 0
  %256 = vmatpush1.bf16.msra.mxu0 %v204
  %257 = vmatprep.subr.bf16.mxu0 0
  %258 = vmatpush1.bf16.msra.mxu0 %v205
  %259 = vmatprep.subr.bf16.mxu0 0
  %260 = vmatpush1.bf16.msra.mxu0 %v206
  %261 = vmatprep.subr.bf16.mxu0 0
  %262 = vmatpush1.bf16.msra.mxu0 %v207
  %263 = vmatprep.subr.bf16.mxu0 0
  %264 = vmatpush1.bf16.msra.mxu0 %v208
  %265 = vmatprep.subr.bf16.mxu0 0
  %266 = vmatpush1.bf16.msra.mxu0 %v209
  %267 = vmatprep.subr.bf16.mxu0 0
  %268 = vmatpush1.bf16.msra.mxu0 %v210
  %269 = vmatprep.subr.bf16.mxu0 0
  %270 = vmatpush1.bf16.msra.mxu0 %v211
  %271 = vmatprep.subr.bf16.mxu0 0
  %272 = vmatpush1.bf16.msra.mxu0 %v212
  %273 = vmatprep.subr.bf16.mxu0 0
  %274 = vmatpush1.bf16.msra.mxu0 %v213
  %275 = vmatprep.subr.bf16.mxu0 0
  %276 = vmatpush1.bf16.msra.mxu0 %v214
  %277 = vmatprep.subr.bf16.mxu0 0
  %278 = vmatpush1.bf16.msra.mxu0 %v215
  %279 = vmatprep.subr.bf16.mxu0 0
  %280 = vmatpush1.bf16.msra.mxu0 %v216
  %281 = vmatprep.subr.bf16.mxu0 0
  %282 = vmatpush1.bf16.msra.mxu0 %v217
  %283 = vmatprep.mubr.bf16.mxu0 %v111
  %284 = vmatmul.mubr.bf16.gmra.mrb[0].mxu0 %v110
  %v285 = vpop.f32.mrb[0].mxu0
  %v286 = vadd.f32 0.0, %v285
  %v287 = vpop.f32.mrb[0].mxu0
  %v288 = vpop.f32.mrb[0].mxu0
  %v289 = vadd.f32 0.0, %v288
  %v290 = vpop.f32.mrb[0].mxu0
  %291 = vmatprep.mubr.bf16.mxu0 %v114
  %292 = vmatmul.mubr.bf16.gmra.mrb[0].mxu0 %v113
  %v293 = vpop.f32.mrb[0].mxu0
  %v294 = vadd.f32 0.0, %v293
  %v295 = vpop.f32.mrb[0].mxu0
  %v296 = vpop.f32.mrb[0].mxu0
  %v297 = vadd.f32 0.0, %v296
  %v298 = vpop.f32.mrb[0].mxu0
  %299 = vmatprep.mubr.bf16.mxu0 %v117
  %300 = vmatmul.mubr.bf16.gmra.mrb[0].mxu0 %v116
  %v301 = vpop.f32.mrb[0].mxu0
  %v302 = vadd.f32 0.0, %v301
  %v303 = vpop.f32.mrb[0].mxu0
  %v304 = vpop.f32.mrb[0].mxu0
  %v305 = vadd.f32 0.0, %v304
  %v306 = vpop.f32.mrb[0].mxu0
  %307 = vmatprep.mubr.bf16.mxu0 %v120
  %308 = vmatmul.mubr.bf16.gmra.mrb[0].mxu0 %v119
  %v309 = vpop.f32.mrb[0].mxu0
  %v310 = vadd.f32 0.0, %v309
  %v311 = vpop.f32.mrb[0].mxu0
  %v312 = vpop.f32.mrb[0].mxu0
  %v313 = vadd.f32 0.0, %v312
  %v314 = vpop.f32.mrb[0].mxu0
  %315 = vdwg.mxu0
  %316 = vmatprep.subr.bf16.mxu0 0
  %317 = vmatpush1.bf16.msra.mxu0 %v218
  %318 = vmatprep.subr.bf16.mxu0 0
  %319 = vmatpush1.bf16.msra.mxu0 %v219
  %320 = vmatprep.subr.bf16.mxu0 0
  %321 = vmatpush1.bf16.msra.mxu0 0
  %322 = vmatprep.subr.bf16.mxu0 0
  %323 = vmatpush1.bf16.msra.mxu0 0
  %324 = vmatprep.subr.bf16.mxu0 0
  %325 = vmatpush1.bf16.msra.mxu0 0
  %326 = vmatprep.subr.bf16.mxu0 0
  %327 = vmatpush1.bf16.msra.mxu0 0
  %328 = vmatprep.subr.bf16.mxu0 0
  %329 = vmatpush1.bf16.msra.mxu0 0
  %330 = vmatprep.subr.bf16.mxu0 0
  %331 = vmatpush1.bf16.msra.mxu0 0
  %332 = vmatprep.subr.bf16.mxu0 0
  %333 = vmatpush1.bf16.msra.mxu0 0
  %334 = vmatprep.subr.bf16.mxu0 0
  %335 = vmatpush1.bf16.msra.mxu0 0
  %336 = vmatprep.subr.bf16.mxu0 0
  %337 = vmatpush1.bf16.msra.mxu0 0
  %338 = vmatprep.subr.bf16.mxu0 0
  %339 = vmatpush1.bf16.msra.mxu0 0
  %340 = vmatprep.subr.bf16.mxu0 0
  %341 = vmatpush1.bf16.msra.mxu0 0
  %342 = vmatprep.subr.bf16.mxu0 0
  %343 = vmatpush1.bf16.msra.mxu0 0
  %344 = vmatprep.subr.bf16.mxu0 0
  %345 = vmatpush1.bf16.msra.mxu0 0
  %346 = vmatprep.subr.bf16.mxu0 0
  %347 = vmatpush1.bf16.msra.mxu0 0
  %348 = vmatprep.mubr.bf16.mxu0 0
  %349 = vmatmul.mubr.bf16.gmra.mrb[0].mxu0 %v240
  %v350 = vpop.f32.mrb[0].mxu0
  %v351 = vadd.f32 %v286, %v350
  %v352 = vpop.f32.mrb[0].mxu0
  %v353 = vpop.f32.mrb[0].mxu0
  %v354 = vadd.f32 %v289, %v353
  %v355 = vpop.f32.mrb[0].mxu0
  %356 = vmatprep.mubr.bf16.mxu0 0
  %357 = vmatmul.mubr.bf16.gmra.mrb[0].mxu0 %v243
  %v358 = vpop.f32.mrb[0].mxu0
  %v359 = vadd.f32 %v294, %v358
  %v360 = vpop.f32.mrb[0].mxu0
  %v361 = vpop.f32.mrb[0].mxu0
  %v362 = vadd.f32 %v297, %v361
  %v363 = vpop.f32.mrb[0].mxu0
  %364 = vmatprep.mubr.bf16.mxu0 0
  %365 = vmatmul.mubr.bf16.gmra.mrb[0].mxu0 %v246
  %v366 = vpop.f32.mrb[0].mxu0
  %v367 = vadd.f32 %v302, %v366
  %v368 = vpop.f32.mrb[0].mxu0
  %v369 = vpop.f32.mrb[0].mxu0
  %v370 = vadd.f32 %v305, %v369
  %v371 = vpop.f32.mrb[0].mxu0
  %372 = vmatprep.mubr.bf16.mxu0 0
  %373 = vmatmul.mubr.bf16.gmra.mrb[0].mxu0 %v249
  %v374 = vpop.f32.mrb[0].mxu0
  %v375 = vadd.f32 %v310, %v374
  %v376 = vpop.f32.mrb[0].mxu0
  %v377 = vpop.f32.mrb[0].mxu0
  %v378 = vadd.f32 %v313, %v377
  %v379 = vpop.f32.mrb[0].mxu0
  %380 = vdwg.mxu0
  %v381 = vld [vmem:[%s2] sm:$0xff]
  %v382 = vld [vmem:[%s2 + $0x8] sm:$0xff]
  %v383 = vld [vmem:[%s2 + $0x10] sm:$0xff]
  %v384 = vld [vmem:[%s2 + $0x18] sm:$0xff]
  %v385 = vld [vmem:[%s2 + $0x20] sm:$0xff]
  %v386 = vld [vmem:[%s2 + $0x28] sm:$0xff]
  %v387 = vld [vmem:[%s2 + $0x30] sm:$0xff]
  %v388 = vld [vmem:[%s2 + $0x38] sm:$0xff]
  %390 = vset.pattern.permute.xlu0 0
  %391 = vperm.xlu0 %390, %v381
  %v392 = vpop.permute.xlu0 %391
  %395 = vset.pattern.permute.xlu0 0
  %396 = vperm.xlu0 %395, %v382
  %v397 = vpop.permute.xlu0 %396
  %400 = vset.pattern.permute.xlu0 0
  %401 = vperm.xlu0 %400, %v383
  %v402 = vpop.permute.xlu0 %401
  %405 = vset.pattern.permute.xlu0 0
  %406 = vperm.xlu0 %405, %v384
  %v407 = vpop.permute.xlu0 %406
  %410 = vset.pattern.permute.xlu0 0
  %411 = vperm.xlu0 %410, %v385
  %v412 = vpop.permute.xlu0 %411
  %415 = vset.pattern.permute.xlu0 0
  %416 = vperm.xlu0 %415, %v386
  %v417 = vpop.permute.xlu0 %416
  %420 = vset.pattern.permute.xlu0 0
  %421 = vperm.xlu0 %420, %v387
  %v422 = vpop.permute.xlu0 %421
  %425 = vset.pattern.permute.xlu0 0
  %426 = vperm.xlu0 %425, %v388
  %v427 = vpop.permute.xlu0 %426
  %v429 = vmul.f32 %v351, %v392
  %v430 = vmul.f32 %v354, %v397
  %v431 = vmul.f32 %v359, %v402
  %v432 = vmul.f32 %v362, %v407
  %v433 = vmul.f32 %v367, %v412
  %v434 = vmul.f32 %v370, %v417
  %v435 = vmul.f32 %v375, %v422
  %v436 = vmul.f32 %v378, %v427
  %v437 = vld [vmem:[%s3] sm:$0xff]
  %v438 = vld [vmem:[%s3 + $0x8] sm:$0xff]
  %v439 = vld [vmem:[%s3 + $0x10] sm:$0xff]
  %v440 = vld [vmem:[%s3 + $0x18] sm:$0xff]
  %v441 = vld [vmem:[%s3 + $0x20] sm:$0xff]
  %v442 = vld [vmem:[%s3 + $0x28] sm:$0xff]
  %v443 = vld [vmem:[%s3 + $0x30] sm:$0xff]
  %v444 = vld [vmem:[%s3 + $0x38] sm:$0xff]
  %446 = vset.pattern.permute.xlu0 0
  %447 = vperm.xlu0 %446, %v437
  %v448 = vpop.permute.xlu0 %447
  %451 = vset.pattern.permute.xlu0 0
  %452 = vperm.xlu0 %451, %v438
  %v453 = vpop.permute.xlu0 %452
  %456 = vset.pattern.permute.xlu0 0
  %457 = vperm.xlu0 %456, %v439
  %v458 = vpop.permute.xlu0 %457
  %461 = vset.pattern.permute.xlu0 0
  %462 = vperm.xlu0 %461, %v440
  %v463 = vpop.permute.xlu0 %462
  %466 = vset.pattern.permute.xlu0 0
  %467 = vperm.xlu0 %466, %v441
  %v468 = vpop.permute.xlu0 %467
  %471 = vset.pattern.permute.xlu0 0
  %472 = vperm.xlu0 %471, %v442
  %v473 = vpop.permute.xlu0 %472
  %476 = vset.pattern.permute.xlu0 0
  %477 = vperm.xlu0 %476, %v443
  %v478 = vpop.permute.xlu0 %477
  %481 = vset.pattern.permute.xlu0 0
  %482 = vperm.xlu0 %481, %v444
  %v483 = vpop.permute.xlu0 %482
  %v485 = vadd.f32 %v429, %v448
  %v486 = vadd.f32 %v430, %v453
  %v487 = vadd.f32 %v431, %v458
  %v488 = vadd.f32 %v432, %v463
  %v489 = vadd.f32 %v433, %v468
  %v490 = vadd.f32 %v434, %v473
  %v491 = vadd.f32 %v435, %v478
  %v492 = vadd.f32 %v436, %v483
  %v493 = vmax.f32 %v485, 0.0
  %v494 = vmax.f32 %v486, 0.0
  %v495 = vmax.f32 %v487, 0.0
  %v496 = vmax.f32 %v488, 0.0
  %v497 = vmax.f32 %v489, 0.0
  %v498 = vmax.f32 %v490, 0.0
  %v499 = vmax.f32 %v491, 0.0
  %v500 = vmax.f32 %v492, 0.0
  %v501 = vpack.c.bf16 %v494, %v493
  %v502 = vpack.c.bf16 %v496, %v495
  %v503 = vpack.c.bf16 %v498, %v497
  %v504 = vpack.c.bf16 %v500, %v499
  %v509 = vunpack.c.l.b16 %v501
  %v510 = vunpack.c.h.b16 %v501
  %v511 = vunpack.c.l.b16 %v502
  %v512 = vunpack.c.h.b16 %v502
  %v513 = vunpack.c.l.b16 %v503
  %v514 = vunpack.c.h.b16 %v503
  %v515 = vunpack.c.l.b16 %v504
  %v516 = vunpack.c.h.b16 %v504
  %v517 = vpack.c.b16 %v509, %v509
  %v518 = vpack.c.b16 %v510, %v510
  %v519 = vpack.c.b16 %v511, %v511
  %v520 = vpack.c.b16 %v512, %v512
  %v521 = vpack.c.b16 %v513, %v513
  %v522 = vpack.c.b16 %v514, %v514
  %v523 = vpack.c.b16 %v515, %v515
  %v524 = vpack.c.b16 %v516, %v516
  %vm533 = vcmask 257024
  %534 = vst.msk [vmem:[%s4] sm:$0xf] %vm533, %v517
  %535 = vst.msk [vmem:[%s4 + $0x4] sm:$0xf] %vm533, %v518
  %536 = vst.msk [vmem:[%s4 + $0x8] sm:$0xf] %vm533, %v519
  %537 = vst.msk [vmem:[%s4 + $0xc] sm:$0xf] %vm533, %v520
  %538 = vst.msk [vmem:[%s4 + $0x10] sm:$0xf] %vm533, %v521
  %539 = vst.msk [vmem:[%s4 + $0x14] sm:$0xf] %vm533, %v522
  %540 = vst.msk [vmem:[%s4 + $0x18] sm:$0xf] %vm533, %v523
  %541 = vst.msk [vmem:[%s4 + $0x1c] sm:$0xf] %vm533, %v524
  // Predicated region
  $region18: #{_lambda_.16} parent=0 // pred_check
    _
  $region19: #{_lambda_.16} parent=0 // pred_check_branch
    %543 = sbr.rel (0) target = $region21
  $region20: #{_lambda_.16} parent=0 // pred_region
    _
  $region21: #{_lambda_.16} parent=0 // pred_fallthru
    _
  // Predicated region
  $region22: #{_lambda_.16} parent=0 // pred_check
    _
  $region23: #{_lambda_.16} parent=0 // pred_check_branch
    %545 = sbr.rel (0) target = $region25
  $region24: #{_lambda_.16} parent=0 // pred_region
    _
  $region25: #{_lambda_.16} parent=0 // pred_fallthru
    _

// kernel: _lambda_.17
$region0: #{_lambda_.17}
  #allocation0 [shape = 'u32[]', space=smem, size = 0x4, offset = 0x4, fixed_abs, tag = 'smem constant byte address 0x4 - core index']
  #allocation1 [shape = 'u32[144,128]{1,0:T(1,128)}', space=vmem, size = 0x12000, scoped, tag = 'internal scratch']
  %s0 = inlined_call_operand.vmem [shape: bf16[64,32], index: 0, kind: input, shape index: {}]
  %s1 = inlined_call_operand.vmem [shape: bf16[32,32], index: 1, kind: input, shape index: {}]
  %s2 = inlined_call_operand.vmem [shape: f32[64,1], index: 2, kind: input, shape index: {}]
  %s3 = inlined_call_operand.vmem [shape: f32[64,1], index: 3, kind: input, shape index: {}]
  %s4 = inlined_call_operand.vmem [shape: bf16[64,32], index: 4, kind: output, shape index: {}]
  %s5 = sld [smem:[#allocation0]]
  $region26: #{_lambda_.17} parent=0
    _
  %s7 = ssub.s32 1, %s5
  %s8 = scalar_select 0, %s7, %s5
  // Predicated region
  $region2: #{_lambda_.17} parent=0 // pred_check
    _
  $region3: #{_lambda_.17} parent=0 // pred_check_branch
    %10 = sbr.rel (0) target = $region5
  $region4: #{_lambda_.17} parent=0 // pred_region
    _
  $region5: #{_lambda_.17} parent=0 // pred_fallthru
    _
  // Predicated region
  $region6: #{_lambda_.17} parent=0 // pred_check
    _
  $region7: #{_lambda_.17} parent=0 // pred_check_branch
    %12 = sbr.rel (0) target = $region9
  $region8: #{_lambda_.17} parent=0 // pred_region
    _
  $region9: #{_lambda_.17} parent=0 // pred_fallthru
    _
  // Predicated region
  $region10: #{_lambda_.17} parent=0 // pred_check
    _
  $region11: #{_lambda_.17} parent=0 // pred_check_branch
    %14 = sbr.rel (0) target = $region13
  $region12: #{_lambda_.17} parent=0 // pred_region
    _
  $region13: #{_lambda_.17} parent=0 // pred_fallthru
    _
  // Predicated region
  $region14: #{_lambda_.17} parent=0 // pred_check
    _
  $region15: #{_lambda_.17} parent=0 // pred_check_branch
    %16 = sbr.rel (0) target = $region17
  $region16: #{_lambda_.17} parent=0 // pred_region
    _
  $region17: #{_lambda_.17} parent=0 // pred_fallthru
    _
  %v18 = vld [vmem:[%s0] sm:$0xf]
  %v19 = vld [vmem:[%s0 + $0x4] sm:$0xf]
  %v20 = vld [vmem:[%s0 + $0x8] sm:$0xf]
  %v21 = vld [vmem:[%s0 + $0xc] sm:$0xf]
  %v22 = vld [vmem:[%s0 + $0x10] sm:$0xf]
  %v23 = vld [vmem:[%s0 + $0x14] sm:$0xf]
  %v24 = vld [vmem:[%s0 + $0x18] sm:$0xf]
  %v25 = vld [vmem:[%s0 + $0x1c] sm:$0xf]
  %v26 = vld [vmem:[%s1] sm:$0xf]
  %v27 = vld [vmem:[%s1 + $0x4] sm:$0xf]
  %v28 = vld [vmem:[%s1 + $0x8] sm:$0xf]
  %v29 = vld [vmem:[%s1 + $0xc] sm:$0xf]
  %v38 = vunpack.c.l.b16 %v18
  %v39 = vunpack.c.l.b16 %v19
  %v40 = vunpack.c.l.b16 %v20
  %v41 = vunpack.c.l.b16 %v21
  %v42 = vunpack.c.l.b16 %v22
  %v43 = vunpack.c.l.b16 %v23
  %v44 = vunpack.c.l.b16 %v24
  %v45 = vunpack.c.l.b16 %v25
  %v46 = vpack.c.b16 %v39, %v38
  %v47 = vpack.c.b16 %v41, %v40
  %v48 = vpack.c.b16 %v43, %v42
  %v49 = vpack.c.b16 %v45, %v44
  %v54 = vunpack.c.l.b16 %v26
  %v55 = vunpack.c.l.b16 %v27
  %v56 = vunpack.c.l.b16 %v28
  %v57 = vunpack.c.l.b16 %v29
  %v58 = vpack.c.b16 %v55, %v54
  %v59 = vpack.c.b16 %v57, %v56
  %vm62 = vcmask 261120
  %v64 = vsel %vm62, %v46, 0
  %v67 = vsel %vm62, %v47, 0
  %v70 = vsel %vm62, %v48, 0
  %v73 = vsel %vm62, %v49, 0
  %75 = vmatprep.subr.bf16.mxu0 0
  %76 = vmatpush1.bf16.msra.mxu0 %v58
  %77 = vmatprep.subr.bf16.mxu0 0
  %78 = vmatpush1.bf16.msra.mxu0 %v59
  %79 = vmatprep.subr.bf16.mxu0 0
  %80 = vmatpush1.bf16.msra.mxu0 0
  %81 = vmatprep.subr.bf16.mxu0 0
  %82 = vmatpush1.bf16.msra.mxu0 0
  %83 = vmatprep.subr.bf16.mxu0 0
  %84 = vmatpush1.bf16.msra.mxu0 0
  %85 = vmatprep.subr.bf16.mxu0 0
  %86 = vmatpush1.bf16.msra.mxu0 0
  %87 = vmatprep.subr.bf16.mxu0 0
  %88 = vmatpush1.bf16.msra.mxu0 0
  %89 = vmatprep.subr.bf16.mxu0 0
  %90 = vmatpush1.bf16.msra.mxu0 0
  %91 = vmatprep.subr.bf16.mxu0 0
  %92 = vmatpush1.bf16.msra.mxu0 0
  %93 = vmatprep.subr.bf16.mxu0 0
  %94 = vmatpush1.bf16.msra.mxu0 0
  %95 = vmatprep.subr.bf16.mxu0 0
  %96 = vmatpush1.bf16.msra.mxu0 0
  %97 = vmatprep.subr.bf16.mxu0 0
  %98 = vmatpush1.bf16.msra.mxu0 0
  %99 = vmatprep.subr.bf16.mxu0 0
  %100 = vmatpush1.bf16.msra.mxu0 0
  %101 = vmatprep.subr.bf16.mxu0 0
  %102 = vmatpush1.bf16.msra.mxu0 0
  %103 = vmatprep.subr.bf16.mxu0 0
  %104 = vmatpush1.bf16.msra.mxu0 0
  %105 = vmatprep.subr.bf16.mxu0 0
  %106 = vmatpush1.bf16.msra.mxu0 0
  %107 = vmatprep.mubr.bf16.mxu0 0
  %108 = vmatmul.mubr.bf16.gmra.mrb[0].mxu0 %v64
  %v109 = vpop.f32.mrb[0].mxu0
  %v110 = vadd.f32 0.0, %v109
  %v111 = vpop.f32.mrb[0].mxu0
  %v112 = vpop.f32.mrb[0].mxu0
  %v113 = vadd.f32 0.0, %v112
  %v114 = vpop.f32.mrb[0].mxu0
  %115 = vmatprep.mubr.bf16.mxu0 0
  %116 = vmatmul.mubr.bf16.gmra.mrb[0].mxu0 %v67
  %v117 = vpop.f32.mrb[0].mxu0
  %v118 = vadd.f32 0.0, %v117
  %v119 = vpop.f32.mrb[0].mxu0
  %v120 = vpop.f32.mrb[0].mxu0
  %v121 = vadd.f32 0.0, %v120
  %v122 = vpop.f32.mrb[0].mxu0
  %123 = vmatprep.mubr.bf16.mxu0 0
  %124 = vmatmul.mubr.bf16.gmra.mrb[0].mxu0 %v70
  %v125 = vpop.f32.mrb[0].mxu0
  %v126 = vadd.f32 0.0, %v125
  %v127 = vpop.f32.mrb[0].mxu0
  %v128 = vpop.f32.mrb[0].mxu0
  %v129 = vadd.f32 0.0, %v128
  %v130 = vpop.f32.mrb[0].mxu0
  %131 = vmatprep.mubr.bf16.mxu0 0
  %132 = vmatmul.mubr.bf16.gmra.mrb[0].mxu0 %v73
  %v133 = vpop.f32.mrb[0].mxu0
  %v134 = vadd.f32 0.0, %v133
  %v135 = vpop.f32.mrb[0].mxu0
  %v136 = vpop.f32.mrb[0].mxu0
  %v137 = vadd.f32 0.0, %v136
  %v138 = vpop.f32.mrb[0].mxu0
  %139 = vdwg.mxu0
  %v140 = vld [vmem:[%s2] sm:$0xff]
  %v141 = vld [vmem:[%s2 + $0x8] sm:$0xff]
  %v142 = vld [vmem:[%s2 + $0x10] sm:$0xff]
  %v143 = vld [vmem:[%s2 + $0x18] sm:$0xff]
  %v144 = vld [vmem:[%s2 + $0x20] sm:$0xff]
  %v145 = vld [vmem:[%s2 + $0x28] sm:$0xff]
  %v146 = vld [vmem:[%s2 + $0x30] sm:$0xff]
  %v147 = vld [vmem:[%s2 + $0x38] sm:$0xff]
  %149 = vset.pattern.permute.xlu0 0
  %150 = vperm.xlu0 %149, %v140
  %v151 = vpop.permute.xlu0 %150
  %154 = vset.pattern.permute.xlu0 0
  %155 = vperm.xlu0 %154, %v141
  %v156 = vpop.permute.xlu0 %155
  %159 = vset.pattern.permute.xlu0 0
  %160 = vperm.xlu0 %159, %v142
  %v161 = vpop.permute.xlu0 %160
  %164 = vset.pattern.permute.xlu0 0
  %165 = vperm.xlu0 %164, %v143
  %v166 = vpop.permute.xlu0 %165
  %169 = vset.pattern.permute.xlu0 0
  %170 = vperm.xlu0 %169, %v144
  %v171 = vpop.permute.xlu0 %170
  %174 = vset.pattern.permute.xlu0 0
  %175 = vperm.xlu0 %174, %v145
  %v176 = vpop.permute.xlu0 %175
  %179 = vset.pattern.permute.xlu0 0
  %180 = vperm.xlu0 %179, %v146
  %v181 = vpop.permute.xlu0 %180
  %184 = vset.pattern.permute.xlu0 0
  %185 = vperm.xlu0 %184, %v147
  %v186 = vpop.permute.xlu0 %185
  %v188 = vmul.f32 %v110, %v151
  %v189 = vmul.f32 %v113, %v156
  %v190 = vmul.f32 %v118, %v161
  %v191 = vmul.f32 %v121, %v166
  %v192 = vmul.f32 %v126, %v171
  %v193 = vmul.f32 %v129, %v176
  %v194 = vmul.f32 %v134, %v181
  %v195 = vmul.f32 %v137, %v186
  %v196 = vld [vmem:[%s3] sm:$0xff]
  %v197 = vld [vmem:[%s3 + $0x8] sm:$0xff]
  %v198 = vld [vmem:[%s3 + $0x10] sm:$0xff]
  %v199 = vld [vmem:[%s3 + $0x18] sm:$0xff]
  %v200 = vld [vmem:[%s3 + $0x20] sm:$0xff]
  %v201 = vld [vmem:[%s3 + $0x28] sm:$0xff]
  %v202 = vld [vmem:[%s3 + $0x30] sm:$0xff]
  %v203 = vld [vmem:[%s3 + $0x38] sm:$0xff]
  %205 = vset.pattern.permute.xlu0 0
  %206 = vperm.xlu0 %205, %v196
  %v207 = vpop.permute.xlu0 %206
  %210 = vset.pattern.permute.xlu0 0
  %211 = vperm.xlu0 %210, %v197
  %v212 = vpop.permute.xlu0 %211
  %215 = vset.pattern.permute.xlu0 0
  %216 = vperm.xlu0 %215, %v198
  %v217 = vpop.permute.xlu0 %216
  %220 = vset.pattern.permute.xlu0 0
  %221 = vperm.xlu0 %220, %v199
  %v222 = vpop.permute.xlu0 %221
  %225 = vset.pattern.permute.xlu0 0
  %226 = vperm.xlu0 %225, %v200
  %v227 = vpop.permute.xlu0 %226
  %230 = vset.pattern.permute.xlu0 0
  %231 = vperm.xlu0 %230, %v201
  %v232 = vpop.permute.xlu0 %231
  %235 = vset.pattern.permute.xlu0 0
  %236 = vperm.xlu0 %235, %v202
  %v237 = vpop.permute.xlu0 %236
  %240 = vset.pattern.permute.xlu0 0
  %241 = vperm.xlu0 %240, %v203
  %v242 = vpop.permute.xlu0 %241
  %v244 = vadd.f32 %v188, %v207
  %v245 = vadd.f32 %v189, %v212
  %v246 = vadd.f32 %v190, %v217
  %v247 = vadd.f32 %v191, %v222
  %v248 = vadd.f32 %v192, %v227
  %v249 = vadd.f32 %v193, %v232
  %v250 = vadd.f32 %v194, %v237
  %v251 = vadd.f32 %v195, %v242
  %v252 = vpack.c.bf16 %v245, %v244
  %v253 = vpack.c.bf16 %v247, %v246
  %v254 = vpack.c.bf16 %v249, %v248
  %v255 = vpack.c.bf16 %v251, %v250
  %v260 = vunpack.c.l.b16 %v252
  %v261 = vunpack.c.h.b16 %v252
  %v262 = vunpack.c.l.b16 %v253
  %v263 = vunpack.c.h.b16 %v253
  %v264 = vunpack.c.l.b16 %v254
  %v265 = vunpack.c.h.b16 %v254
  %v266 = vunpack.c.l.b16 %v255
  %v267 = vunpack.c.h.b16 %v255
  %v268 = vpack.c.b16 %v260, %v260
  %v269 = vpack.c.b16 %v261, %v261
  %v270 = vpack.c.b16 %v262, %v262
  %v271 = vpack.c.b16 %v263, %v263
  %v272 = vpack.c.b16 %v264, %v264
  %v273 = vpack.c.b16 %v265, %v265
  %v274 = vpack.c.b16 %v266, %v266
  %v275 = vpack.c.b16 %v267, %v267
  %vm284 = vcmask 257024
  %285 = vst.msk [vmem:[%s4] sm:$0xf] %vm284, %v268
  %286 = vst.msk [vmem:[%s4 + $0x4] sm:$0xf] %vm284, %v269
  %287 = vst.msk [vmem:[%s4 + $0x8] sm:$0xf] %vm284, %v270
  %288 = vst.msk [vmem:[%s4 + $0xc] sm:$0xf] %vm284, %v271
  %289 = vst.msk [vmem:[%s4 + $0x10] sm:$0xf] %vm284, %v272
  %290 = vst.msk [vmem:[%s4 + $0x14] sm:$0xf] %vm284, %v273
  %291 = vst.msk [vmem:[%s4 + $0x18] sm:$0xf] %vm284, %v274
  %292 = vst.msk [vmem:[%s4 + $0x1c] sm:$0xf] %vm284, %v275
  // Predicated region
  $region18: #{_lambda_.17} parent=0 // pred_check
    _
  $region19: #{_lambda_.17} parent=0 // pred_check_branch
    %294 = sbr.rel (0) target = $region21
  $region20: #{_lambda_.17} parent=0 // pred_region
    _
  $region21: #{_lambda_.17} parent=0 // pred_fallthru
    _
  // Predicated region
  $region22: #{_lambda_.17} parent=0 // pred_check
    _
  $region23: #{_lambda_.17} parent=0 // pred_check_branch
    %296 = sbr.rel (0) target = $region25
  $region24: #{_lambda_.17} parent=0 // pred_region
    _
  $region25: #{_lambda_.17} parent=0 // pred_fallthru
    _

// kernel: _lambda_.18
$region0: #{_lambda_.18}
  #allocation0 [shape = 'u32[]', space=smem, size = 0x4, offset = 0x4, fixed_abs, tag = 'smem constant byte address 0x4 - core index']
  #allocation1 [shape = 'u32[144,128]{1,0:T(1,128)}', space=vmem, size = 0x12000, scoped, tag = 'internal scratch']
  %s0 = inlined_call_operand.vmem [shape: bf16[64,576], index: 0, kind: input, shape index: {}]
  %s1 = inlined_call_operand.vmem [shape: bf16[576,32], index: 1, kind: input, shape index: {}]
  %s2 = inlined_call_operand.vmem [shape: f32[64,1], index: 2, kind: input, shape index: {}]
  %s3 = inlined_call_operand.vmem [shape: f32[64,1], index: 3, kind: input, shape index: {}]
  %s4 = inlined_call_operand.vmem [shape: bf16[64,32], index: 4, kind: input, shape index: {}]
  %s5 = inlined_call_operand.vmem [shape: bf16[64,32], index: 5, kind: output, shape index: {}]
  %s6 = sld [smem:[#allocation0]]
  $region30: #{_lambda_.18} parent=0
    _
  %s8 = ssub.s32 1, %s6
  %s9 = scalar_select 0, %s8, %s6
  // Predicated region
  $region2: #{_lambda_.18} parent=0 // pred_check
    _
  $region3: #{_lambda_.18} parent=0 // pred_check_branch
    %11 = sbr.rel (0) target = $region5
  $region4: #{_lambda_.18} parent=0 // pred_region
    _
  $region5: #{_lambda_.18} parent=0 // pred_fallthru
    _
  // Predicated region
  $region6: #{_lambda_.18} parent=0 // pred_check
    _
  $region7: #{_lambda_.18} parent=0 // pred_check_branch
    %13 = sbr.rel (0) target = $region9
  $region8: #{_lambda_.18} parent=0 // pred_region
    _
  $region9: #{_lambda_.18} parent=0 // pred_fallthru
    _
  // Predicated region
  $region10: #{_lambda_.18} parent=0 // pred_check
    _
  $region11: #{_lambda_.18} parent=0 // pred_check_branch
    %15 = sbr.rel (0) target = $region13
  $region12: #{_lambda_.18} parent=0 // pred_region
    _
  $region13: #{_lambda_.18} parent=0 // pred_fallthru
    _
  // Predicated region
  $region14: #{_lambda_.18} parent=0 // pred_check
    _
  $region15: #{_lambda_.18} parent=0 // pred_check_branch
    %17 = sbr.rel (0) target = $region17
  $region16: #{_lambda_.18} parent=0 // pred_region
    _
  $region17: #{_lambda_.18} parent=0 // pred_fallthru
    _
  // Predicated region
  $region18: #{_lambda_.18} parent=0 // pred_check
    _
  $region19: #{_lambda_.18} parent=0 // pred_check_branch
    %19 = sbr.rel (0) target = $region21
  $region20: #{_lambda_.18} parent=0 // pred_region
    _
  $region21: #{_lambda_.18} parent=0 // pred_fallthru
    _
  %v21 = vld [vmem:[%s0] sm:$0xff]
  %v22 = vld [vmem:[%s0 + $0x8] sm:$0xff]
  %v23 = vld [vmem:[%s0 + $0x10] sm:$0xf]
  %v24 = vld [vmem:[%s0 + $0x14] sm:$0xff]
  %v25 = vld [vmem:[%s0 + $0x1c] sm:$0xff]
  %v26 = vld [vmem:[%s0 + $0x24] sm:$0xf]
  %v27 = vld [vmem:[%s0 + $0x28] sm:$0xff]
  %v28 = vld [vmem:[%s0 + $0x30] sm:$0xff]
  %v29 = vld [vmem:[%s0 + $0x38] sm:$0xf]
  %v30 = vld [vmem:[%s0 + $0x3c] sm:$0xff]
  %v31 = vld [vmem:[%s0 + $0x44] sm:$0xff]
  %v32 = vld [vmem:[%s0 + $0x4c] sm:$0xf]
  %v33 = vld [vmem:[%s0 + $0x50] sm:$0xff]
  %v34 = vld [vmem:[%s0 + $0x58] sm:$0xff]
  %v35 = vld [vmem:[%s0 + $0x60] sm:$0xf]
  %v36 = vld [vmem:[%s0 + $0x64] sm:$0xff]
  %v37 = vld [vmem:[%s0 + $0x6c] sm:$0xff]
  %v38 = vld [vmem:[%s0 + $0x74] sm:$0xf]
  %v39 = vld [vmem:[%s0 + $0x78] sm:$0xff]
  %v40 = vld [vmem:[%s0 + $0x80] sm:$0xff]
  %v41 = vld [vmem:[%s0 + $0x88] sm:$0xf]
  %v42 = vld [vmem:[%s0 + $0x8c] sm:$0xff]
  %v43 = vld [vmem:[%s0 + $0x94] sm:$0xff]
  %v44 = vld [vmem:[%s0 + $0x9c] sm:$0xf]
  %v45 = vld [vmem:[%s1] sm:$0xf]
  %v46 = vld [vmem:[%s1 + $0x4] sm:$0xf]
  %v47 = vld [vmem:[%s1 + $0x8] sm:$0xf]
  %v48 = vld [vmem:[%s1 + $0xc] sm:$0xf]
  %v49 = vld [vmem:[%s1 + $0x10] sm:$0xf]
  %v50 = vld [vmem:[%s1 + $0x14] sm:$0xf]
  %v51 = vld [vmem:[%s1 + $0x18] sm:$0xf]
  %v52 = vld [vmem:[%s1 + $0x1c] sm:$0xf]
  %v53 = vld [vmem:[%s1 + $0x20] sm:$0xf]
  %v54 = vld [vmem:[%s1 + $0x24] sm:$0xf]
  %v55 = vld [vmem:[%s1 + $0x28] sm:$0xf]
  %v56 = vld [vmem:[%s1 + $0x2c] sm:$0xf]
  %v57 = vld [vmem:[%s1 + $0x30] sm:$0xf]
  %v58 = vld [vmem:[%s1 + $0x34] sm:$0xf]
  %v59 = vld [vmem:[%s1 + $0x38] sm:$0xf]
  %v60 = vld [vmem:[%s1 + $0x3c] sm:$0xf]
  %v61 = vld [vmem:[%s1 + $0x40] sm:$0xf]
  %v62 = vld [vmem:[%s1 + $0x44] sm:$0xf]
  %v63 = vld [vmem:[%s1 + $0x48] sm:$0xf]
  %v64 = vld [vmem:[%s1 + $0x4c] sm:$0xf]
  %v65 = vld [vmem:[%s1 + $0x50] sm:$0xf]
  %v66 = vld [vmem:[%s1 + $0x54] sm:$0xf]
  %v67 = vld [vmem:[%s1 + $0x58] sm:$0xf]
  %v68 = vld [vmem:[%s1 + $0x5c] sm:$0xf]
  %v69 = vld [vmem:[%s1 + $0x60] sm:$0xf]
  %v70 = vld [vmem:[%s1 + $0x64] sm:$0xf]
  %v71 = vld [vmem:[%s1 + $0x68] sm:$0xf]
  %v72 = vld [vmem:[%s1 + $0x6c] sm:$0xf]
  %v73 = vld [vmem:[%s1 + $0x70] sm:$0xf]
  %v74 = vld [vmem:[%s1 + $0x74] sm:$0xf]
  %v75 = vld [vmem:[%s1 + $0x78] sm:$0xf]
  %v76 = vld [vmem:[%s1 + $0x7c] sm:$0xf]
  %v77 = vld [vmem:[%s1 + $0x80] sm:$0xf]
  %v78 = vld [vmem:[%s1 + $0x84] sm:$0xf]
  %v79 = vld [vmem:[%s1 + $0x88] sm:$0xf]
  %v80 = vld [vmem:[%s1 + $0x8c] sm:$0xf]
  %v81 = vld [vmem:[%s1 + $0x90] sm:$0xf]
  %v82 = vld [vmem:[%s1 + $0x94] sm:$0xf]
  %v83 = vld [vmem:[%s1 + $0x98] sm:$0xf]
  %v84 = vld [vmem:[%s1 + $0x9c] sm:$0xf]
  %v85 = vld [vmem:[%s1 + $0xa0] sm:$0xf]
  %v86 = vld [vmem:[%s1 + $0xa4] sm:$0xf]
  %v87 = vld [vmem:[%s1 + $0xa8] sm:$0xf]
  %v88 = vld [vmem:[%s1 + $0xac] sm:$0xf]
  %v89 = vld [vmem:[%s1 + $0xb0] sm:$0xf]
  %v90 = vld [vmem:[%s1 + $0xb4] sm:$0xf]
  %v91 = vld [vmem:[%s1 + $0xb8] sm:$0xf]
  %v92 = vld [vmem:[%s1 + $0xbc] sm:$0xf]
  %v93 = vld [vmem:[%s1 + $0xc0] sm:$0xf]
  %v94 = vld [vmem:[%s1 + $0xc4] sm:$0xf]
  %v95 = vld [vmem:[%s1 + $0xc8] sm:$0xf]
  %v96 = vld [vmem:[%s1 + $0xcc] sm:$0xf]
  %v97 = vld [vmem:[%s1 + $0xd0] sm:$0xf]
  %v98 = vld [vmem:[%s1 + $0xd4] sm:$0xf]
  %v99 = vld [vmem:[%s1 + $0xd8] sm:$0xf]
  %v100 = vld [vmem:[%s1 + $0xdc] sm:$0xf]
  %v101 = vld [vmem:[%s1 + $0xe0] sm:$0xf]
  %v102 = vld [vmem:[%s1 + $0xe4] sm:$0xf]
  %v103 = vld [vmem:[%s1 + $0xe8] sm:$0xf]
  %v104 = vld [vmem:[%s1 + $0xec] sm:$0xf]
  %v105 = vld [vmem:[%s1 + $0xf0] sm:$0xf]
  %v106 = vld [vmem:[%s1 + $0xf4] sm:$0xf]
  %v107 = vld [vmem:[%s1 + $0xf8] sm:$0xf]
  %v108 = vld [vmem:[%s1 + $0xfc] sm:$0xf]
  %v109 = vld [vmem:[%s1 + $0x100] sm:$0xf]
  %v110 = vld [vmem:[%s1 + $0x104] sm:$0xf]
  %v111 = vld [vmem:[%s1 + $0x108] sm:$0xf]
  %v112 = vld [vmem:[%s1 + $0x10c] sm:$0xf]
  %v113 = vld [vmem:[%s1 + $0x110] sm:$0xf]
  %v114 = vld [vmem:[%s1 + $0x114] sm:$0xf]
  %v115 = vld [vmem:[%s1 + $0x118] sm:$0xf]
  %v116 = vld [vmem:[%s1 + $0x11c] sm:$0xf]
  %v141 = vunpack.c.l.b16 %v21
  %v142 = vunpack.c.h.b16 %v21
  %v143 = vunpack.c.l.b16 %v22
  %v144 = vunpack.c.h.b16 %v22
  %v145 = vunpack.c.l.b16 %v23
  %v146 = vunpack.c.l.b16 %v24
  %v147 = vunpack.c.h.b16 %v24
  %v148 = vunpack.c.l.b16 %v25
  %v149 = vunpack.c.h.b16 %v25
  %v150 = vunpack.c.l.b16 %v26
  %v151 = vunpack.c.l.b16 %v27
  %v152 = vunpack.c.h.b16 %v27
  %v153 = vunpack.c.l.b16 %v28
  %v154 = vunpack.c.h.b16 %v28
  %v155 = vunpack.c.l.b16 %v29
  %v156 = vunpack.c.l.b16 %v30
  %v157 = vunpack.c.h.b16 %v30
  %v158 = vunpack.c.l.b16 %v31
  %v159 = vunpack.c.h.b16 %v31
  %v160 = vunpack.c.l.b16 %v32
  %v161 = vunpack.c.l.b16 %v33
  %v162 = vunpack.c.h.b16 %v33
  %v163 = vunpack.c.l.b16 %v34
  %v164 = vunpack.c.h.b16 %v34
  %v165 = vunpack.c.l.b16 %v35
  %v166 = vunpack.c.l.b16 %v36
  %v167 = vunpack.c.h.b16 %v36
  %v168 = vunpack.c.l.b16 %v37
  %v169 = vunpack.c.h.b16 %v37
  %v170 = vunpack.c.l.b16 %v38
  %v171 = vunpack.c.l.b16 %v39
  %v172 = vunpack.c.h.b16 %v39
  %v173 = vunpack.c.l.b16 %v40
  %v174 = vunpack.c.h.b16 %v40
  %v175 = vunpack.c.l.b16 %v41
  %v176 = vunpack.c.l.b16 %v42
  %v177 = vunpack.c.h.b16 %v42
  %v178 = vunpack.c.l.b16 %v43
  %v179 = vunpack.c.h.b16 %v43
  %v180 = vunpack.c.l.b16 %v44
  %v181 = vpack.c.b16 %v146, %v141
  %v182 = vpack.c.b16 %v147, %v142
  %v183 = vpack.c.b16 %v148, %v143
  %v184 = vpack.c.b16 %v149, %v144
  %v185 = vpack.c.b16 %v150, %v145
  %v186 = vpack.c.b16 %v156, %v151
  %v187 = vpack.c.b16 %v157, %v152
  %v188 = vpack.c.b16 %v158, %v153
  %v189 = vpack.c.b16 %v159, %v154
  %v190 = vpack.c.b16 %v160, %v155
  %v191 = vpack.c.b16 %v166, %v161
  %v192 = vpack.c.b16 %v167, %v162
  %v193 = vpack.c.b16 %v168, %v163
  %v194 = vpack.c.b16 %v169, %v164
  %v195 = vpack.c.b16 %v170, %v165
  %v196 = vpack.c.b16 %v176, %v171
  %v197 = vpack.c.b16 %v177, %v172
  %v198 = vpack.c.b16 %v178, %v173
  %v199 = vpack.c.b16 %v179, %v174
  %v200 = vpack.c.b16 %v180, %v175
  %v289 = vunpack.c.l.b16 %v45
  %v290 = vunpack.c.l.b16 %v46
  %v291 = vunpack.c.l.b16 %v47
  %v292 = vunpack.c.l.b16 %v48
  %v293 = vunpack.c.l.b16 %v49
  %v294 = vunpack.c.l.b16 %v50
  %v295 = vunpack.c.l.b16 %v51
  %v296 = vunpack.c.l.b16 %v52
  %v297 = vunpack.c.l.b16 %v53
  %v298 = vunpack.c.l.b16 %v54
  %v299 = vunpack.c.l.b16 %v55
  %v300 = vunpack.c.l.b16 %v56
  %v301 = vunpack.c.l.b16 %v57
  %v302 = vunpack.c.l.b16 %v58
  %v303 = vunpack.c.l.b16 %v59
  %v304 = vunpack.c.l.b16 %v60
  %v305 = vunpack.c.l.b16 %v61
  %v306 = vunpack.c.l.b16 %v62
  %v307 = vunpack.c.l.b16 %v63
  %v308 = vunpack.c.l.b16 %v64
  %v309 = vunpack.c.l.b16 %v65
  %v310 = vunpack.c.l.b16 %v66
  %v311 = vunpack.c.l.b16 %v67
  %v312 = vunpack.c.l.b16 %v68
  %v313 = vunpack.c.l.b16 %v69
  %v314 = vunpack.c.l.b16 %v70
  %v315 = vunpack.c.l.b16 %v71
  %v316 = vunpack.c.l.b16 %v72
  %v317 = vunpack.c.l.b16 %v73
  %v318 = vunpack.c.l.b16 %v74
  %v319 = vunpack.c.l.b16 %v75
  %v320 = vunpack.c.l.b16 %v76
  %v321 = vunpack.c.l.b16 %v77
  %v322 = vunpack.c.l.b16 %v78
  %v323 = vunpack.c.l.b16 %v79
  %v324 = vunpack.c.l.b16 %v80
  %v325 = vunpack.c.l.b16 %v81
  %v326 = vunpack.c.l.b16 %v82
  %v327 = vunpack.c.l.b16 %v83
  %v328 = vunpack.c.l.b16 %v84
  %v329 = vunpack.c.l.b16 %v85
  %v330 = vunpack.c.l.b16 %v86
  %v331 = vunpack.c.l.b16 %v87
  %v332 = vunpack.c.l.b16 %v88
  %v333 = vunpack.c.l.b16 %v89
  %v334 = vunpack.c.l.b16 %v90
  %v335 = vunpack.c.l.b16 %v91
  %v336 = vunpack.c.l.b16 %v92
  %v337 = vunpack.c.l.b16 %v93
  %v338 = vunpack.c.l.b16 %v94
  %v339 = vunpack.c.l.b16 %v95
  %v340 = vunpack.c.l.b16 %v96
  %v341 = vunpack.c.l.b16 %v97
  %v342 = vunpack.c.l.b16 %v98
  %v343 = vunpack.c.l.b16 %v99
  %v344 = vunpack.c.l.b16 %v100
  %v345 = vunpack.c.l.b16 %v101
  %v346 = vunpack.c.l.b16 %v102
  %v347 = vunpack.c.l.b16 %v103
  %v348 = vunpack.c.l.b16 %v104
  %v349 = vunpack.c.l.b16 %v105
  %v350 = vunpack.c.l.b16 %v106
  %v351 = vunpack.c.l.b16 %v107
  %v352 = vunpack.c.l.b16 %v108
  %v353 = vunpack.c.l.b16 %v109
  %v354 = vunpack.c.l.b16 %v110
  %v355 = vunpack.c.l.b16 %v111
  %v356 = vunpack.c.l.b16 %v112
  %v357 = vunpack.c.l.b16 %v113
  %v358 = vunpack.c.l.b16 %v114
  %v359 = vunpack.c.l.b16 %v115
  %v360 = vunpack.c.l.b16 %v116
  %v361 = vpack.c.b16 %v290, %v289
  %v362 = vpack.c.b16 %v292, %v291
  %v363 = vpack.c.b16 %v294, %v293
  %v364 = vpack.c.b16 %v296, %v295
  %v365 = vpack.c.b16 %v298, %v297
  %v366 = vpack.c.b16 %v300, %v299
  %v367 = vpack.c.b16 %v302, %v301
  %v368 = vpack.c.b16 %v304, %v303
  %v369 = vpack.c.b16 %v306, %v305
  %v370 = vpack.c.b16 %v308, %v307
  %v371 = vpack.c.b16 %v310, %v309
  %v372 = vpack.c.b16 %v312, %v311
  %v373 = vpack.c.b16 %v314, %v313
  %v374 = vpack.c.b16 %v316, %v315
  %v375 = vpack.c.b16 %v318, %v317
  %v376 = vpack.c.b16 %v320, %v319
  %v377 = vpack.c.b16 %v322, %v321
  %v378 = vpack.c.b16 %v324, %v323
  %v379 = vpack.c.b16 %v326, %v325
  %v380 = vpack.c.b16 %v328, %v327
  %v381 = vpack.c.b16 %v330, %v329
  %v382 = vpack.c.b16 %v332, %v331
  %v383 = vpack.c.b16 %v334, %v333
  %v384 = vpack.c.b16 %v336, %v335
  %v385 = vpack.c.b16 %v338, %v337
  %v386 = vpack.c.b16 %v340, %v339
  %v387 = vpack.c.b16 %v342, %v341
  %v388 = vpack.c.b16 %v344, %v343
  %v389 = vpack.c.b16 %v346, %v345
  %v390 = vpack.c.b16 %v348, %v347
  %v391 = vpack.c.b16 %v350, %v349
  %v392 = vpack.c.b16 %v352, %v351
  %v393 = vpack.c.b16 %v354, %v353
  %v394 = vpack.c.b16 %v356, %v355
  %v395 = vpack.c.b16 %v358, %v357
  %v396 = vpack.c.b16 %v360, %v359
  %vm433 = vcmask 523264
  %v435 = vsel %vm433, %v185, 0
  %v438 = vsel %vm433, %v190, 0
  %v441 = vsel %vm433, %v195, 0
  %v444 = vsel %vm433, %v200, 0
  %446 = vmatprep.subr.bf16.mxu0 0
  %447 = vmatpush1.bf16.msra.mxu0 %v361
  %448 = vmatprep.subr.bf16.mxu0 0
  %449 = vmatpush1.bf16.msra.mxu0 %v362
  %450 = vmatprep.subr.bf16.mxu0 0
  %451 = vmatpush1.bf16.msra.mxu0 %v363
  %452 = vmatprep.subr.bf16.mxu0 0
  %453 = vmatpush1.bf16.msra.mxu0 %v364
  %454 = vmatprep.subr.bf16.mxu0 0
  %455 = vmatpush1.bf16.msra.mxu0 %v365
  %456 = vmatprep.subr.bf16.mxu0 0
  %457 = vmatpush1.bf16.msra.mxu0 %v366
  %458 = vmatprep.subr.bf16.mxu0 0
  %459 = vmatpush1.bf16.msra.mxu0 %v367
  %460 = vmatprep.subr.bf16.mxu0 0
  %461 = vmatpush1.bf16.msra.mxu0 %v368
  %462 = vmatprep.subr.bf16.mxu0 0
  %463 = vmatpush1.bf16.msra.mxu0 %v369
  %464 = vmatprep.subr.bf16.mxu0 0
  %465 = vmatpush1.bf16.msra.mxu0 %v370
  %466 = vmatprep.subr.bf16.mxu0 0
  %467 = vmatpush1.bf16.msra.mxu0 %v371
  %468 = vmatprep.subr.bf16.mxu0 0
  %469 = vmatpush1.bf16.msra.mxu0 %v372
  %470 = vmatprep.subr.bf16.mxu0 0
  %471 = vmatpush1.bf16.msra.mxu0 %v373
  %472 = vmatprep.subr.bf16.mxu0 0
  %473 = vmatpush1.bf16.msra.mxu0 %v374
  %474 = vmatprep.subr.bf16.mxu0 0
  %475 = vmatpush1.bf16.msra.mxu0 %v375
  %476 = vmatprep.subr.bf16.mxu0 0
  %477 = vmatpush1.bf16.msra.mxu0 %v376
  %478 = vmatprep.mubr.bf16.mxu0 %v182
  %479 = vmatmul.mubr.bf16.gmra.mrb[0].mxu0 %v181
  %v480 = vpop.f32.mrb[0].mxu0
  %v481 = vadd.f32 0.0, %v480
  %v482 = vpop.f32.mrb[0].mxu0
  %v483 = vpop.f32.mrb[0].mxu0
  %v484 = vadd.f32 0.0, %v483
  %v485 = vpop.f32.mrb[0].mxu0
  %486 = vmatprep.mubr.bf16.mxu0 %v187
  %487 = vmatmul.mubr.bf16.gmra.mrb[0].mxu0 %v186
  %v488 = vpop.f32.mrb[0].mxu0
  %v489 = vadd.f32 0.0, %v488
  %v490 = vpop.f32.mrb[0].mxu0
  %v491 = vpop.f32.mrb[0].mxu0
  %v492 = vadd.f32 0.0, %v491
  %v493 = vpop.f32.mrb[0].mxu0
  %494 = vmatprep.mubr.bf16.mxu0 %v192
  %495 = vmatmul.mubr.bf16.gmra.mrb[0].mxu0 %v191
  %v496 = vpop.f32.mrb[0].mxu0
  %v497 = vadd.f32 0.0, %v496
  %v498 = vpop.f32.mrb[0].mxu0
  %v499 = vpop.f32.mrb[0].mxu0
  %v500 = vadd.f32 0.0, %v499
  %v501 = vpop.f32.mrb[0].mxu0
  %502 = vmatprep.mubr.bf16.mxu0 %v197
  %503 = vmatmul.mubr.bf16.gmra.mrb[0].mxu0 %v196
  %v504 = vpop.f32.mrb[0].mxu0
  %v505 = vadd.f32 0.0, %v504
  %v506 = vpop.f32.mrb[0].mxu0
  %v507 = vpop.f32.mrb[0].mxu0
  %v508 = vadd.f32 0.0, %v507
  %v509 = vpop.f32.mrb[0].mxu0
  %510 = vdwg.mxu0
  %511 = vmatprep.subr.bf16.mxu0 0
  %512 = vmatpush1.bf16.msra.mxu0 %v377
  %513 = vmatprep.subr.bf16.mxu0 0
  %514 = vmatpush1.bf16.msra.mxu0 %v378
  %515 = vmatprep.subr.bf16.mxu0 0
  %516 = vmatpush1.bf16.msra.mxu0 %v379
  %517 = vmatprep.subr.bf16.mxu0 0
  %518 = vmatpush1.bf16.msra.mxu0 %v380
  %519 = vmatprep.subr.bf16.mxu0 0
  %520 = vmatpush1.bf16.msra.mxu0 %v381
  %521 = vmatprep.subr.bf16.mxu0 0
  %522 = vmatpush1.bf16.msra.mxu0 %v382
  %523 = vmatprep.subr.bf16.mxu0 0
  %524 = vmatpush1.bf16.msra.mxu0 %v383
  %525 = vmatprep.subr.bf16.mxu0 0
  %526 = vmatpush1.bf16.msra.mxu0 %v384
  %527 = vmatprep.subr.bf16.mxu0 0
  %528 = vmatpush1.bf16.msra.mxu0 %v385
  %529 = vmatprep.subr.bf16.mxu0 0
  %530 = vmatpush1.bf16.msra.mxu0 %v386
  %531 = vmatprep.subr.bf16.mxu0 0
  %532 = vmatpush1.bf16.msra.mxu0 %v387
  %533 = vmatprep.subr.bf16.mxu0 0
  %534 = vmatpush1.bf16.msra.mxu0 %v388
  %535 = vmatprep.subr.bf16.mxu0 0
  %536 = vmatpush1.bf16.msra.mxu0 %v389
  %537 = vmatprep.subr.bf16.mxu0 0
  %538 = vmatpush1.bf16.msra.mxu0 %v390
  %539 = vmatprep.subr.bf16.mxu0 0
  %540 = vmatpush1.bf16.msra.mxu0 %v391
  %541 = vmatprep.subr.bf16.mxu0 0
  %542 = vmatpush1.bf16.msra.mxu0 %v392
  %543 = vmatprep.mubr.bf16.mxu0 %v184
  %544 = vmatmul.mubr.bf16.gmra.mrb[0].mxu0 %v183
  %v545 = vpop.f32.mrb[0].mxu0
  %v546 = vadd.f32 %v481, %v545
  %v547 = vpop.f32.mrb[0].mxu0
  %v548 = vpop.f32.mrb[0].mxu0
  %v549 = vadd.f32 %v484, %v548
  %v550 = vpop.f32.mrb[0].mxu0
  %551 = vmatprep.mubr.bf16.mxu0 %v189
  %552 = vmatmul.mubr.bf16.gmra.mrb[0].mxu0 %v188
  %v553 = vpop.f32.mrb[0].mxu0
  %v554 = vadd.f32 %v489, %v553
  %v555 = vpop.f32.mrb[0].mxu0
  %v556 = vpop.f32.mrb[0].mxu0
  %v557 = vadd.f32 %v492, %v556
  %v558 = vpop.f32.mrb[0].mxu0
  %559 = vmatprep.mubr.bf16.mxu0 %v194
  %560 = vmatmul.mubr.bf16.gmra.mrb[0].mxu0 %v193
  %v561 = vpop.f32.mrb[0].mxu0
  %v562 = vadd.f32 %v497, %v561
  %v563 = vpop.f32.mrb[0].mxu0
  %v564 = vpop.f32.mrb[0].mxu0
  %v565 = vadd.f32 %v500, %v564
  %v566 = vpop.f32.mrb[0].mxu0
  %567 = vmatprep.mubr.bf16.mxu0 %v199
  %568 = vmatmul.mubr.bf16.gmra.mrb[0].mxu0 %v198
  %v569 = vpop.f32.mrb[0].mxu0
  %v570 = vadd.f32 %v505, %v569
  %v571 = vpop.f32.mrb[0].mxu0
  %v572 = vpop.f32.mrb[0].mxu0
  %v573 = vadd.f32 %v508, %v572
  %v574 = vpop.f32.mrb[0].mxu0
  %575 = vdwg.mxu0
  %576 = vmatprep.subr.bf16.mxu0 0
  %577 = vmatpush1.bf16.msra.mxu0 %v393
  %578 = vmatprep.subr.bf16.mxu0 0
  %579 = vmatpush1.bf16.msra.mxu0 %v394
  %580 = vmatprep.subr.bf16.mxu0 0
  %581 = vmatpush1.bf16.msra.mxu0 %v395
  %582 = vmatprep.subr.bf16.mxu0 0
  %583 = vmatpush1.bf16.msra.mxu0 %v396
  %584 = vmatprep.subr.bf16.mxu0 0
  %585 = vmatpush1.bf16.msra.mxu0 0
  %586 = vmatprep.subr.bf16.mxu0 0
  %587 = vmatpush1.bf16.msra.mxu0 0
  %588 = vmatprep.subr.bf16.mxu0 0
  %589 = vmatpush1.bf16.msra.mxu0 0
  %590 = vmatprep.subr.bf16.mxu0 0
  %591 = vmatpush1.bf16.msra.mxu0 0
  %592 = vmatprep.subr.bf16.mxu0 0
  %593 = vmatpush1.bf16.msra.mxu0 0
  %594 = vmatprep.subr.bf16.mxu0 0
  %595 = vmatpush1.bf16.msra.mxu0 0
  %596 = vmatprep.subr.bf16.mxu0 0
  %597 = vmatpush1.bf16.msra.mxu0 0
  %598 = vmatprep.subr.bf16.mxu0 0
  %599 = vmatpush1.bf16.msra.mxu0 0
  %600 = vmatprep.subr.bf16.mxu0 0
  %601 = vmatpush1.bf16.msra.mxu0 0
  %602 = vmatprep.subr.bf16.mxu0 0
  %603 = vmatpush1.bf16.msra.mxu0 0
  %604 = vmatprep.subr.bf16.mxu0 0
  %605 = vmatpush1.bf16.msra.mxu0 0
  %606 = vmatprep.subr.bf16.mxu0 0
  %607 = vmatpush1.bf16.msra.mxu0 0
  %608 = vmatprep.mubr.bf16.mxu0 0
  %609 = vmatmul.mubr.bf16.gmra.mrb[0].mxu0 %v435
  %v610 = vpop.f32.mrb[0].mxu0
  %v611 = vadd.f32 %v546, %v610
  %v612 = vpop.f32.mrb[0].mxu0
  %v613 = vpop.f32.mrb[0].mxu0
  %v614 = vadd.f32 %v549, %v613
  %v615 = vpop.f32.mrb[0].mxu0
  %616 = vmatprep.mubr.bf16.mxu0 0
  %617 = vmatmul.mubr.bf16.gmra.mrb[0].mxu0 %v438
  %v618 = vpop.f32.mrb[0].mxu0
  %v619 = vadd.f32 %v554, %v618
  %v620 = vpop.f32.mrb[0].mxu0
  %v621 = vpop.f32.mrb[0].mxu0
  %v622 = vadd.f32 %v557, %v621
  %v623 = vpop.f32.mrb[0].mxu0
  %624 = vmatprep.mubr.bf16.mxu0 0
  %625 = vmatmul.mubr.bf16.gmra.mrb[0].mxu0 %v441
  %v626 = vpop.f32.mrb[0].mxu0
  %v627 = vadd.f32 %v562, %v626
  %v628 = vpop.f32.mrb[0].mxu0
  %v629 = vpop.f32.mrb[0].mxu0
  %v630 = vadd.f32 %v565, %v629
  %v631 = vpop.f32.mrb[0].mxu0
  %632 = vmatprep.mubr.bf16.mxu0 0
  %633 = vmatmul.mubr.bf16.gmra.mrb[0].mxu0 %v444
  %v634 = vpop.f32.mrb[0].mxu0
  %v635 = vadd.f32 %v570, %v634
  %v636 = vpop.f32.mrb[0].mxu0
  %v637 = vpop.f32.mrb[0].mxu0
  %v638 = vadd.f32 %v573, %v637
  %v639 = vpop.f32.mrb[0].mxu0
  %640 = vdwg.mxu0
  %v641 = vld [vmem:[%s2] sm:$0xff]
  %v642 = vld [vmem:[%s2 + $0x8] sm:$0xff]
  %v643 = vld [vmem:[%s2 + $0x10] sm:$0xff]
  %v644 = vld [vmem:[%s2 + $0x18] sm:$0xff]
  %v645 = vld [vmem:[%s2 + $0x20] sm:$0xff]
  %v646 = vld [vmem:[%s2 + $0x28] sm:$0xff]
  %v647 = vld [vmem:[%s2 + $0x30] sm:$0xff]
  %v648 = vld [vmem:[%s2 + $0x38] sm:$0xff]
  %650 = vset.pattern.permute.xlu0 0
  %651 = vperm.xlu0 %650, %v641
  %v652 = vpop.permute.xlu0 %651
  %655 = vset.pattern.permute.xlu0 0
  %656 = vperm.xlu0 %655, %v642
  %v657 = vpop.permute.xlu0 %656
  %660 = vset.pattern.permute.xlu0 0
  %661 = vperm.xlu0 %660, %v643
  %v662 = vpop.permute.xlu0 %661
  %665 = vset.pattern.permute.xlu0 0
  %666 = vperm.xlu0 %665, %v644
  %v667 = vpop.permute.xlu0 %666
  %670 = vset.pattern.permute.xlu0 0
  %671 = vperm.xlu0 %670, %v645
  %v672 = vpop.permute.xlu0 %671
  %675 = vset.pattern.permute.xlu0 0
  %676 = vperm.xlu0 %675, %v646
  %v677 = vpop.permute.xlu0 %676
  %680 = vset.pattern.permute.xlu0 0
  %681 = vperm.xlu0 %680, %v647
  %v682 = vpop.permute.xlu0 %681
  %685 = vset.pattern.permute.xlu0 0
  %686 = vperm.xlu0 %685, %v648
  %v687 = vpop.permute.xlu0 %686
  %v689 = vmul.f32 %v611, %v652
  %v690 = vmul.f32 %v614, %v657
  %v691 = vmul.f32 %v619, %v662
  %v692 = vmul.f32 %v622, %v667
  %v693 = vmul.f32 %v627, %v672
  %v694 = vmul.f32 %v630, %v677
  %v695 = vmul.f32 %v635, %v682
  %v696 = vmul.f32 %v638, %v687
  %v697 = vld [vmem:[%s3] sm:$0xff]
  %v698 = vld [vmem:[%s3 + $0x8] sm:$0xff]
  %v699 = vld [vmem:[%s3 + $0x10] sm:$0xff]
  %v700 = vld [vmem:[%s3 + $0x18] sm:$0xff]
  %v701 = vld [vmem:[%s3 + $0x20] sm:$0xff]
  %v702 = vld [vmem:[%s3 + $0x28] sm:$0xff]
  %v703 = vld [vmem:[%s3 + $0x30] sm:$0xff]
  %v704 = vld [vmem:[%s3 + $0x38] sm:$0xff]
  %706 = vset.pattern.permute.xlu0 0
  %707 = vperm.xlu0 %706, %v697
  %v708 = vpop.permute.xlu0 %707
  %711 = vset.pattern.permute.xlu0 0
  %712 = vperm.xlu0 %711, %v698
  %v713 = vpop.permute.xlu0 %712
  %716 = vset.pattern.permute.xlu0 0
  %717 = vperm.xlu0 %716, %v699
  %v718 = vpop.permute.xlu0 %717
  %721 = vset.pattern.permute.xlu0 0
  %722 = vperm.xlu0 %721, %v700
  %v723 = vpop.permute.xlu0 %722
  %726 = vset.pattern.permute.xlu0 0
  %727 = vperm.xlu0 %726, %v701
  %v728 = vpop.permute.xlu0 %727
  %731 = vset.pattern.permute.xlu0 0
  %732 = vperm.xlu0 %731, %v702
  %v733 = vpop.permute.xlu0 %732
  %736 = vset.pattern.permute.xlu0 0
  %737 = vperm.xlu0 %736, %v703
  %v738 = vpop.permute.xlu0 %737
  %741 = vset.pattern.permute.xlu0 0
  %742 = vperm.xlu0 %741, %v704
  %v743 = vpop.permute.xlu0 %742
  %v745 = vadd.f32 %v689, %v708
  %v746 = vadd.f32 %v690, %v713
  %v747 = vadd.f32 %v691, %v718
  %v748 = vadd.f32 %v692, %v723
  %v749 = vadd.f32 %v693, %v728
  %v750 = vadd.f32 %v694, %v733
  %v751 = vadd.f32 %v695, %v738
  %v752 = vadd.f32 %v696, %v743
  %v753 = vld [vmem:[%s4] sm:$0xf]
  %v754 = vld [vmem:[%s4 + $0x4] sm:$0xf]
  %v755 = vld [vmem:[%s4 + $0x8] sm:$0xf]
  %v756 = vld [vmem:[%s4 + $0xc] sm:$0xf]
  %v757 = vld [vmem:[%s4 + $0x10] sm:$0xf]
  %v758 = vld [vmem:[%s4 + $0x14] sm:$0xf]
  %v759 = vld [vmem:[%s4 + $0x18] sm:$0xf]
  %v760 = vld [vmem:[%s4 + $0x1c] sm:$0xf]
  %v761 = vunpack.c.l.bf16 %v753
  %v762 = vunpack.c.l.bf16 %v754
  %v763 = vunpack.c.l.bf16 %v755
  %v764 = vunpack.c.l.bf16 %v756
  %v765 = vunpack.c.l.bf16 %v757
  %v766 = vunpack.c.l.bf16 %v758
  %v767 = vunpack.c.l.bf16 %v759
  %v768 = vunpack.c.l.bf16 %v760
  %v769 = vadd.f32 %v745, %v761
  %v770 = vadd.f32 %v746, %v762
  %v771 = vadd.f32 %v747, %v763
  %v772 = vadd.f32 %v748, %v764
  %v773 = vadd.f32 %v749, %v765
  %v774 = vadd.f32 %v750, %v766
  %v775 = vadd.f32 %v751, %v767
  %v776 = vadd.f32 %v752, %v768
  %v777 = vmax.f32 %v769, 0.0
  %v778 = vmax.f32 %v770, 0.0
  %v779 = vmax.f32 %v771, 0.0
  %v780 = vmax.f32 %v772, 0.0
  %v781 = vmax.f32 %v773, 0.0
  %v782 = vmax.f32 %v774, 0.0
  %v783 = vmax.f32 %v775, 0.0
  %v784 = vmax.f32 %v776, 0.0
  %v785 = vpack.c.bf16 %v778, %v777
  %v786 = vpack.c.bf16 %v780, %v779
  %v787 = vpack.c.bf16 %v782, %v781
  %v788 = vpack.c.bf16 %v784, %v783
  %v793 = vunpack.c.l.b16 %v785
  %v794 = vunpack.c.h.b16 %v785
  %v795 = vunpack.c.l.b16 %v786
  %v796 = vunpack.c.h.b16 %v786
  %v797 = vunpack.c.l.b16 %v787
  %v798 = vunpack.c.h.b16 %v787
  %v799 = vunpack.c.l.b16 %v788
  %v800 = vunpack.c.h.b16 %v788
  %v801 = vpack.c.b16 %v793, %v793
  %v802 = vpack.c.b16 %v794, %v794
  %v803 = vpack.c.b16 %v795, %v795
  %v804 = vpack.c.b16 %v796, %v796
  %v805 = vpack.c.b16 %v797, %v797
  %v806 = vpack.c.b16 %v798, %v798
  %v807 = vpack.c.b16 %v799, %v799
  %v808 = vpack.c.b16 %v800, %v800
  %vm817 = vcmask 257024
  %818 = vst.msk [vmem:[%s5] sm:$0xf] %vm817, %v801
  %819 = vst.msk [vmem:[%s5 + $0x4] sm:$0xf] %vm817, %v802
  %820 = vst.msk [vmem:[%s5 + $0x8] sm:$0xf] %vm817, %v803
  %821 = vst.msk [vmem:[%s5 + $0xc] sm:$0xf] %vm817, %v804
  %822 = vst.msk [vmem:[%s5 + $0x10] sm:$0xf] %vm817, %v805
  %823 = vst.msk [vmem:[%s5 + $0x14] sm:$0xf] %vm817, %v806
  %824 = vst.msk [vmem:[%s5 + $0x18] sm:$0xf] %vm817, %v807
  %825 = vst.msk [vmem:[%s5 + $0x1c] sm:$0xf] %vm817, %v808
  // Predicated region
  $region22: #{_lambda_.18} parent=0 // pred_check
    _
  $region23: #{_lambda_.18} parent=0 // pred_check_branch
    %827 = sbr.rel (0) target = $region25
  $region24: #{_lambda_.18} parent=0 // pred_region
    _
  $region25: #{_lambda_.18} parent=0 // pred_fallthru
    _
  // Predicated region
  $region26: #{_lambda_.18} parent=0 // pred_check
    _
  $region27: #{_lambda_.18} parent=0 // pred_check_branch
    %829 = sbr.rel (0) target = $region29
  $region28: #{_lambda_.18} parent=0 // pred_region
    _
  $region29: #{_lambda_.18} parent=0 // pred_fallthru
    _

// kernel: _lambda_.19
$region0: #{_lambda_.19}
  #allocation0 [shape = 'u32[]', space=smem, size = 0x4, offset = 0x4, fixed_abs, tag = 'smem constant byte address 0x4 - core index']
  #allocation1 [shape = 'u32[144,128]{1,0:T(1,128)}', space=vmem, size = 0x12000, scoped, tag = 'internal scratch']
  %s0 = inlined_call_operand.vmem [shape: bf16[64,2,16], index: 0, kind: input, shape index: {}]
  %s1 = inlined_call_operand.vmem [shape: f32[10,64], index: 1, kind: input, shape index: {}]
  %s2 = inlined_call_operand.vmem [shape: f32[10,1], index: 2, kind: input, shape index: {}]
  %s3 = inlined_call_operand.vmem [shape: f32[10,2], index: 3, kind: output, shape index: {}]
  %s4 = sld [smem:[#allocation0]]
  $region22: #{_lambda_.19} parent=0
    _
  %s6 = ssub.s32 1, %s4
  %s7 = scalar_select 0, %s6, %s4
  // Predicated region
  $region2: #{_lambda_.19} parent=0 // pred_check
    _
  $region3: #{_lambda_.19} parent=0 // pred_check_branch
    %9 = sbr.rel (0) target = $region5
  $region4: #{_lambda_.19} parent=0 // pred_region
    _
  $region5: #{_lambda_.19} parent=0 // pred_fallthru
    _
  // Predicated region
  $region6: #{_lambda_.19} parent=0 // pred_check
    _
  $region7: #{_lambda_.19} parent=0 // pred_check_branch
    %11 = sbr.rel (0) target = $region9
  $region8: #{_lambda_.19} parent=0 // pred_region
    _
  $region9: #{_lambda_.19} parent=0 // pred_fallthru
    _
  // Predicated region
  $region10: #{_lambda_.19} parent=0 // pred_check
    _
  $region11: #{_lambda_.19} parent=0 // pred_check_branch
    %13 = sbr.rel (0) target = $region13
  $region12: #{_lambda_.19} parent=0 // pred_region
    _
  $region13: #{_lambda_.19} parent=0 // pred_fallthru
    _
  %v14 = vld [vmem:[%s0] sm:$0x1]
  %v15 = vld [vmem:[%s0 + $0x1] sm:$0x1]
  %v16 = vld [vmem:[%s0 + $0x2] sm:$0x1]
  %v17 = vld [vmem:[%s0 + $0x3] sm:$0x1]
  %v18 = vld [vmem:[%s0 + $0x4] sm:$0x1]
  %v19 = vld [vmem:[%s0 + $0x5] sm:$0x1]
  %v20 = vld [vmem:[%s0 + $0x6] sm:$0x1]
  %v21 = vld [vmem:[%s0 + $0x7] sm:$0x1]
  %v22 = vld [vmem:[%s0 + $0x8] sm:$0x1]
  %v23 = vld [vmem:[%s0 + $0x9] sm:$0x1]
  %v24 = vld [vmem:[%s0 + $0xa] sm:$0x1]
  %v25 = vld [vmem:[%s0 + $0xb] sm:$0x1]
  %v26 = vld [vmem:[%s0 + $0xc] sm:$0x1]
  %v27 = vld [vmem:[%s0 + $0xd] sm:$0x1]
  %v28 = vld [vmem:[%s0 + $0xe] sm:$0x1]
  %v29 = vld [vmem:[%s0 + $0xf] sm:$0x1]
  %v30 = vld [vmem:[%s0 + $0x10] sm:$0x1]
  %v31 = vld [vmem:[%s0 + $0x11] sm:$0x1]
  %v32 = vld [vmem:[%s0 + $0x12] sm:$0x1]
  %v33 = vld [vmem:[%s0 + $0x13] sm:$0x1]
  %v34 = vld [vmem:[%s0 + $0x14] sm:$0x1]
  %v35 = vld [vmem:[%s0 + $0x15] sm:$0x1]
  %v36 = vld [vmem:[%s0 + $0x16] sm:$0x1]
  %v37 = vld [vmem:[%s0 + $0x17] sm:$0x1]
  %v38 = vld [vmem:[%s0 + $0x18] sm:$0x1]
  %v39 = vld [vmem:[%s0 + $0x19] sm:$0x1]
  %v40 = vld [vmem:[%s0 + $0x1a] sm:$0x1]
  %v41 = vld [vmem:[%s0 + $0x1b] sm:$0x1]
  %v42 = vld [vmem:[%s0 + $0x1c] sm:$0x1]
  %v43 = vld [vmem:[%s0 + $0x1d] sm:$0x1]
  %v44 = vld [vmem:[%s0 + $0x1e] sm:$0x1]
  %v45 = vld [vmem:[%s0 + $0x1f] sm:$0x1]
  %v46 = vld [vmem:[%s0 + $0x20] sm:$0x1]
  %v47 = vld [vmem:[%s0 + $0x21] sm:$0x1]
  %v48 = vld [vmem:[%s0 + $0x22] sm:$0x1]
  %v49 = vld [vmem:[%s0 + $0x23] sm:$0x1]
  %v50 = vld [vmem:[%s0 + $0x24] sm:$0x1]
  %v51 = vld [vmem:[%s0 + $0x25] sm:$0x1]
  %v52 = vld [vmem:[%s0 + $0x26] sm:$0x1]
  %v53 = vld [vmem:[%s0 + $0x27] sm:$0x1]
  %v54 = vld [vmem:[%s0 + $0x28] sm:$0x1]
  %v55 = vld [vmem:[%s0 + $0x29] sm:$0x1]
  %v56 = vld [vmem:[%s0 + $0x2a] sm:$0x1]
  %v57 = vld [vmem:[%s0 + $0x2b] sm:$0x1]
  %v58 = vld [vmem:[%s0 + $0x2c] sm:$0x1]
  %v59 = vld [vmem:[%s0 + $0x2d] sm:$0x1]
  %v60 = vld [vmem:[%s0 + $0x2e] sm:$0x1]
  %v61 = vld [vmem:[%s0 + $0x2f] sm:$0x1]
  %v62 = vld [vmem:[%s0 + $0x30] sm:$0x1]
  %v63 = vld [vmem:[%s0 + $0x31] sm:$0x1]
  %v64 = vld [vmem:[%s0 + $0x32] sm:$0x1]
  %v65 = vld [vmem:[%s0 + $0x33] sm:$0x1]
  %v66 = vld [vmem:[%s0 + $0x34] sm:$0x1]
  %v67 = vld [vmem:[%s0 + $0x35] sm:$0x1]
  %v68 = vld [vmem:[%s0 + $0x36] sm:$0x1]
  %v69 = vld [vmem:[%s0 + $0x37] sm:$0x1]
  %v70 = vld [vmem:[%s0 + $0x38] sm:$0x1]
  %v71 = vld [vmem:[%s0 + $0x39] sm:$0x1]
  %v72 = vld [vmem:[%s0 + $0x3a] sm:$0x1]
  %v73 = vld [vmem:[%s0 + $0x3b] sm:$0x1]
  %v74 = vld [vmem:[%s0 + $0x3c] sm:$0x1]
  %v75 = vld [vmem:[%s0 + $0x3d] sm:$0x1]
  %v76 = vld [vmem:[%s0 + $0x3e] sm:$0x1]
  %v77 = vld [vmem:[%s0 + $0x3f] sm:$0x1]
  %v78 = vunpack.c.l.bf16 %v14
  %v79 = vunpack.c.l.bf16 %v15
  %v80 = vunpack.c.l.bf16 %v16
  %v81 = vunpack.c.l.bf16 %v17
  %v82 = vunpack.c.l.bf16 %v18
  %v83 = vunpack.c.l.bf16 %v19
  %v84 = vunpack.c.l.bf16 %v20
  %v85 = vunpack.c.l.bf16 %v21
  %v86 = vunpack.c.l.bf16 %v22
  %v87 = vunpack.c.l.bf16 %v23
  %v88 = vunpack.c.l.bf16 %v24
  %v89 = vunpack.c.l.bf16 %v25
  %v90 = vunpack.c.l.bf16 %v26
  %v91 = vunpack.c.l.bf16 %v27
  %v92 = vunpack.c.l.bf16 %v28
  %v93 = vunpack.c.l.bf16 %v29
  %v94 = vunpack.c.l.bf16 %v30
  %v95 = vunpack.c.l.bf16 %v31
  %v96 = vunpack.c.l.bf16 %v32
  %v97 = vunpack.c.l.bf16 %v33
  %v98 = vunpack.c.l.bf16 %v34
  %v99 = vunpack.c.l.bf16 %v35
  %v100 = vunpack.c.l.bf16 %v36
  %v101 = vunpack.c.l.bf16 %v37
  %v102 = vunpack.c.l.bf16 %v38
  %v103 = vunpack.c.l.bf16 %v39
  %v104 = vunpack.c.l.bf16 %v40
  %v105 = vunpack.c.l.bf16 %v41
  %v106 = vunpack.c.l.bf16 %v42
  %v107 = vunpack.c.l.bf16 %v43
  %v108 = vunpack.c.l.bf16 %v44
  %v109 = vunpack.c.l.bf16 %v45
  %v110 = vunpack.c.l.bf16 %v46
  %v111 = vunpack.c.l.bf16 %v47
  %v112 = vunpack.c.l.bf16 %v48
  %v113 = vunpack.c.l.bf16 %v49
  %v114 = vunpack.c.l.bf16 %v50
  %v115 = vunpack.c.l.bf16 %v51
  %v116 = vunpack.c.l.bf16 %v52
  %v117 = vunpack.c.l.bf16 %v53
  %v118 = vunpack.c.l.bf16 %v54
  %v119 = vunpack.c.l.bf16 %v55
  %v120 = vunpack.c.l.bf16 %v56
  %v121 = vunpack.c.l.bf16 %v57
  %v122 = vunpack.c.l.bf16 %v58
  %v123 = vunpack.c.l.bf16 %v59
  %v124 = vunpack.c.l.bf16 %v60
  %v125 = vunpack.c.l.bf16 %v61
  %v126 = vunpack.c.l.bf16 %v62
  %v127 = vunpack.c.l.bf16 %v63
  %v128 = vunpack.c.l.bf16 %v64
  %v129 = vunpack.c.l.bf16 %v65
  %v130 = vunpack.c.l.bf16 %v66
  %v131 = vunpack.c.l.bf16 %v67
  %v132 = vunpack.c.l.bf16 %v68
  %v133 = vunpack.c.l.bf16 %v69
  %v134 = vunpack.c.l.bf16 %v70
  %v135 = vunpack.c.l.bf16 %v71
  %v136 = vunpack.c.l.bf16 %v72
  %v137 = vunpack.c.l.bf16 %v73
  %v138 = vunpack.c.l.bf16 %v74
  %v139 = vunpack.c.l.bf16 %v75
  %v140 = vunpack.c.l.bf16 %v76
  %v141 = vunpack.c.l.bf16 %v77
  %vm142 = vcmask 123904
  %v143 = vsel %vm142, %v78, 0.0
  %144 = vadd.xlane.f32.xlu0 %v143
  %v145 = vpop.xlane.xlu0 %144
  %v146 = vsel %vm142, %v79, 0.0
  %147 = vadd.xlane.f32.xlu0 %v146
  %v148 = vpop.xlane.xlu0 %147
  %v149 = vsel %vm142, %v80, 0.0
  %150 = vadd.xlane.f32.xlu0 %v149
  %v151 = vpop.xlane.xlu0 %150
  %v152 = vsel %vm142, %v81, 0.0
  %153 = vadd.xlane.f32.xlu0 %v152
  %v154 = vpop.xlane.xlu0 %153
  %v155 = vsel %vm142, %v82, 0.0
  %156 = vadd.xlane.f32.xlu0 %v155
  %v157 = vpop.xlane.xlu0 %156
  %v158 = vsel %vm142, %v83, 0.0
  %159 = vadd.xlane.f32.xlu0 %v158
  %v160 = vpop.xlane.xlu0 %159
  %v161 = vsel %vm142, %v84, 0.0
  %162 = vadd.xlane.f32.xlu0 %v161
  %v163 = vpop.xlane.xlu0 %162
  %v164 = vsel %vm142, %v85, 0.0
  %165 = vadd.xlane.f32.xlu0 %v164
  %v166 = vpop.xlane.xlu0 %165
  %v167 = vsel %vm142, %v86, 0.0
  %168 = vadd.xlane.f32.xlu0 %v167
  %v169 = vpop.xlane.xlu0 %168
  %v170 = vsel %vm142, %v87, 0.0
  %171 = vadd.xlane.f32.xlu0 %v170
  %v172 = vpop.xlane.xlu0 %171
  %v173 = vsel %vm142, %v88, 0.0
  %174 = vadd.xlane.f32.xlu0 %v173
  %v175 = vpop.xlane.xlu0 %174
  %v176 = vsel %vm142, %v89, 0.0
  %177 = vadd.xlane.f32.xlu0 %v176
  %v178 = vpop.xlane.xlu0 %177
  %v179 = vsel %vm142, %v90, 0.0
  %180 = vadd.xlane.f32.xlu0 %v179
  %v181 = vpop.xlane.xlu0 %180
  %v182 = vsel %vm142, %v91, 0.0
  %183 = vadd.xlane.f32.xlu0 %v182
  %v184 = vpop.xlane.xlu0 %183
  %v185 = vsel %vm142, %v92, 0.0
  %186 = vadd.xlane.f32.xlu0 %v185
  %v187 = vpop.xlane.xlu0 %186
  %v188 = vsel %vm142, %v93, 0.0
  %189 = vadd.xlane.f32.xlu0 %v188
  %v190 = vpop.xlane.xlu0 %189
  %v191 = vsel %vm142, %v94, 0.0
  %192 = vadd.xlane.f32.xlu0 %v191
  %v193 = vpop.xlane.xlu0 %192
  %v194 = vsel %vm142, %v95, 0.0
  %195 = vadd.xlane.f32.xlu0 %v194
  %v196 = vpop.xlane.xlu0 %195
  %v197 = vsel %vm142, %v96, 0.0
  %198 = vadd.xlane.f32.xlu0 %v197
  %v199 = vpop.xlane.xlu0 %198
  %v200 = vsel %vm142, %v97, 0.0
  %201 = vadd.xlane.f32.xlu0 %v200
  %v202 = vpop.xlane.xlu0 %201
  %v203 = vsel %vm142, %v98, 0.0
  %204 = vadd.xlane.f32.xlu0 %v203
  %v205 = vpop.xlane.xlu0 %204
  %v206 = vsel %vm142, %v99, 0.0
  %207 = vadd.xlane.f32.xlu0 %v206
  %v208 = vpop.xlane.xlu0 %207
  %v209 = vsel %vm142, %v100, 0.0
  %210 = vadd.xlane.f32.xlu0 %v209
  %v211 = vpop.xlane.xlu0 %210
  %v212 = vsel %vm142, %v101, 0.0
  %213 = vadd.xlane.f32.xlu0 %v212
  %v214 = vpop.xlane.xlu0 %213
  %v215 = vsel %vm142, %v102, 0.0
  %216 = vadd.xlane.f32.xlu0 %v215
  %v217 = vpop.xlane.xlu0 %216
  %v218 = vsel %vm142, %v103, 0.0
  %219 = vadd.xlane.f32.xlu0 %v218
  %v220 = vpop.xlane.xlu0 %219
  %v221 = vsel %vm142, %v104, 0.0
  %222 = vadd.xlane.f32.xlu0 %v221
  %v223 = vpop.xlane.xlu0 %222
  %v224 = vsel %vm142, %v105, 0.0
  %225 = vadd.xlane.f32.xlu0 %v224
  %v226 = vpop.xlane.xlu0 %225
  %v227 = vsel %vm142, %v106, 0.0
  %228 = vadd.xlane.f32.xlu0 %v227
  %v229 = vpop.xlane.xlu0 %228
  %v230 = vsel %vm142, %v107, 0.0
  %231 = vadd.xlane.f32.xlu0 %v230
  %v232 = vpop.xlane.xlu0 %231
  %v233 = vsel %vm142, %v108, 0.0
  %234 = vadd.xlane.f32.xlu0 %v233
  %v235 = vpop.xlane.xlu0 %234
  %v236 = vsel %vm142, %v109, 0.0
  %237 = vadd.xlane.f32.xlu0 %v236
  %v238 = vpop.xlane.xlu0 %237
  %v239 = vsel %vm142, %v110, 0.0
  %240 = vadd.xlane.f32.xlu0 %v239
  %v241 = vpop.xlane.xlu0 %240
  %v242 = vsel %vm142, %v111, 0.0
  %243 = vadd.xlane.f32.xlu0 %v242
  %v244 = vpop.xlane.xlu0 %243
  %v245 = vsel %vm142, %v112, 0.0
  %246 = vadd.xlane.f32.xlu0 %v245
  %v247 = vpop.xlane.xlu0 %246
  %v248 = vsel %vm142, %v113, 0.0
  %249 = vadd.xlane.f32.xlu0 %v248
  %v250 = vpop.xlane.xlu0 %249
  %v251 = vsel %vm142, %v114, 0.0
  %252 = vadd.xlane.f32.xlu0 %v251
  %v253 = vpop.xlane.xlu0 %252
  %v254 = vsel %vm142, %v115, 0.0
  %255 = vadd.xlane.f32.xlu0 %v254
  %v256 = vpop.xlane.xlu0 %255
  %v257 = vsel %vm142, %v116, 0.0
  %258 = vadd.xlane.f32.xlu0 %v257
  %v259 = vpop.xlane.xlu0 %258
  %v260 = vsel %vm142, %v117, 0.0
  %261 = vadd.xlane.f32.xlu0 %v260
  %v262 = vpop.xlane.xlu0 %261
  %v263 = vsel %vm142, %v118, 0.0
  %264 = vadd.xlane.f32.xlu0 %v263
  %v265 = vpop.xlane.xlu0 %264
  %v266 = vsel %vm142, %v119, 0.0
  %267 = vadd.xlane.f32.xlu0 %v266
  %v268 = vpop.xlane.xlu0 %267
  %v269 = vsel %vm142, %v120, 0.0
  %270 = vadd.xlane.f32.xlu0 %v269
  %v271 = vpop.xlane.xlu0 %270
  %v272 = vsel %vm142, %v121, 0.0
  %273 = vadd.xlane.f32.xlu0 %v272
  %v274 = vpop.xlane.xlu0 %273
  %v275 = vsel %vm142, %v122, 0.0
  %276 = vadd.xlane.f32.xlu0 %v275
  %v277 = vpop.xlane.xlu0 %276
  %v278 = vsel %vm142, %v123, 0.0
  %279 = vadd.xlane.f32.xlu0 %v278
  %v280 = vpop.xlane.xlu0 %279
  %v281 = vsel %vm142, %v124, 0.0
  %282 = vadd.xlane.f32.xlu0 %v281
  %v283 = vpop.xlane.xlu0 %282
  %v284 = vsel %vm142, %v125, 0.0
  %285 = vadd.xlane.f32.xlu0 %v284
  %v286 = vpop.xlane.xlu0 %285
  %v287 = vsel %vm142, %v126, 0.0
  %288 = vadd.xlane.f32.xlu0 %v287
  %v289 = vpop.xlane.xlu0 %288
  %v290 = vsel %vm142, %v127, 0.0
  %291 = vadd.xlane.f32.xlu0 %v290
  %v292 = vpop.xlane.xlu0 %291
  %v293 = vsel %vm142, %v128, 0.0
  %294 = vadd.xlane.f32.xlu0 %v293
  %v295 = vpop.xlane.xlu0 %294
  %v296 = vsel %vm142, %v129, 0.0
  %297 = vadd.xlane.f32.xlu0 %v296
  %v298 = vpop.xlane.xlu0 %297
  %v299 = vsel %vm142, %v130, 0.0
  %300 = vadd.xlane.f32.xlu0 %v299
  %v301 = vpop.xlane.xlu0 %300
  %v302 = vsel %vm142, %v131, 0.0
  %303 = vadd.xlane.f32.xlu0 %v302
  %v304 = vpop.xlane.xlu0 %303
  %v305 = vsel %vm142, %v132, 0.0
  %306 = vadd.xlane.f32.xlu0 %v305
  %v307 = vpop.xlane.xlu0 %306
  %v308 = vsel %vm142, %v133, 0.0
  %309 = vadd.xlane.f32.xlu0 %v308
  %v310 = vpop.xlane.xlu0 %309
  %v311 = vsel %vm142, %v134, 0.0
  %312 = vadd.xlane.f32.xlu0 %v311
  %v313 = vpop.xlane.xlu0 %312
  %v314 = vsel %vm142, %v135, 0.0
  %315 = vadd.xlane.f32.xlu0 %v314
  %v316 = vpop.xlane.xlu0 %315
  %v317 = vsel %vm142, %v136, 0.0
  %318 = vadd.xlane.f32.xlu0 %v317
  %v319 = vpop.xlane.xlu0 %318
  %v320 = vsel %vm142, %v137, 0.0
  %321 = vadd.xlane.f32.xlu0 %v320
  %v322 = vpop.xlane.xlu0 %321
  %v323 = vsel %vm142, %v138, 0.0
  %324 = vadd.xlane.f32.xlu0 %v323
  %v325 = vpop.xlane.xlu0 %324
  %v326 = vsel %vm142, %v139, 0.0
  %327 = vadd.xlane.f32.xlu0 %v326
  %v328 = vpop.xlane.xlu0 %327
  %v329 = vsel %vm142, %v140, 0.0
  %330 = vadd.xlane.f32.xlu0 %v329
  %v331 = vpop.xlane.xlu0 %330
  %v332 = vsel %vm142, %v141, 0.0
  %333 = vadd.xlane.f32.xlu0 %v332
  %v334 = vpop.xlane.xlu0 %333
  %v335 = vrcp.pop 16.0
  %v336 = vmul.f32 %v145, %v335
  %v337 = vmul.f32 %v148, %v335
  %v338 = vmul.f32 %v151, %v335
  %v339 = vmul.f32 %v154, %v335
  %v340 = vmul.f32 %v157, %v335
  %v341 = vmul.f32 %v160, %v335
  %v342 = vmul.f32 %v163, %v335
  %v343 = vmul.f32 %v166, %v335
  %v344 = vmul.f32 %v169, %v335
  %v345 = vmul.f32 %v172, %v335
  %v346 = vmul.f32 %v175, %v335
  %v347 = vmul.f32 %v178, %v335
  %v348 = vmul.f32 %v181, %v335
  %v349 = vmul.f32 %v184, %v335
  %v350 = vmul.f32 %v187, %v335
  %v351 = vmul.f32 %v190, %v335
  %v352 = vmul.f32 %v193, %v335
  %v353 = vmul.f32 %v196, %v335
  %v354 = vmul.f32 %v199, %v335
  %v355 = vmul.f32 %v202, %v335
  %v356 = vmul.f32 %v205, %v335
  %v357 = vmul.f32 %v208, %v335
  %v358 = vmul.f32 %v211, %v335
  %v359 = vmul.f32 %v214, %v335
  %v360 = vmul.f32 %v217, %v335
  %v361 = vmul.f32 %v220, %v335
  %v362 = vmul.f32 %v223, %v335
  %v363 = vmul.f32 %v226, %v335
  %v364 = vmul.f32 %v229, %v335
  %v365 = vmul.f32 %v232, %v335
  %v366 = vmul.f32 %v235, %v335
  %v367 = vmul.f32 %v238, %v335
  %v368 = vmul.f32 %v241, %v335
  %v369 = vmul.f32 %v244, %v335
  %v370 = vmul.f32 %v247, %v335
  %v371 = vmul.f32 %v250, %v335
  %v372 = vmul.f32 %v253, %v335
  %v373 = vmul.f32 %v256, %v335
  %v374 = vmul.f32 %v259, %v335
  %v375 = vmul.f32 %v262, %v335
  %v376 = vmul.f32 %v265, %v335
  %v377 = vmul.f32 %v268, %v335
  %v378 = vmul.f32 %v271, %v335
  %v379 = vmul.f32 %v274, %v335
  %v380 = vmul.f32 %v277, %v335
  %v381 = vmul.f32 %v280, %v335
  %v382 = vmul.f32 %v283, %v335
  %v383 = vmul.f32 %v286, %v335
  %v384 = vmul.f32 %v289, %v335
  %v385 = vmul.f32 %v292, %v335
  %v386 = vmul.f32 %v295, %v335
  %v387 = vmul.f32 %v298, %v335
  %v388 = vmul.f32 %v301, %v335
  %v389 = vmul.f32 %v304, %v335
  %v390 = vmul.f32 %v307, %v335
  %v391 = vmul.f32 %v310, %v335
  %v392 = vmul.f32 %v313, %v335
  %v393 = vmul.f32 %v316, %v335
  %v394 = vmul.f32 %v319, %v335
  %v395 = vmul.f32 %v322, %v335
  %v396 = vmul.f32 %v325, %v335
  %v397 = vmul.f32 %v328, %v335
  %v398 = vmul.f32 %v331, %v335
  %v399 = vmul.f32 %v334, %v335
  %v400 = vld [vmem:[%s1] sm:$0xff]
  %v401 = vld [vmem:[%s1 + $0x8] sm:$0x3]
  %v402 = vld [vmem:[%s2] sm:$0xff]
  %v403 = vld [vmem:[%s2 + $0x8] sm:$0x3]
  %405 = vset.pattern.permute.xlu0 0
  %406 = vperm.xlu0 %405, %v402
  %v407 = vpop.permute.xlu0 %406
  %410 = vset.pattern.permute.xlu0 0
  %411 = vperm.xlu0 %410, %v403
  %v412 = vpop.permute.xlu0 %411
  %v478 = vlaneseq
  %v479 = vand.u32 %v478, 127
  %v480 = vlaneseq
  %v481 = vshrl.u32 %v480, 7
  %v482 = vsub.s32 %v479, %v481
  %v483 = vrot.slane %v336, %v482
  %v484 = vlaneseq
  %v485 = vshrl.u32 %v484, 7
  %v486 = vsub.s32 %v479, %v485
  %v487 = vrot.slane %v337, %v486
  %v488 = vlaneseq
  %v489 = vshrl.u32 %v488, 7
  %v490 = vsub.s32 %v479, %v489
  %v491 = vrot.slane %v338, %v490
  %v492 = vlaneseq
  %v493 = vshrl.u32 %v492, 7
  %v494 = vsub.s32 %v479, %v493
  %v495 = vrot.slane %v339, %v494
  %v496 = vlaneseq
  %v497 = vshrl.u32 %v496, 7
  %v498 = vsub.s32 %v479, %v497
  %v499 = vrot.slane %v340, %v498
  %v500 = vlaneseq
  %v501 = vshrl.u32 %v500, 7
  %v502 = vsub.s32 %v479, %v501
  %v503 = vrot.slane %v341, %v502
  %v504 = vlaneseq
  %v505 = vshrl.u32 %v504, 7
  %v506 = vsub.s32 %v479, %v505
  %v507 = vrot.slane %v342, %v506
  %v508 = vlaneseq
  %v509 = vshrl.u32 %v508, 7
  %v510 = vsub.s32 %v479, %v509
  %v511 = vrot.slane %v343, %v510
  %v512 = vlaneseq
  %v513 = vshrl.u32 %v512, 7
  %v514 = vsub.s32 %v479, %v513
  %v515 = vrot.slane %v344, %v514
  %v516 = vlaneseq
  %v517 = vshrl.u32 %v516, 7
  %v518 = vsub.s32 %v479, %v517
  %v519 = vrot.slane %v345, %v518
  %v520 = vlaneseq
  %v521 = vshrl.u32 %v520, 7
  %v522 = vsub.s32 %v479, %v521
  %v523 = vrot.slane %v346, %v522
  %v524 = vlaneseq
  %v525 = vshrl.u32 %v524, 7
  %v526 = vsub.s32 %v479, %v525
  %v527 = vrot.slane %v347, %v526
  %v528 = vlaneseq
  %v529 = vshrl.u32 %v528, 7
  %v530 = vsub.s32 %v479, %v529
  %v531 = vrot.slane %v348, %v530
  %v532 = vlaneseq
  %v533 = vshrl.u32 %v532, 7
  %v534 = vsub.s32 %v479, %v533
  %v535 = vrot.slane %v349, %v534
  %v536 = vlaneseq
  %v537 = vshrl.u32 %v536, 7
  %v538 = vsub.s32 %v479, %v537
  %v539 = vrot.slane %v350, %v538
  %v540 = vlaneseq
  %v541 = vshrl.u32 %v540, 7
  %v542 = vsub.s32 %v479, %v541
  %v543 = vrot.slane %v351, %v542
  %v544 = vlaneseq
  %v545 = vshrl.u32 %v544, 7
  %v546 = vsub.s32 %v479, %v545
  %v547 = vrot.slane %v352, %v546
  %v548 = vlaneseq
  %v549 = vshrl.u32 %v548, 7
  %v550 = vsub.s32 %v479, %v549
  %v551 = vrot.slane %v353, %v550
  %v552 = vlaneseq
  %v553 = vshrl.u32 %v552, 7
  %v554 = vsub.s32 %v479, %v553
  %v555 = vrot.slane %v354, %v554
  %v556 = vlaneseq
  %v557 = vshrl.u32 %v556, 7
  %v558 = vsub.s32 %v479, %v557
  %v559 = vrot.slane %v355, %v558
  %v560 = vlaneseq
  %v561 = vshrl.u32 %v560, 7
  %v562 = vsub.s32 %v479, %v561
  %v563 = vrot.slane %v356, %v562
  %v564 = vlaneseq
  %v565 = vshrl.u32 %v564, 7
  %v566 = vsub.s32 %v479, %v565
  %v567 = vrot.slane %v357, %v566
  %v568 = vlaneseq
  %v569 = vshrl.u32 %v568, 7
  %v570 = vsub.s32 %v479, %v569
  %v571 = vrot.slane %v358, %v570
  %v572 = vlaneseq
  %v573 = vshrl.u32 %v572, 7
  %v574 = vsub.s32 %v479, %v573
  %v575 = vrot.slane %v359, %v574
  %v576 = vlaneseq
  %v577 = vshrl.u32 %v576, 7
  %v578 = vsub.s32 %v479, %v577
  %v579 = vrot.slane %v360, %v578
  %v580 = vlaneseq
  %v581 = vshrl.u32 %v580, 7
  %v582 = vsub.s32 %v479, %v581
  %v583 = vrot.slane %v361, %v582
  %v584 = vlaneseq
  %v585 = vshrl.u32 %v584, 7
  %v586 = vsub.s32 %v479, %v585
  %v587 = vrot.slane %v362, %v586
  %v588 = vlaneseq
  %v589 = vshrl.u32 %v588, 7
  %v590 = vsub.s32 %v479, %v589
  %v591 = vrot.slane %v363, %v590
  %v592 = vlaneseq
  %v593 = vshrl.u32 %v592, 7
  %v594 = vsub.s32 %v479, %v593
  %v595 = vrot.slane %v364, %v594
  %v596 = vlaneseq
  %v597 = vshrl.u32 %v596, 7
  %v598 = vsub.s32 %v479, %v597
  %v599 = vrot.slane %v365, %v598
  %v600 = vlaneseq
  %v601 = vshrl.u32 %v600, 7
  %v602 = vsub.s32 %v479, %v601
  %v603 = vrot.slane %v366, %v602
  %v604 = vlaneseq
  %v605 = vshrl.u32 %v604, 7
  %v606 = vsub.s32 %v479, %v605
  %v607 = vrot.slane %v367, %v606
  %v608 = vlaneseq
  %v609 = vshrl.u32 %v608, 7
  %v610 = vsub.s32 %v479, %v609
  %v611 = vrot.slane %v368, %v610
  %v612 = vlaneseq
  %v613 = vshrl.u32 %v612, 7
  %v614 = vsub.s32 %v479, %v613
  %v615 = vrot.slane %v369, %v614
  %v616 = vlaneseq
  %v617 = vshrl.u32 %v616, 7
  %v618 = vsub.s32 %v479, %v617
  %v619 = vrot.slane %v370, %v618
  %v620 = vlaneseq
  %v621 = vshrl.u32 %v620, 7
  %v622 = vsub.s32 %v479, %v621
  %v623 = vrot.slane %v371, %v622
  %v624 = vlaneseq
  %v625 = vshrl.u32 %v624, 7
  %v626 = vsub.s32 %v479, %v625
  %v627 = vrot.slane %v372, %v626
  %v628 = vlaneseq
  %v629 = vshrl.u32 %v628, 7
  %v630 = vsub.s32 %v479, %v629
  %v631 = vrot.slane %v373, %v630
  %v632 = vlaneseq
  %v633 = vshrl.u32 %v632, 7
  %v634 = vsub.s32 %v479, %v633
  %v635 = vrot.slane %v374, %v634
  %v636 = vlaneseq
  %v637 = vshrl.u32 %v636, 7
  %v638 = vsub.s32 %v479, %v637
  %v639 = vrot.slane %v375, %v638
  %v640 = vlaneseq
  %v641 = vshrl.u32 %v640, 7
  %v642 = vsub.s32 %v479, %v641
  %v643 = vrot.slane %v376, %v642
  %v644 = vlaneseq
  %v645 = vshrl.u32 %v644, 7
  %v646 = vsub.s32 %v479, %v645
  %v647 = vrot.slane %v377, %v646
  %v648 = vlaneseq
  %v649 = vshrl.u32 %v648, 7
  %v650 = vsub.s32 %v479, %v649
  %v651 = vrot.slane %v378, %v650
  %v652 = vlaneseq
  %v653 = vshrl.u32 %v652, 7
  %v654 = vsub.s32 %v479, %v653
  %v655 = vrot.slane %v379, %v654
  %v656 = vlaneseq
  %v657 = vshrl.u32 %v656, 7
  %v658 = vsub.s32 %v479, %v657
  %v659 = vrot.slane %v380, %v658
  %v660 = vlaneseq
  %v661 = vshrl.u32 %v660, 7
  %v662 = vsub.s32 %v479, %v661
  %v663 = vrot.slane %v381, %v662
  %v664 = vlaneseq
  %v665 = vshrl.u32 %v664, 7
  %v666 = vsub.s32 %v479, %v665
  %v667 = vrot.slane %v382, %v666
  %v668 = vlaneseq
  %v669 = vshrl.u32 %v668, 7
  %v670 = vsub.s32 %v479, %v669
  %v671 = vrot.slane %v383, %v670
  %v672 = vlaneseq
  %v673 = vshrl.u32 %v672, 7
  %v674 = vsub.s32 %v479, %v673
  %v675 = vrot.slane %v384, %v674
  %v676 = vlaneseq
  %v677 = vshrl.u32 %v676, 7
  %v678 = vsub.s32 %v479, %v677
  %v679 = vrot.slane %v385, %v678
  %v680 = vlaneseq
  %v681 = vshrl.u32 %v680, 7
  %v682 = vsub.s32 %v479, %v681
  %v683 = vrot.slane %v386, %v682
  %v684 = vlaneseq
  %v685 = vshrl.u32 %v684, 7
  %v686 = vsub.s32 %v479, %v685
  %v687 = vrot.slane %v387, %v686
  %v688 = vlaneseq
  %v689 = vshrl.u32 %v688, 7
  %v690 = vsub.s32 %v479, %v689
  %v691 = vrot.slane %v388, %v690
  %v692 = vlaneseq
  %v693 = vshrl.u32 %v692, 7
  %v694 = vsub.s32 %v479, %v693
  %v695 = vrot.slane %v389, %v694
  %v696 = vlaneseq
  %v697 = vshrl.u32 %v696, 7
  %v698 = vsub.s32 %v479, %v697
  %v699 = vrot.slane %v390, %v698
  %v700 = vlaneseq
  %v701 = vshrl.u32 %v700, 7
  %v702 = vsub.s32 %v479, %v701
  %v703 = vrot.slane %v391, %v702
  %v704 = vlaneseq
  %v705 = vshrl.u32 %v704, 7
  %v706 = vsub.s32 %v479, %v705
  %v707 = vrot.slane %v392, %v706
  %v708 = vlaneseq
  %v709 = vshrl.u32 %v708, 7
  %v710 = vsub.s32 %v479, %v709
  %v711 = vrot.slane %v393, %v710
  %v712 = vlaneseq
  %v713 = vshrl.u32 %v712, 7
  %v714 = vsub.s32 %v479, %v713
  %v715 = vrot.slane %v394, %v714
  %v716 = vlaneseq
  %v717 = vshrl.u32 %v716, 7
  %v718 = vsub.s32 %v479, %v717
  %v719 = vrot.slane %v395, %v718
  %v720 = vlaneseq
  %v721 = vshrl.u32 %v720, 7
  %v722 = vsub.s32 %v479, %v721
  %v723 = vrot.slane %v396, %v722
  %v724 = vlaneseq
  %v725 = vshrl.u32 %v724, 7
  %v726 = vsub.s32 %v479, %v725
  %v727 = vrot.slane %v397, %v726
  %v728 = vlaneseq
  %v729 = vshrl.u32 %v728, 7
  %v730 = vsub.s32 %v479, %v729
  %v731 = vrot.slane %v398, %v730
  %v732 = vlaneseq
  %v733 = vshrl.u32 %v732, 7
  %v734 = vsub.s32 %v479, %v733
  %v735 = vrot.slane %v399, %v734
  %vm736 = vcmask 1041409
  %v737 = vsel %vm736, %v487, %v483
  %vm738 = vcmask 1042434
  %v739 = vsel %vm738, %v491, %v737
  %vm740 = vcmask 1043459
  %v741 = vsel %vm740, %v495, %v739
  %vm742 = vcmask 1044484
  %v743 = vsel %vm742, %v499, %v741
  %vm744 = vcmask 1045509
  %v745 = vsel %vm744, %v503, %v743
  %vm746 = vcmask 1046534
  %v747 = vsel %vm746, %v507, %v745
  %vm748 = vcmask 1047559
  %v749 = vsel %vm748, %v511, %v747
  %v750 = vsel %vm736, %v519, %v515
  %v751 = vsel %vm738, %v523, %v750
  %v752 = vsel %vm740, %v527, %v751
  %v753 = vsel %vm742, %v531, %v752
  %v754 = vsel %vm744, %v535, %v753
  %v755 = vsel %vm746, %v539, %v754
  %v756 = vsel %vm748, %v543, %v755
  %v757 = vsel %vm736, %v551, %v547
  %v758 = vsel %vm738, %v555, %v757
  %v759 = vsel %vm740, %v559, %v758
  %v760 = vsel %vm742, %v563, %v759
  %v761 = vsel %vm744, %v567, %v760
  %v762 = vsel %vm746, %v571, %v761
  %v763 = vsel %vm748, %v575, %v762
  %v764 = vsel %vm736, %v583, %v579
  %v765 = vsel %vm738, %v587, %v764
  %v766 = vsel %vm740, %v591, %v765
  %v767 = vsel %vm742, %v595, %v766
  %v768 = vsel %vm744, %v599, %v767
  %v769 = vsel %vm746, %v603, %v768
  %v770 = vsel %vm748, %v607, %v769
  %v771 = vsel %vm736, %v615, %v611
  %v772 = vsel %vm738, %v619, %v771
  %v773 = vsel %vm740, %v623, %v772
  %v774 = vsel %vm742, %v627, %v773
  %v775 = vsel %vm744, %v631, %v774
  %v776 = vsel %vm746, %v635, %v775
  %v777 = vsel %vm748, %v639, %v776
  %v778 = vsel %vm736, %v647, %v643
  %v779 = vsel %vm738, %v651, %v778
  %v780 = vsel %vm740, %v655, %v779
  %v781 = vsel %vm742, %v659, %v780
  %v782 = vsel %vm744, %v663, %v781
  %v783 = vsel %vm746, %v667, %v782
  %v784 = vsel %vm748, %v671, %v783
  %v785 = vsel %vm736, %v679, %v675
  %v786 = vsel %vm738, %v683, %v785
  %v787 = vsel %vm740, %v687, %v786
  %v788 = vsel %vm742, %v691, %v787
  %v789 = vsel %vm744, %v695, %v788
  %v790 = vsel %vm746, %v699, %v789
  %v791 = vsel %vm748, %v703, %v790
  %v792 = vsel %vm736, %v711, %v707
  %v793 = vsel %vm738, %v715, %v792
  %v794 = vsel %vm740, %v719, %v793
  %v795 = vsel %vm742, %v723, %v794
  %v796 = vsel %vm744, %v727, %v795
  %v797 = vsel %vm746, %v731, %v796
  %v798 = vsel %vm748, %v735, %v797
  %vm807 = vcmask 523264
  %v809 = vsel %vm807, %v400, 0
  %v812 = vsel %vm807, %v401, 0
  %814 = vmatprep.subr.mxu0 0.0
  %815 = vmatpush1.msra.mxu0 %v749
  %816 = vmatprep.subr.mxu0 0.0
  %817 = vmatpush1.msra.mxu0 %v756
  %818 = vmatprep.subr.mxu0 0.0
  %819 = vmatpush1.msra.mxu0 %v763
  %820 = vmatprep.subr.mxu0 0.0
  %821 = vmatpush1.msra.mxu0 %v770
  %822 = vmatprep.subr.mxu0 0.0
  %823 = vmatpush1.msra.mxu0 %v777
  %824 = vmatprep.subr.mxu0 0.0
  %825 = vmatpush1.msra.mxu0 %v784
  %826 = vmatprep.subr.mxu0 0.0
  %827 = vmatpush1.msra.mxu0 %v791
  %828 = vmatprep.subr.mxu0 0.0
  %829 = vmatpush1.msra.mxu0 %v798
  %830 = vmatprep.subr.mxu0 0.0
  %831 = vmatpush1.msra.mxu0 0.0
  %832 = vmatprep.subr.mxu0 0.0
  %833 = vmatpush1.msra.mxu0 0.0
  %834 = vmatprep.subr.mxu0 0.0
  %835 = vmatpush1.msra.mxu0 0.0
  %836 = vmatprep.subr.mxu0 0.0
  %837 = vmatpush1.msra.mxu0 0.0
  %838 = vmatprep.subr.mxu0 0.0
  %839 = vmatpush1.msra.mxu0 0.0
  %840 = vmatprep.subr.mxu0 0.0
  %841 = vmatpush1.msra.mxu0 0.0
  %842 = vmatprep.subr.mxu0 0.0
  %843 = vmatpush1.msra.mxu0 0.0
  %844 = vmatprep.subr.mxu0 0.0
  %845 = vmatpush1.msra.mxu0 0.0
  %846 = vmatprep.subr.mxu0 0.0
  %847 = vmatpush1.msra.mxu0 0.0
  %848 = vmatprep.subr.mxu0 0.0
  %849 = vmatpush1.msra.mxu0 0.0
  %850 = vmatprep.subr.mxu0 0.0
  %851 = vmatpush1.msra.mxu0 0.0
  %852 = vmatprep.subr.mxu0 0.0
  %853 = vmatpush1.msra.mxu0 0.0
  %854 = vmatprep.subr.mxu0 0.0
  %855 = vmatpush1.msra.mxu0 0.0
  %856 = vmatprep.subr.mxu0 0.0
  %857 = vmatpush1.msra.mxu0 0.0
  %858 = vmatprep.subr.mxu0 0.0
  %859 = vmatpush1.msra.mxu0 0.0
  %860 = vmatprep.subr.mxu0 0.0
  %861 = vmatpush1.msra.mxu0 0.0
  %862 = vmatprep.subr.mxu0 0.0
  %863 = vmatpush1.msra.mxu0 0.0
  %864 = vmatprep.subr.mxu0 0.0
  %865 = vmatpush1.msra.mxu0 0.0
  %866 = vmatprep.subr.mxu0 0.0
  %867 = vmatpush1.msra.mxu0 0.0
  %868 = vmatprep.subr.mxu0 0.0
  %869 = vmatpush1.msra.mxu0 0.0
  %870 = vmatprep.subr.mxu0 0.0
  %871 = vmatpush1.msra.mxu0 0.0
  %872 = vmatprep.subr.mxu0 0.0
  %873 = vmatpush1.msra.mxu0 0.0
  %874 = vmatprep.subr.mxu0 0.0
  %875 = vmatpush1.msra.mxu0 0.0
  %876 = vmatprep.subr.mxu0 0.0
  %877 = vmatpush1.msra.mxu0 0.0
  %878 = vmatprep.mubr.f32.mxu0 0.0
  %879 = vmatmul.mubr.f32.gmra.mrb[0].mxu0 %v809
  %v880 = vpop.f32.mrb[0].mxu0
  %v881 = vadd.f32 %v407, %v880
  %v882 = vpop.f32.mrb[0].mxu0
  %883 = vmatprep.mubr.f32.mxu0 0.0
  %884 = vmatmul.mubr.f32.gmra.mrb[0].mxu0 %v812
  %v885 = vpop.f32.mrb[0].mxu0
  %v886 = vadd.f32 %v412, %v885
  %v887 = vpop.f32.mrb[0].mxu0
  %888 = vdwg.mxu0
  %vm889 = vcmask 15360
  %890 = vst.msk [vmem:[%s3] sm:$0xff] %vm889, %v881
  %vm891 = vcmask 9216
  %892 = vst.msk [vmem:[%s3 + $0x8] sm:$0x3] %vm891, %v886
  // Predicated region
  $region14: #{_lambda_.19} parent=0 // pred_check
    _
  $region15: #{_lambda_.19} parent=0 // pred_check_branch
    %894 = sbr.rel (0) target = $region17
  $region16: #{_lambda_.19} parent=0 // pred_region
    _
  $region17: #{_lambda_.19} parent=0 // pred_fallthru
    _
  // Predicated region
  $region18: #{_lambda_.19} parent=0 // pred_check
    _
  $region19: #{_lambda_.19} parent=0 // pred_check_branch
    %896 = sbr.rel (0) target = $region21
  $region20: #{_lambda_.19} parent=0 // pred_region
    _
  $region21: #{_lambda_.19} parent=0 // pred_fallthru
    _

</llo_original>
